<compile_context>
chip_gen: v7x
topology: tpu7x:2x2x1
jax: 0.10.0
libtpu: 0.0.40
codegen_flags: <defaults>
</compile_context>

<pallas_src>
import jax
import jax.numpy as jnp
from jax import lax
from jax.experimental import pallas as pl
from jax.experimental.pallas import tpu as pltpu


# --------------------------------------------------------------------------
# In-kernel helpers
# --------------------------------------------------------------------------

def _shift_down(x):
    """x[l-1] with a zero row at l == 0 (left tap of a pad=1 conv)."""
    z = jnp.zeros((1, x.shape[1]), x.dtype)
    return jnp.concatenate([z, x[:-1, :]], axis=0)


def _shift_up(x):
    """x[l+1] with a zero row at l == L-1 (right tap of a pad=1 conv)."""
    z = jnp.zeros((1, x.shape[1]), x.dtype)
    return jnp.concatenate([x[1:, :], z], axis=0)


def _conv3(x, w_ref, scale, shift, *, relu, pool=False, residual=None):
    """Conv1d(k=3, pad=1) on (L, Cin) + fused affine / residual / ReLU / pool.

    w_ref: (3, Cin, Cout) VMEM ref; scale/shift: (1, Cout) (scale may be None).
    """
    L = x.shape[0]
    y = (jnp.dot(_shift_down(x), w_ref[0], preferred_element_type=jnp.float32)
         + jnp.dot(x,            w_ref[1], preferred_element_type=jnp.float32)
         + jnp.dot(_shift_up(x), w_ref[2], preferred_element_type=jnp.float32))
    if scale is not None:                      # BN folded to affine
        y = y * scale
    y = y + shift                              # conv bias (or bias*s + t)
    if residual is not None:
        y = y + residual
    if relu:
        y = jnp.maximum(y, 0.0)
    if pool:                                   # MaxPool1d(kernel_size=2)
        y = jnp.max(y.reshape(L // 2, 2, y.shape[-1]), axis=1)
    return y


# --------------------------------------------------------------------------
# The single fused kernel: one batch sample per grid step.
# --------------------------------------------------------------------------

def neuropose_kernel(x_ref,
                     we1, be1, we2, be2,
                     rw11, rs11, rt11, rw12, rs12, rt12,
                     rw21, rs21, rt21, rw22, rs22, rt22,
                     wt1, sd1, td1, wt2, sd2, td2,
                     wr, br,
                     o_ref):
    x = x_ref[0]                                               # (T, 64)

    # ---- three encoders fused with block-diagonal weights: 64 -> 48 -> 96 --
    h = _conv3(x, we1, None, be1[...], relu=True, pool=True)   # (T/2, 48)
    h = _conv3(h, we2, None, be2[...], relu=True, pool=True)   # (T/4, 96)

    # ---- two residual blocks (BN folded, dropout = eval identity) ----------
    for w1, s1, t1, w2, s2, t2 in ((rw11, rs11, rt11, rw12, rs12, rt12),
                                   (rw21, rs21, rt21, rw22, rs22, rt22)):
        res = h
        h1 = _conv3(h, w1, s1[...], t1[...], relu=True)
        h = _conv3(h1, w2, s2[...], t2[...], relu=True, residual=res)

    # ---- ConvTranspose1d #1 (96->64, k=3, s=2, p=1, op=1) ------------------
    # y[2m] = h[m] @ W[1] ; y[2m+1] = h[m] @ W[2] + h[m+1] @ W[0]
    # Keep even/odd output rows as separate streams (no sublane interleave).
    hn = _shift_up(h)
    d1e = jnp.dot(h,  wt1[1], preferred_element_type=jnp.float32)
    d1o = (jnp.dot(h,  wt1[2], preferred_element_type=jnp.float32)
           + jnp.dot(hn, wt1[0], preferred_element_type=jnp.float32))
    d1e = jnp.maximum(d1e * sd1[...] + td1[...], 0.0)          # (T/4, 64)
    d1o = jnp.maximum(d1o * sd1[...] + td1[...], 0.0)          # (T/4, 64)

    # ---- ConvTranspose1d #2 (64->32) ---------------------------------------
    # Its input is d1 = interleave(d1e, d1o).  The head only needs a mean over
    # length, so process rows in the permuted order [even m ..., odd m ...]:
    #   d1[m]   -> concat([d1e, d1o])
    #   d1[m+1] -> concat([d1o, shift_up(d1e)])   (zero past the end)
    d_cur = jnp.concatenate([d1e, d1o], axis=0)                # (T/2, 64)
    d_nxt = jnp.concatenate([d1o, _shift_up(d1e)], axis=0)     # (T/2, 64)
    y2e = jnp.dot(d_cur, wt2[1], preferred_element_type=jnp.float32)
    y2o = (jnp.dot(d_cur, wt2[2], preferred_element_type=jnp.float32)
           + jnp.dot(d_nxt, wt2[0], preferred_element_type=jnp.float32))
    y2e = jnp.maximum(y2e * sd2[...] + td2[...], 0.0)          # (T/2, 32)
    y2o = jnp.maximum(y2o * sd2[...] + td2[...], 0.0)          # (T/2, 32)

    # ---- head: AdaptiveAvgPool1d(1) over length + Linear(32 -> 21) ---------
    n_rows = 2 * d_cur.shape[0]                                # = T (static)
    pooled = (jnp.sum(y2e, axis=0, keepdims=True)
              + jnp.sum(y2o, axis=0, keepdims=True)) * (1.0 / n_rows)  # (1,32)
    out = jnp.dot(pooled, wr[...], preferred_element_type=jnp.float32) + br[...]
    o_ref[0] = out.astype(o_ref.dtype)                         # (1, 21)


# --------------------------------------------------------------------------
# Parameter / layout helpers (host side)
# --------------------------------------------------------------------------

def conv_w_nlc(w):   # torch Conv1d weight (Cout, Cin, K) -> (K, Cin, Cout)
    return jnp.transpose(w, (2, 1, 0))


def convt_w_nlc(w):  # torch ConvTranspose1d weight (Cin, Cout, K) -> (K, Cin, Cout)
    return jnp.transpose(w, (2, 0, 1))


def bn_affine(bn, eps=1e-5):
    s = bn['gamma'] / jnp.sqrt(bn['var'] + eps)
    t = bn['beta'] - bn['mean'] * s
    return s, t


def block_diag_conv(convs):
    """Fuse parallel Conv1d layers into one block-diagonal conv.

    convs: list of {'w': (Cout_i, Cin_i, 3), 'b': (Cout_i,)} (PyTorch layout).
    Returns W (3, sum Cin, sum Cout) and concatenated bias.  Cross blocks are
    zero, so conv+ReLU+pool of the fused weight equals running the encoders
    separately and concatenating their outputs along channels.
    """
    cins = [c['w'].shape[1] for c in convs]
    couts = [c['w'].shape[0] for c in convs]
    W = jnp.zeros((3, sum(cins), sum(couts)), jnp.float32)
    ri = ci = 0
    for c, cin, cout in zip(convs, cins, couts):
        W = W.at[:, ri:ri + cin, ci:ci + cout].set(conv_w_nlc(c['w']))
        ri += cin
        ci += cout
    b = jnp.concatenate([c['b'] for c in convs])
    return W, b


def _const_spec(shape):
    zeros = (0,) * len(shape)
    return pl.BlockSpec(shape, lambda b, _z=zeros: _z)


# --------------------------------------------------------------------------
# NeuroPose forward: single pallas_call
# --------------------------------------------------------------------------

def neuropose_forward(x, ref, imu, P):
    B, T, _ = x.shape
    assert T % 4 == 0, "T must be divisible by 4 (two MaxPool1d(2) + two stride-2 transposed convs)"

    # PyTorch permutes NTC -> NCL; the kernel consumes NLC directly.
    # Channel order [x(6), ref(51), imu(7)] matches the block-diagonal weights
    # and yields the torch.cat([x_enc, ref_enc, imu_enc], dim=1) order.
    xcat = jnp.concatenate([x, ref.reshape(B, T, -1), imu], axis=-1)   # (B, T, 64)

    we1, be1 = block_diag_conv([P['enc_x']['c1'], P['enc_ref']['c1'], P['enc_imu']['c1']])
    we2, be2 = block_diag_conv([P['enc_x']['c2'], P['enc_ref']['c2'], P['enc_imu']['c2']])

    weights = [we1, be1[None, :], we2, be2[None, :]]
    for rb in P['res']:
        for conv, bn in ((rb['c1'], rb['bn1']), (rb['c2'], rb['bn2'])):
            s, t = bn_affine(bn)
            weights += [conv_w_nlc(conv['w']), s[None, :],
                        (conv['b'] * s + t)[None, :]]
    dec = P['dec']
    for wt, bias, bn in ((dec['t1_w'], dec['t1_b'], dec['bn1']),
                         (dec['t2_w'], dec['t2_b'], dec['bn2'])):
        s, t = bn_affine(bn)
        weights += [convt_w_nlc(wt), s[None, :], (bias * s + t)[None, :]]
    weights += [P['reg']['w'].T, P['reg']['b'][None, :]]

    in_specs = ([pl.BlockSpec((1, T, xcat.shape[-1]), lambda b: (b, 0, 0))]
                + [_const_spec(w.shape) for w in weights])

    out = pl.pallas_call(
        neuropose_kernel,
        out_shape=jax.ShapeDtypeStruct((B, 1, 21), jnp.float32),
        grid=(B,),
        in_specs=in_specs,
        out_specs=pl.BlockSpec((1, 1, 21), lambda b: (b, 0, 0)),
        compiler_params=pltpu.CompilerParams(dimension_semantics=("parallel",)),
    )(xcat, *weights)
    return out.reshape(B, 21)


# --------------------------------------------------------------------------
# Deterministic parameters (PyTorch layout)
# --------------------------------------------------------------------------

def init_params(key):
    it = iter(jax.random.split(key, 64))

    def nrm(shape, scale=0.1):
        return scale * jax.random.normal(next(it), shape, jnp.float32)

    def conv_p(cin, cout):
        return {'w': nrm((cout, cin, 3)), 'b': nrm((cout,))}

    def bn_p(c):
        return {'gamma': 1.0 + nrm((c,)), 'beta': nrm((c,)),
                'mean': nrm((c,)),
                'var': 0.5 + jax.random.uniform(next(it), (c,), jnp.float32)}

    return {
        'enc_x':   {'c1': conv_p(6, 16),  'c2': conv_p(16, 32)},
        'enc_ref': {'c1': conv_p(51, 16), 'c2': conv_p(16, 32)},
        'enc_imu': {'c1': conv_p(7, 16),  'c2': conv_p(16, 32)},
        'res': [{'c1': conv_p(96, 96), 'bn1': bn_p(96),
                 'c2': conv_p(96, 96), 'bn2': bn_p(96)} for _ in range(2)],
        'dec': {'t1_w': nrm((96, 64, 3)), 't1_b': nrm((64,)), 'bn1': bn_p(64),
                't2_w': nrm((64, 32, 3)), 't2_b': nrm((32,)), 'bn2': bn_p(32)},
        'reg': {'w': nrm((21, 32)), 'b': nrm((21,))},
    }


# --------------------------------------------------------------------------
# Pure-JAX reference (NCL layout, mirrors the PyTorch module; HIGHEST precision)
# --------------------------------------------------------------------------

def _ref_conv1d(x, w, b):
    y = lax.conv_general_dilated(x, w, (1,), [(1, 1)],
                                 dimension_numbers=('NCH', 'OIH', 'NCH'),
                                 precision=lax.Precision.HIGHEST)
    return y + b[None, :, None]


def _ref_maxpool2(x):
    B, C, L = x.shape
    return jnp.max(x.reshape(B, C, L // 2, 2), axis=-1)


def _ref_convt(x, wt, b):
    w_conv = jnp.flip(jnp.transpose(wt, (1, 0, 2)), axis=2)
    y = lax.conv_general_dilated(x, w_conv, (1,), [(1, 2)], lhs_dilation=(2,),
                                 dimension_numbers=('NCH', 'OIH', 'NCH'),
                                 precision=lax.Precision.HIGHEST)
    return y + b[None, :, None]


def _ref_bn(x, bn, eps=1e-5):
    s = bn['gamma'] / jnp.sqrt(bn['var'] + eps)
    t = bn['beta'] - bn['mean'] * s
    return x * s[None, :, None] + t[None, :, None]


def reference_forward(x, ref, imu, P):
    B, T, _ = x.shape

    def enc(z_ncl, pe):
        h = jnp.maximum(_ref_conv1d(z_ncl, pe['c1']['w'], pe['c1']['b']), 0.0)
        h = _ref_maxpool2(h)
        h = jnp.maximum(_ref_conv1d(h, pe['c2']['w'], pe['c2']['b']), 0.0)
        return _ref_maxpool2(h)

    xe = enc(jnp.transpose(x, (0, 2, 1)), P['enc_x'])
    re = enc(jnp.transpose(ref.reshape(B, T, -1), (0, 2, 1)), P['enc_ref'])
    ie = enc(jnp.transpose(imu, (0, 2, 1)), P['enc_imu'])
    h = jnp.concatenate([xe, re, ie], axis=1)

    for rb in P['res']:
        r = h
        h1 = jnp.maximum(_ref_bn(_ref_conv1d(h, rb['c1']['w'], rb['c1']['b']),
                                 rb['bn1']), 0.0)
        h2 = _ref_bn(_ref_conv1d(h1, rb['c2']['w'], rb['c2']['b']), rb['bn2'])
        h = jnp.maximum(h2 + r, 0.0)

    dec = P['dec']
    d = jnp.maximum(_ref_bn(_ref_convt(h, dec['t1_w'], dec['t1_b']), dec['bn1']), 0.0)
    d = jnp.maximum(_ref_bn(_ref_convt(d, dec['t2_w'], dec['t2_b']), dec['bn2']), 0.0)
    pooled = jnp.mean(d, axis=2)
    return jnp.dot(pooled, P['reg']['w'].T,
                   precision=lax.Precision.HIGHEST) + P['reg']['b']


# --------------------------------------------------------------------------

if __name__ == "__main__":
    key = jax.random.PRNGKey(0)
    k_in, k_p = jax.random.split(key)
    B, T = 2, 16
    kx, kr, ki = jax.random.split(k_in, 3)
    x = jax.random.normal(kx, (B, T, 6), jnp.float32)
    ref = jax.random.normal(kr, (B, T, 17, 3), jnp.float32)   # .view -> 51 channels
    imu = jax.random.normal(ki, (B, T, 7), jnp.float32)

    P = init_params(k_p)

    out = jax.block_until_ready(neuropose_forward(x, ref, imu, P))
    assert out.shape == (B, 21), out.shape

    expected = reference_forward(x, ref, imu, P)
    max_err = float(jnp.max(jnp.abs(out - expected)))
    assert jnp.allclose(out, expected, atol=5e-3, rtol=5e-3), f"max_err={max_err}"

    print("KERNEL_OK")
</pallas_src>

<mosaic_0001>
module attributes {stable_mosaic.version = 11 : i64} {
  func.func @neuropose_kernel(%arg0: i32, %arg1: memref<1x16x64xf32, #tpu.memory_space<vmem>>, %arg2: memref<3x64x48xf32, #tpu.memory_space<vmem>>, %arg3: memref<1x48xf32, #tpu.memory_space<vmem>>, %arg4: memref<3x48x96xf32, #tpu.memory_space<vmem>>, %arg5: memref<1x96xf32, #tpu.memory_space<vmem>>, %arg6: memref<3x96x96xf32, #tpu.memory_space<vmem>>, %arg7: memref<1x96xf32, #tpu.memory_space<vmem>>, %arg8: memref<1x96xf32, #tpu.memory_space<vmem>>, %arg9: memref<3x96x96xf32, #tpu.memory_space<vmem>>, %arg10: memref<1x96xf32, #tpu.memory_space<vmem>>, %arg11: memref<1x96xf32, #tpu.memory_space<vmem>>, %arg12: memref<3x96x96xf32, #tpu.memory_space<vmem>>, %arg13: memref<1x96xf32, #tpu.memory_space<vmem>>, %arg14: memref<1x96xf32, #tpu.memory_space<vmem>>, %arg15: memref<3x96x96xf32, #tpu.memory_space<vmem>>, %arg16: memref<1x96xf32, #tpu.memory_space<vmem>>, %arg17: memref<1x96xf32, #tpu.memory_space<vmem>>, %arg18: memref<3x96x64xf32, #tpu.memory_space<vmem>>, %arg19: memref<1x64xf32, #tpu.memory_space<vmem>>, %arg20: memref<1x64xf32, #tpu.memory_space<vmem>>, %arg21: memref<3x64x32xf32, #tpu.memory_space<vmem>>, %arg22: memref<1x32xf32, #tpu.memory_space<vmem>>, %arg23: memref<1x32xf32, #tpu.memory_space<vmem>>, %arg24: memref<32x21xf32, #tpu.memory_space<vmem>>, %arg25: memref<1x21xf32, #tpu.memory_space<vmem>>, %arg26: memref<1x1x21xf32, #tpu.memory_space<vmem>>) attributes {dimension_semantics = [#tpu.dimension_semantics<parallel>], iteration_bounds = array<i64: 2>, scalar_prefetch = 0 : i64, scratch_operands = 0 : i64, tpu.core_type = #tpu.core_type<tc>, window_params = [{transform_indices = @transform_0, window_bounds = array<i64: 1, 16, 64>}, {pipeline_mode = #tpu.pipeline_mode<synchronous>, transform_indices = @transform_1, window_bounds = array<i64: 3, 64, 48>}, {pipeline_mode = #tpu.pipeline_mode<synchronous>, transform_indices = @transform_2, window_bounds = array<i64: 1, 48>}, {pipeline_mode = #tpu.pipeline_mode<synchronous>, transform_indices = @transform_3, window_bounds = array<i64: 3, 48, 96>}, {pipeline_mode = #tpu.pipeline_mode<synchronous>, transform_indices = @transform_4, window_bounds = array<i64: 1, 96>}, {pipeline_mode = #tpu.pipeline_mode<synchronous>, transform_indices = @transform_5, window_bounds = array<i64: 3, 96, 96>}, {pipeline_mode = #tpu.pipeline_mode<synchronous>, transform_indices = @transform_6, window_bounds = array<i64: 1, 96>}, {pipeline_mode = #tpu.pipeline_mode<synchronous>, transform_indices = @transform_7, window_bounds = array<i64: 1, 96>}, {pipeline_mode = #tpu.pipeline_mode<synchronous>, transform_indices = @transform_8, window_bounds = array<i64: 3, 96, 96>}, {pipeline_mode = #tpu.pipeline_mode<synchronous>, transform_indices = @transform_9, window_bounds = array<i64: 1, 96>}, {pipeline_mode = #tpu.pipeline_mode<synchronous>, transform_indices = @transform_10, window_bounds = array<i64: 1, 96>}, {pipeline_mode = #tpu.pipeline_mode<synchronous>, transform_indices = @transform_11, window_bounds = array<i64: 3, 96, 96>}, {pipeline_mode = #tpu.pipeline_mode<synchronous>, transform_indices = @transform_12, window_bounds = array<i64: 1, 96>}, {pipeline_mode = #tpu.pipeline_mode<synchronous>, transform_indices = @transform_13, window_bounds = array<i64: 1, 96>}, {pipeline_mode = #tpu.pipeline_mode<synchronous>, transform_indices = @transform_14, window_bounds = array<i64: 3, 96, 96>}, {pipeline_mode = #tpu.pipeline_mode<synchronous>, transform_indices = @transform_15, window_bounds = array<i64: 1, 96>}, {pipeline_mode = #tpu.pipeline_mode<synchronous>, transform_indices = @transform_16, window_bounds = array<i64: 1, 96>}, {pipeline_mode = #tpu.pipeline_mode<synchronous>, transform_indices = @transform_17, window_bounds = array<i64: 3, 96, 64>}, {pipeline_mode = #tpu.pipeline_mode<synchronous>, transform_indices = @transform_18, window_bounds = array<i64: 1, 64>}, {pipeline_mode = #tpu.pipeline_mode<synchronous>, transform_indices = @transform_19, window_bounds = array<i64: 1, 64>}, {pipeline_mode = #tpu.pipeline_mode<synchronous>, transform_indices = @transform_20, window_bounds = array<i64: 3, 64, 32>}, {pipeline_mode = #tpu.pipeline_mode<synchronous>, transform_indices = @transform_21, window_bounds = array<i64: 1, 32>}, {pipeline_mode = #tpu.pipeline_mode<synchronous>, transform_indices = @transform_22, window_bounds = array<i64: 1, 32>}, {pipeline_mode = #tpu.pipeline_mode<synchronous>, transform_indices = @transform_23, window_bounds = array<i64: 32, 21>}, {pipeline_mode = #tpu.pipeline_mode<synchronous>, transform_indices = @transform_24, window_bounds = array<i64: 1, 21>}, {transform_indices = @transform_25, window_bounds = array<i64: 1, 1, 21>}]} {
    %c0 = arith.constant 0 : index
    %c0_0 = arith.constant 0 : index
    %c0_1 = arith.constant 0 : index
    %0 = vector.load %arg1[%c0, %c0_0, %c0_1] : memref<1x16x64xf32, #tpu.memory_space<vmem>>, vector<1x16x64xf32>
    %1 = vector.shape_cast %0 : vector<1x16x64xf32> to vector<16x64xf32>
    %c0_2 = arith.constant 0 : index
    %c0_3 = arith.constant 0 : index
    %2 = vector.load %arg3[%c0_2, %c0_3] : memref<1x48xf32, #tpu.memory_space<vmem>>, vector<1x48xf32>
    %cst = arith.constant 0.000000e+00 : f32
    %3 = vector.broadcast %cst : f32 to vector<1x64xf32>
    %4 = vector.extract_strided_slice %1 {offsets = [0, 0], sizes = [15, 64], strides = [1, 1]} : vector<16x64xf32> to vector<15x64xf32>
    %5 = tpu.concatenate %3, %4 in 0 : vector<1x64xf32>, vector<15x64xf32> -> vector<16x64xf32>
    %c0_4 = arith.constant 0 : index
    %c0_5 = arith.constant 0 : index
    %c0_6 = arith.constant 0 : index
    %6 = vector.load %arg2[%c0_4, %c0_5, %c0_6] : memref<3x64x48xf32, #tpu.memory_space<vmem>>, vector<1x64x48xf32>
    %7 = vector.shape_cast %6 : vector<1x64x48xf32> to vector<64x48xf32>
    %cst_7 = arith.constant dense<0.000000e+00> : vector<16x48xf32>
    %8 = tpu.matmul %5, %7, %cst_7 {dimension_numbers = #tpu.dot_dimension_numbers<[1], [0], [0], [1], [0, 0, 1, 1], [], []>} : vector<16x64xf32>, vector<64x48xf32>, vector<16x48xf32> -> vector<16x48xf32>
    %c1 = arith.constant 1 : index
    %c0_8 = arith.constant 0 : index
    %c0_9 = arith.constant 0 : index
    %9 = vector.load %arg2[%c1, %c0_8, %c0_9] : memref<3x64x48xf32, #tpu.memory_space<vmem>>, vector<1x64x48xf32>
    %10 = vector.shape_cast %9 : vector<1x64x48xf32> to vector<64x48xf32>
    %cst_10 = arith.constant dense<0.000000e+00> : vector<16x48xf32>
    %11 = tpu.matmul %1, %10, %cst_10 {dimension_numbers = #tpu.dot_dimension_numbers<[1], [0], [0], [1], [0, 0, 1, 1], [], []>} : vector<16x64xf32>, vector<64x48xf32>, vector<16x48xf32> -> vector<16x48xf32>
    %12 = arith.addf %8, %11 : vector<16x48xf32>
    %cst_11 = arith.constant 0.000000e+00 : f32
    %13 = vector.broadcast %cst_11 : f32 to vector<1x64xf32>
    %14 = vector.extract_strided_slice %1 {offsets = [1, 0], sizes = [15, 64], strides = [1, 1]} : vector<16x64xf32> to vector<15x64xf32>
    %15 = tpu.concatenate %14, %13 in 0 : vector<15x64xf32>, vector<1x64xf32> -> vector<16x64xf32>
    %c2 = arith.constant 2 : index
    %c0_12 = arith.constant 0 : index
    %c0_13 = arith.constant 0 : index
    %16 = vector.load %arg2[%c2, %c0_12, %c0_13] : memref<3x64x48xf32, #tpu.memory_space<vmem>>, vector<1x64x48xf32>
    %17 = vector.shape_cast %16 : vector<1x64x48xf32> to vector<64x48xf32>
    %cst_14 = arith.constant dense<0.000000e+00> : vector<16x48xf32>
    %18 = tpu.matmul %15, %17, %cst_14 {dimension_numbers = #tpu.dot_dimension_numbers<[1], [0], [0], [1], [0, 0, 1, 1], [], []>} : vector<16x64xf32>, vector<64x48xf32>, vector<16x48xf32> -> vector<16x48xf32>
    %19 = arith.addf %12, %18 : vector<16x48xf32>
    %20 = vector.broadcast %2 : vector<1x48xf32> to vector<16x48xf32>
    %21 = arith.addf %19, %20 : vector<16x48xf32>
    %cst_15 = arith.constant 0.000000e+00 : f32
    %22 = vector.broadcast %cst_15 : f32 to vector<16x48xf32>
    %23 = arith.maximumf %21, %22 : vector<16x48xf32>
    %24 = vector.shape_cast %23 : vector<16x48xf32> to vector<8x2x48xf32>
    %cst_16 = arith.constant dense<0xFF800000> : vector<8x48xf32>
    %25 = vector.multi_reduction <maximumf>, %24, %cst_16 [1] : vector<8x2x48xf32> to vector<8x48xf32>
    %c0_17 = arith.constant 0 : index
    %c0_18 = arith.constant 0 : index
    %26 = vector.load %arg5[%c0_17, %c0_18] : memref<1x96xf32, #tpu.memory_space<vmem>>, vector<1x96xf32>
    %cst_19 = arith.constant 0.000000e+00 : f32
    %27 = vector.broadcast %cst_19 : f32 to vector<1x48xf32>
    %28 = vector.extract_strided_slice %25 {offsets = [0, 0], sizes = [7, 48], strides = [1, 1]} : vector<8x48xf32> to vector<7x48xf32>
    %29 = tpu.concatenate %27, %28 in 0 : vector<1x48xf32>, vector<7x48xf32> -> vector<8x48xf32>
    %c0_20 = arith.constant 0 : index
    %c0_21 = arith.constant 0 : index
    %c0_22 = arith.constant 0 : index
    %30 = vector.load %arg4[%c0_20, %c0_21, %c0_22] : memref<3x48x96xf32, #tpu.memory_space<vmem>>, vector<1x48x96xf32>
    %31 = vector.shape_cast %30 : vector<1x48x96xf32> to vector<48x96xf32>
    %cst_23 = arith.constant dense<0.000000e+00> : vector<8x96xf32>
    %32 = tpu.matmul %29, %31, %cst_23 {dimension_numbers = #tpu.dot_dimension_numbers<[1], [0], [0], [1], [0, 0, 1, 1], [], []>} : vector<8x48xf32>, vector<48x96xf32>, vector<8x96xf32> -> vector<8x96xf32>
    %c1_24 = arith.constant 1 : index
    %c0_25 = arith.constant 0 : index
    %c0_26 = arith.constant 0 : index
    %33 = vector.load %arg4[%c1_24, %c0_25, %c0_26] : memref<3x48x96xf32, #tpu.memory_space<vmem>>, vector<1x48x96xf32>
    %34 = vector.shape_cast %33 : vector<1x48x96xf32> to vector<48x96xf32>
    %cst_27 = arith.constant dense<0.000000e+00> : vector<8x96xf32>
    %35 = tpu.matmul %25, %34, %cst_27 {dimension_numbers = #tpu.dot_dimension_numbers<[1], [0], [0], [1], [0, 0, 1, 1], [], []>} : vector<8x48xf32>, vector<48x96xf32>, vector<8x96xf32> -> vector<8x96xf32>
    %36 = arith.addf %32, %35 : vector<8x96xf32>
    %cst_28 = arith.constant 0.000000e+00 : f32
    %37 = vector.broadcast %cst_28 : f32 to vector<1x48xf32>
    %38 = vector.extract_strided_slice %25 {offsets = [1, 0], sizes = [7, 48], strides = [1, 1]} : vector<8x48xf32> to vector<7x48xf32>
    %39 = tpu.concatenate %38, %37 in 0 : vector<7x48xf32>, vector<1x48xf32> -> vector<8x48xf32>
    %c2_29 = arith.constant 2 : index
    %c0_30 = arith.constant 0 : index
    %c0_31 = arith.constant 0 : index
    %40 = vector.load %arg4[%c2_29, %c0_30, %c0_31] : memref<3x48x96xf32, #tpu.memory_space<vmem>>, vector<1x48x96xf32>
    %41 = vector.shape_cast %40 : vector<1x48x96xf32> to vector<48x96xf32>
    %cst_32 = arith.constant dense<0.000000e+00> : vector<8x96xf32>
    %42 = tpu.matmul %39, %41, %cst_32 {dimension_numbers = #tpu.dot_dimension_numbers<[1], [0], [0], [1], [0, 0, 1, 1], [], []>} : vector<8x48xf32>, vector<48x96xf32>, vector<8x96xf32> -> vector<8x96xf32>
    %43 = arith.addf %36, %42 : vector<8x96xf32>
    %44 = vector.broadcast %26 : vector<1x96xf32> to vector<8x96xf32>
    %45 = arith.addf %43, %44 : vector<8x96xf32>
    %cst_33 = arith.constant 0.000000e+00 : f32
    %46 = vector.broadcast %cst_33 : f32 to vector<8x96xf32>
    %47 = arith.maximumf %45, %46 : vector<8x96xf32>
    %48 = vector.shape_cast %47 : vector<8x96xf32> to vector<4x2x96xf32>
    %cst_34 = arith.constant dense<0xFF800000> : vector<4x96xf32>
    %49 = vector.multi_reduction <maximumf>, %48, %cst_34 [1] : vector<4x2x96xf32> to vector<4x96xf32>
    %c0_35 = arith.constant 0 : index
    %c0_36 = arith.constant 0 : index
    %50 = vector.load %arg7[%c0_35, %c0_36] : memref<1x96xf32, #tpu.memory_space<vmem>>, vector<1x96xf32>
    %c0_37 = arith.constant 0 : index
    %c0_38 = arith.constant 0 : index
    %51 = vector.load %arg8[%c0_37, %c0_38] : memref<1x96xf32, #tpu.memory_space<vmem>>, vector<1x96xf32>
    %cst_39 = arith.constant 0.000000e+00 : f32
    %52 = vector.broadcast %cst_39 : f32 to vector<1x96xf32>
    %53 = vector.extract_strided_slice %49 {offsets = [0, 0], sizes = [3, 96], strides = [1, 1]} : vector<4x96xf32> to vector<3x96xf32>
    %54 = tpu.concatenate %52, %53 in 0 : vector<1x96xf32>, vector<3x96xf32> -> vector<4x96xf32>
    %c0_40 = arith.constant 0 : index
    %c0_41 = arith.constant 0 : index
    %c0_42 = arith.constant 0 : index
    %55 = vector.load %arg6[%c0_40, %c0_41, %c0_42] : memref<3x96x96xf32, #tpu.memory_space<vmem>>, vector<1x96x96xf32>
    %56 = vector.shape_cast %55 : vector<1x96x96xf32> to vector<96x96xf32>
    %cst_43 = arith.constant dense<0.000000e+00> : vector<4x96xf32>
    %57 = tpu.matmul %54, %56, %cst_43 {dimension_numbers = #tpu.dot_dimension_numbers<[1], [0], [0], [1], [0, 0, 1, 1], [], []>} : vector<4x96xf32>, vector<96x96xf32>, vector<4x96xf32> -> vector<4x96xf32>
    %c1_44 = arith.constant 1 : index
    %c0_45 = arith.constant 0 : index
    %c0_46 = arith.constant 0 : index
    %58 = vector.load %arg6[%c1_44, %c0_45, %c0_46] : memref<3x96x96xf32, #tpu.memory_space<vmem>>, vector<1x96x96xf32>
    %59 = vector.shape_cast %58 : vector<1x96x96xf32> to vector<96x96xf32>
    %cst_47 = arith.constant dense<0.000000e+00> : vector<4x96xf32>
    %60 = tpu.matmul %49, %59, %cst_47 {dimension_numbers = #tpu.dot_dimension_numbers<[1], [0], [0], [1], [0, 0, 1, 1], [], []>} : vector<4x96xf32>, vector<96x96xf32>, vector<4x96xf32> -> vector<4x96xf32>
    %61 = arith.addf %57, %60 : vector<4x96xf32>
    %cst_48 = arith.constant 0.000000e+00 : f32
    %62 = vector.broadcast %cst_48 : f32 to vector<1x96xf32>
    %63 = vector.extract_strided_slice %49 {offsets = [1, 0], sizes = [3, 96], strides = [1, 1]} : vector<4x96xf32> to vector<3x96xf32>
    %64 = tpu.concatenate %63, %62 in 0 : vector<3x96xf32>, vector<1x96xf32> -> vector<4x96xf32>
    %c2_49 = arith.constant 2 : index
    %c0_50 = arith.constant 0 : index
    %c0_51 = arith.constant 0 : index
    %65 = vector.load %arg6[%c2_49, %c0_50, %c0_51] : memref<3x96x96xf32, #tpu.memory_space<vmem>>, vector<1x96x96xf32>
    %66 = vector.shape_cast %65 : vector<1x96x96xf32> to vector<96x96xf32>
    %cst_52 = arith.constant dense<0.000000e+00> : vector<4x96xf32>
    %67 = tpu.matmul %64, %66, %cst_52 {dimension_numbers = #tpu.dot_dimension_numbers<[1], [0], [0], [1], [0, 0, 1, 1], [], []>} : vector<4x96xf32>, vector<96x96xf32>, vector<4x96xf32> -> vector<4x96xf32>
    %68 = arith.addf %61, %67 : vector<4x96xf32>
    %69 = vector.broadcast %50 : vector<1x96xf32> to vector<4x96xf32>
    %70 = arith.mulf %68, %69 : vector<4x96xf32>
    %71 = vector.broadcast %51 : vector<1x96xf32> to vector<4x96xf32>
    %72 = arith.addf %70, %71 : vector<4x96xf32>
    %cst_53 = arith.constant 0.000000e+00 : f32
    %73 = vector.broadcast %cst_53 : f32 to vector<4x96xf32>
    %74 = arith.maximumf %72, %73 : vector<4x96xf32>
    %c0_54 = arith.constant 0 : index
    %c0_55 = arith.constant 0 : index
    %75 = vector.load %arg10[%c0_54, %c0_55] : memref<1x96xf32, #tpu.memory_space<vmem>>, vector<1x96xf32>
    %c0_56 = arith.constant 0 : index
    %c0_57 = arith.constant 0 : index
    %76 = vector.load %arg11[%c0_56, %c0_57] : memref<1x96xf32, #tpu.memory_space<vmem>>, vector<1x96xf32>
    %cst_58 = arith.constant 0.000000e+00 : f32
    %77 = vector.broadcast %cst_58 : f32 to vector<1x96xf32>
    %78 = vector.extract_strided_slice %74 {offsets = [0, 0], sizes = [3, 96], strides = [1, 1]} : vector<4x96xf32> to vector<3x96xf32>
    %79 = tpu.concatenate %77, %78 in 0 : vector<1x96xf32>, vector<3x96xf32> -> vector<4x96xf32>
    %c0_59 = arith.constant 0 : index
    %c0_60 = arith.constant 0 : index
    %c0_61 = arith.constant 0 : index
    %80 = vector.load %arg9[%c0_59, %c0_60, %c0_61] : memref<3x96x96xf32, #tpu.memory_space<vmem>>, vector<1x96x96xf32>
    %81 = vector.shape_cast %80 : vector<1x96x96xf32> to vector<96x96xf32>
    %cst_62 = arith.constant dense<0.000000e+00> : vector<4x96xf32>
    %82 = tpu.matmul %79, %81, %cst_62 {dimension_numbers = #tpu.dot_dimension_numbers<[1], [0], [0], [1], [0, 0, 1, 1], [], []>} : vector<4x96xf32>, vector<96x96xf32>, vector<4x96xf32> -> vector<4x96xf32>
    %c1_63 = arith.constant 1 : index
    %c0_64 = arith.constant 0 : index
    %c0_65 = arith.constant 0 : index
    %83 = vector.load %arg9[%c1_63, %c0_64, %c0_65] : memref<3x96x96xf32, #tpu.memory_space<vmem>>, vector<1x96x96xf32>
    %84 = vector.shape_cast %83 : vector<1x96x96xf32> to vector<96x96xf32>
    %cst_66 = arith.constant dense<0.000000e+00> : vector<4x96xf32>
    %85 = tpu.matmul %74, %84, %cst_66 {dimension_numbers = #tpu.dot_dimension_numbers<[1], [0], [0], [1], [0, 0, 1, 1], [], []>} : vector<4x96xf32>, vector<96x96xf32>, vector<4x96xf32> -> vector<4x96xf32>
    %86 = arith.addf %82, %85 : vector<4x96xf32>
    %cst_67 = arith.constant 0.000000e+00 : f32
    %87 = vector.broadcast %cst_67 : f32 to vector<1x96xf32>
    %88 = vector.extract_strided_slice %74 {offsets = [1, 0], sizes = [3, 96], strides = [1, 1]} : vector<4x96xf32> to vector<3x96xf32>
    %89 = tpu.concatenate %88, %87 in 0 : vector<3x96xf32>, vector<1x96xf32> -> vector<4x96xf32>
    %c2_68 = arith.constant 2 : index
    %c0_69 = arith.constant 0 : index
    %c0_70 = arith.constant 0 : index
    %90 = vector.load %arg9[%c2_68, %c0_69, %c0_70] : memref<3x96x96xf32, #tpu.memory_space<vmem>>, vector<1x96x96xf32>
    %91 = vector.shape_cast %90 : vector<1x96x96xf32> to vector<96x96xf32>
    %cst_71 = arith.constant dense<0.000000e+00> : vector<4x96xf32>
    %92 = tpu.matmul %89, %91, %cst_71 {dimension_numbers = #tpu.dot_dimension_numbers<[1], [0], [0], [1], [0, 0, 1, 1], [], []>} : vector<4x96xf32>, vector<96x96xf32>, vector<4x96xf32> -> vector<4x96xf32>
    %93 = arith.addf %86, %92 : vector<4x96xf32>
    %94 = vector.broadcast %75 : vector<1x96xf32> to vector<4x96xf32>
    %95 = arith.mulf %93, %94 : vector<4x96xf32>
    %96 = vector.broadcast %76 : vector<1x96xf32> to vector<4x96xf32>
    %97 = arith.addf %95, %96 : vector<4x96xf32>
    %98 = arith.addf %97, %49 : vector<4x96xf32>
    %cst_72 = arith.constant 0.000000e+00 : f32
    %99 = vector.broadcast %cst_72 : f32 to vector<4x96xf32>
    %100 = arith.maximumf %98, %99 : vector<4x96xf32>
    %c0_73 = arith.constant 0 : index
    %c0_74 = arith.constant 0 : index
    %101 = vector.load %arg13[%c0_73, %c0_74] : memref<1x96xf32, #tpu.memory_space<vmem>>, vector<1x96xf32>
    %c0_75 = arith.constant 0 : index
    %c0_76 = arith.constant 0 : index
    %102 = vector.load %arg14[%c0_75, %c0_76] : memref<1x96xf32, #tpu.memory_space<vmem>>, vector<1x96xf32>
    %cst_77 = arith.constant 0.000000e+00 : f32
    %103 = vector.broadcast %cst_77 : f32 to vector<1x96xf32>
    %104 = vector.extract_strided_slice %100 {offsets = [0, 0], sizes = [3, 96], strides = [1, 1]} : vector<4x96xf32> to vector<3x96xf32>
    %105 = tpu.concatenate %103, %104 in 0 : vector<1x96xf32>, vector<3x96xf32> -> vector<4x96xf32>
    %c0_78 = arith.constant 0 : index
    %c0_79 = arith.constant 0 : index
    %c0_80 = arith.constant 0 : index
    %106 = vector.load %arg12[%c0_78, %c0_79, %c0_80] : memref<3x96x96xf32, #tpu.memory_space<vmem>>, vector<1x96x96xf32>
    %107 = vector.shape_cast %106 : vector<1x96x96xf32> to vector<96x96xf32>
    %cst_81 = arith.constant dense<0.000000e+00> : vector<4x96xf32>
    %108 = tpu.matmul %105, %107, %cst_81 {dimension_numbers = #tpu.dot_dimension_numbers<[1], [0], [0], [1], [0, 0, 1, 1], [], []>} : vector<4x96xf32>, vector<96x96xf32>, vector<4x96xf32> -> vector<4x96xf32>
    %c1_82 = arith.constant 1 : index
    %c0_83 = arith.constant 0 : index
    %c0_84 = arith.constant 0 : index
    %109 = vector.load %arg12[%c1_82, %c0_83, %c0_84] : memref<3x96x96xf32, #tpu.memory_space<vmem>>, vector<1x96x96xf32>
    %110 = vector.shape_cast %109 : vector<1x96x96xf32> to vector<96x96xf32>
    %cst_85 = arith.constant dense<0.000000e+00> : vector<4x96xf32>
    %111 = tpu.matmul %100, %110, %cst_85 {dimension_numbers = #tpu.dot_dimension_numbers<[1], [0], [0], [1], [0, 0, 1, 1], [], []>} : vector<4x96xf32>, vector<96x96xf32>, vector<4x96xf32> -> vector<4x96xf32>
    %112 = arith.addf %108, %111 : vector<4x96xf32>
    %cst_86 = arith.constant 0.000000e+00 : f32
    %113 = vector.broadcast %cst_86 : f32 to vector<1x96xf32>
    %114 = vector.extract_strided_slice %100 {offsets = [1, 0], sizes = [3, 96], strides = [1, 1]} : vector<4x96xf32> to vector<3x96xf32>
    %115 = tpu.concatenate %114, %113 in 0 : vector<3x96xf32>, vector<1x96xf32> -> vector<4x96xf32>
    %c2_87 = arith.constant 2 : index
    %c0_88 = arith.constant 0 : index
    %c0_89 = arith.constant 0 : index
    %116 = vector.load %arg12[%c2_87, %c0_88, %c0_89] : memref<3x96x96xf32, #tpu.memory_space<vmem>>, vector<1x96x96xf32>
    %117 = vector.shape_cast %116 : vector<1x96x96xf32> to vector<96x96xf32>
    %cst_90 = arith.constant dense<0.000000e+00> : vector<4x96xf32>
    %118 = tpu.matmul %115, %117, %cst_90 {dimension_numbers = #tpu.dot_dimension_numbers<[1], [0], [0], [1], [0, 0, 1, 1], [], []>} : vector<4x96xf32>, vector<96x96xf32>, vector<4x96xf32> -> vector<4x96xf32>
    %119 = arith.addf %112, %118 : vector<4x96xf32>
    %120 = vector.broadcast %101 : vector<1x96xf32> to vector<4x96xf32>
    %121 = arith.mulf %119, %120 : vector<4x96xf32>
    %122 = vector.broadcast %102 : vector<1x96xf32> to vector<4x96xf32>
    %123 = arith.addf %121, %122 : vector<4x96xf32>
    %cst_91 = arith.constant 0.000000e+00 : f32
    %124 = vector.broadcast %cst_91 : f32 to vector<4x96xf32>
    %125 = arith.maximumf %123, %124 : vector<4x96xf32>
    %c0_92 = arith.constant 0 : index
    %c0_93 = arith.constant 0 : index
    %126 = vector.load %arg16[%c0_92, %c0_93] : memref<1x96xf32, #tpu.memory_space<vmem>>, vector<1x96xf32>
    %c0_94 = arith.constant 0 : index
    %c0_95 = arith.constant 0 : index
    %127 = vector.load %arg17[%c0_94, %c0_95] : memref<1x96xf32, #tpu.memory_space<vmem>>, vector<1x96xf32>
    %cst_96 = arith.constant 0.000000e+00 : f32
    %128 = vector.broadcast %cst_96 : f32 to vector<1x96xf32>
    %129 = vector.extract_strided_slice %125 {offsets = [0, 0], sizes = [3, 96], strides = [1, 1]} : vector<4x96xf32> to vector<3x96xf32>
    %130 = tpu.concatenate %128, %129 in 0 : vector<1x96xf32>, vector<3x96xf32> -> vector<4x96xf32>
    %c0_97 = arith.constant 0 : index
    %c0_98 = arith.constant 0 : index
    %c0_99 = arith.constant 0 : index
    %131 = vector.load %arg15[%c0_97, %c0_98, %c0_99] : memref<3x96x96xf32, #tpu.memory_space<vmem>>, vector<1x96x96xf32>
    %132 = vector.shape_cast %131 : vector<1x96x96xf32> to vector<96x96xf32>
    %cst_100 = arith.constant dense<0.000000e+00> : vector<4x96xf32>
    %133 = tpu.matmul %130, %132, %cst_100 {dimension_numbers = #tpu.dot_dimension_numbers<[1], [0], [0], [1], [0, 0, 1, 1], [], []>} : vector<4x96xf32>, vector<96x96xf32>, vector<4x96xf32> -> vector<4x96xf32>
    %c1_101 = arith.constant 1 : index
    %c0_102 = arith.constant 0 : index
    %c0_103 = arith.constant 0 : index
    %134 = vector.load %arg15[%c1_101, %c0_102, %c0_103] : memref<3x96x96xf32, #tpu.memory_space<vmem>>, vector<1x96x96xf32>
    %135 = vector.shape_cast %134 : vector<1x96x96xf32> to vector<96x96xf32>
    %cst_104 = arith.constant dense<0.000000e+00> : vector<4x96xf32>
    %136 = tpu.matmul %125, %135, %cst_104 {dimension_numbers = #tpu.dot_dimension_numbers<[1], [0], [0], [1], [0, 0, 1, 1], [], []>} : vector<4x96xf32>, vector<96x96xf32>, vector<4x96xf32> -> vector<4x96xf32>
    %137 = arith.addf %133, %136 : vector<4x96xf32>
    %cst_105 = arith.constant 0.000000e+00 : f32
    %138 = vector.broadcast %cst_105 : f32 to vector<1x96xf32>
    %139 = vector.extract_strided_slice %125 {offsets = [1, 0], sizes = [3, 96], strides = [1, 1]} : vector<4x96xf32> to vector<3x96xf32>
    %140 = tpu.concatenate %139, %138 in 0 : vector<3x96xf32>, vector<1x96xf32> -> vector<4x96xf32>
    %c2_106 = arith.constant 2 : index
    %c0_107 = arith.constant 0 : index
    %c0_108 = arith.constant 0 : index
    %141 = vector.load %arg15[%c2_106, %c0_107, %c0_108] : memref<3x96x96xf32, #tpu.memory_space<vmem>>, vector<1x96x96xf32>
    %142 = vector.shape_cast %141 : vector<1x96x96xf32> to vector<96x96xf32>
    %cst_109 = arith.constant dense<0.000000e+00> : vector<4x96xf32>
    %143 = tpu.matmul %140, %142, %cst_109 {dimension_numbers = #tpu.dot_dimension_numbers<[1], [0], [0], [1], [0, 0, 1, 1], [], []>} : vector<4x96xf32>, vector<96x96xf32>, vector<4x96xf32> -> vector<4x96xf32>
    %144 = arith.addf %137, %143 : vector<4x96xf32>
    %145 = vector.broadcast %126 : vector<1x96xf32> to vector<4x96xf32>
    %146 = arith.mulf %144, %145 : vector<4x96xf32>
    %147 = vector.broadcast %127 : vector<1x96xf32> to vector<4x96xf32>
    %148 = arith.addf %146, %147 : vector<4x96xf32>
    %149 = arith.addf %148, %100 : vector<4x96xf32>
    %cst_110 = arith.constant 0.000000e+00 : f32
    %150 = vector.broadcast %cst_110 : f32 to vector<4x96xf32>
    %151 = arith.maximumf %149, %150 : vector<4x96xf32>
    %cst_111 = arith.constant 0.000000e+00 : f32
    %152 = vector.broadcast %cst_111 : f32 to vector<1x96xf32>
    %153 = vector.extract_strided_slice %151 {offsets = [1, 0], sizes = [3, 96], strides = [1, 1]} : vector<4x96xf32> to vector<3x96xf32>
    %154 = tpu.concatenate %153, %152 in 0 : vector<3x96xf32>, vector<1x96xf32> -> vector<4x96xf32>
    %c1_112 = arith.constant 1 : index
    %c0_113 = arith.constant 0 : index
    %c0_114 = arith.constant 0 : index
    %155 = vector.load %arg18[%c1_112, %c0_113, %c0_114] : memref<3x96x64xf32, #tpu.memory_space<vmem>>, vector<1x96x64xf32>
    %156 = vector.shape_cast %155 : vector<1x96x64xf32> to vector<96x64xf32>
    %cst_115 = arith.constant dense<0.000000e+00> : vector<4x64xf32>
    %157 = tpu.matmul %151, %156, %cst_115 {dimension_numbers = #tpu.dot_dimension_numbers<[1], [0], [0], [1], [0, 0, 1, 1], [], []>} : vector<4x96xf32>, vector<96x64xf32>, vector<4x64xf32> -> vector<4x64xf32>
    %c2_116 = arith.constant 2 : index
    %c0_117 = arith.constant 0 : index
    %c0_118 = arith.constant 0 : index
    %158 = vector.load %arg18[%c2_116, %c0_117, %c0_118] : memref<3x96x64xf32, #tpu.memory_space<vmem>>, vector<1x96x64xf32>
    %159 = vector.shape_cast %158 : vector<1x96x64xf32> to vector<96x64xf32>
    %cst_119 = arith.constant dense<0.000000e+00> : vector<4x64xf32>
    %160 = tpu.matmul %151, %159, %cst_119 {dimension_numbers = #tpu.dot_dimension_numbers<[1], [0], [0], [1], [0, 0, 1, 1], [], []>} : vector<4x96xf32>, vector<96x64xf32>, vector<4x64xf32> -> vector<4x64xf32>
    %c0_120 = arith.constant 0 : index
    %c0_121 = arith.constant 0 : index
    %c0_122 = arith.constant 0 : index
    %161 = vector.load %arg18[%c0_120, %c0_121, %c0_122] : memref<3x96x64xf32, #tpu.memory_space<vmem>>, vector<1x96x64xf32>
    %162 = vector.shape_cast %161 : vector<1x96x64xf32> to vector<96x64xf32>
    %cst_123 = arith.constant dense<0.000000e+00> : vector<4x64xf32>
    %163 = tpu.matmul %154, %162, %cst_123 {dimension_numbers = #tpu.dot_dimension_numbers<[1], [0], [0], [1], [0, 0, 1, 1], [], []>} : vector<4x96xf32>, vector<96x64xf32>, vector<4x64xf32> -> vector<4x64xf32>
    %164 = arith.addf %160, %163 : vector<4x64xf32>
    %c0_124 = arith.constant 0 : index
    %c0_125 = arith.constant 0 : index
    %165 = vector.load %arg19[%c0_124, %c0_125] : memref<1x64xf32, #tpu.memory_space<vmem>>, vector<1x64xf32>
    %166 = vector.broadcast %165 : vector<1x64xf32> to vector<4x64xf32>
    %167 = arith.mulf %157, %166 : vector<4x64xf32>
    %c0_126 = arith.constant 0 : index
    %c0_127 = arith.constant 0 : index
    %168 = vector.load %arg20[%c0_126, %c0_127] : memref<1x64xf32, #tpu.memory_space<vmem>>, vector<1x64xf32>
    %169 = vector.broadcast %168 : vector<1x64xf32> to vector<4x64xf32>
    %170 = arith.addf %167, %169 : vector<4x64xf32>
    %cst_128 = arith.constant 0.000000e+00 : f32
    %171 = vector.broadcast %cst_128 : f32 to vector<4x64xf32>
    %172 = arith.maximumf %170, %171 : vector<4x64xf32>
    %c0_129 = arith.constant 0 : index
    %c0_130 = arith.constant 0 : index
    %173 = vector.load %arg19[%c0_129, %c0_130] : memref<1x64xf32, #tpu.memory_space<vmem>>, vector<1x64xf32>
    %174 = vector.broadcast %173 : vector<1x64xf32> to vector<4x64xf32>
    %175 = arith.mulf %164, %174 : vector<4x64xf32>
    %c0_131 = arith.constant 0 : index
    %c0_132 = arith.constant 0 : index
    %176 = vector.load %arg20[%c0_131, %c0_132] : memref<1x64xf32, #tpu.memory_space<vmem>>, vector<1x64xf32>
    %177 = vector.broadcast %176 : vector<1x64xf32> to vector<4x64xf32>
    %178 = arith.addf %175, %177 : vector<4x64xf32>
    %cst_133 = arith.constant 0.000000e+00 : f32
    %179 = vector.broadcast %cst_133 : f32 to vector<4x64xf32>
    %180 = arith.maximumf %178, %179 : vector<4x64xf32>
    %181 = tpu.concatenate %172, %180 in 0 : vector<4x64xf32>, vector<4x64xf32> -> vector<8x64xf32>
    %cst_134 = arith.constant 0.000000e+00 : f32
    %182 = vector.broadcast %cst_134 : f32 to vector<1x64xf32>
    %183 = vector.extract_strided_slice %172 {offsets = [1, 0], sizes = [3, 64], strides = [1, 1]} : vector<4x64xf32> to vector<3x64xf32>
    %184 = tpu.concatenate %183, %182 in 0 : vector<3x64xf32>, vector<1x64xf32> -> vector<4x64xf32>
    %185 = tpu.concatenate %180, %184 in 0 : vector<4x64xf32>, vector<4x64xf32> -> vector<8x64xf32>
    %c1_135 = arith.constant 1 : index
    %c0_136 = arith.constant 0 : index
    %c0_137 = arith.constant 0 : index
    %186 = vector.load %arg21[%c1_135, %c0_136, %c0_137] : memref<3x64x32xf32, #tpu.memory_space<vmem>>, vector<1x64x32xf32>
    %187 = vector.shape_cast %186 : vector<1x64x32xf32> to vector<64x32xf32>
    %cst_138 = arith.constant dense<0.000000e+00> : vector<8x32xf32>
    %188 = tpu.matmul %181, %187, %cst_138 {dimension_numbers = #tpu.dot_dimension_numbers<[1], [0], [0], [1], [0, 0, 1, 1], [], []>} : vector<8x64xf32>, vector<64x32xf32>, vector<8x32xf32> -> vector<8x32xf32>
    %c2_139 = arith.constant 2 : index
    %c0_140 = arith.constant 0 : index
    %c0_141 = arith.constant 0 : index
    %189 = vector.load %arg21[%c2_139, %c0_140, %c0_141] : memref<3x64x32xf32, #tpu.memory_space<vmem>>, vector<1x64x32xf32>
    %190 = vector.shape_cast %189 : vector<1x64x32xf32> to vector<64x32xf32>
    %cst_142 = arith.constant dense<0.000000e+00> : vector<8x32xf32>
    %191 = tpu.matmul %181, %190, %cst_142 {dimension_numbers = #tpu.dot_dimension_numbers<[1], [0], [0], [1], [0, 0, 1, 1], [], []>} : vector<8x64xf32>, vector<64x32xf32>, vector<8x32xf32> -> vector<8x32xf32>
    %c0_143 = arith.constant 0 : index
    %c0_144 = arith.constant 0 : index
    %c0_145 = arith.constant 0 : index
    %192 = vector.load %arg21[%c0_143, %c0_144, %c0_145] : memref<3x64x32xf32, #tpu.memory_space<vmem>>, vector<1x64x32xf32>
    %193 = vector.shape_cast %192 : vector<1x64x32xf32> to vector<64x32xf32>
    %cst_146 = arith.constant dense<0.000000e+00> : vector<8x32xf32>
    %194 = tpu.matmul %185, %193, %cst_146 {dimension_numbers = #tpu.dot_dimension_numbers<[1], [0], [0], [1], [0, 0, 1, 1], [], []>} : vector<8x64xf32>, vector<64x32xf32>, vector<8x32xf32> -> vector<8x32xf32>
    %195 = arith.addf %191, %194 : vector<8x32xf32>
    %c0_147 = arith.constant 0 : index
    %c0_148 = arith.constant 0 : index
    %196 = vector.load %arg22[%c0_147, %c0_148] : memref<1x32xf32, #tpu.memory_space<vmem>>, vector<1x32xf32>
    %197 = vector.broadcast %196 : vector<1x32xf32> to vector<8x32xf32>
    %198 = arith.mulf %188, %197 : vector<8x32xf32>
    %c0_149 = arith.constant 0 : index
    %c0_150 = arith.constant 0 : index
    %199 = vector.load %arg23[%c0_149, %c0_150] : memref<1x32xf32, #tpu.memory_space<vmem>>, vector<1x32xf32>
    %200 = vector.broadcast %199 : vector<1x32xf32> to vector<8x32xf32>
    %201 = arith.addf %198, %200 : vector<8x32xf32>
    %cst_151 = arith.constant 0.000000e+00 : f32
    %202 = vector.broadcast %cst_151 : f32 to vector<8x32xf32>
    %203 = arith.maximumf %201, %202 : vector<8x32xf32>
    %c0_152 = arith.constant 0 : index
    %c0_153 = arith.constant 0 : index
    %204 = vector.load %arg22[%c0_152, %c0_153] : memref<1x32xf32, #tpu.memory_space<vmem>>, vector<1x32xf32>
    %205 = vector.broadcast %204 : vector<1x32xf32> to vector<8x32xf32>
    %206 = arith.mulf %195, %205 : vector<8x32xf32>
    %c0_154 = arith.constant 0 : index
    %c0_155 = arith.constant 0 : index
    %207 = vector.load %arg23[%c0_154, %c0_155] : memref<1x32xf32, #tpu.memory_space<vmem>>, vector<1x32xf32>
    %208 = vector.broadcast %207 : vector<1x32xf32> to vector<8x32xf32>
    %209 = arith.addf %206, %208 : vector<8x32xf32>
    %cst_156 = arith.constant 0.000000e+00 : f32
    %210 = vector.broadcast %cst_156 : f32 to vector<8x32xf32>
    %211 = arith.maximumf %209, %210 : vector<8x32xf32>
    %cst_157 = arith.constant dense<0.000000e+00> : vector<32xf32>
    %212 = vector.multi_reduction <add>, %203, %cst_157 [0] : vector<8x32xf32> to vector<32xf32>
    %213 = vector.shape_cast %212 : vector<32xf32> to vector<1x32xf32>
    %cst_158 = arith.constant dense<0.000000e+00> : vector<32xf32>
    %214 = vector.multi_reduction <add>, %211, %cst_158 [0] : vector<8x32xf32> to vector<32xf32>
    %215 = vector.shape_cast %214 : vector<32xf32> to vector<1x32xf32>
    %216 = arith.addf %213, %215 : vector<1x32xf32>
    %cst_159 = arith.constant 6.250000e-02 : f32
    %217 = vector.broadcast %cst_159 : f32 to vector<1x32xf32>
    %218 = arith.mulf %216, %217 : vector<1x32xf32>
    %c0_160 = arith.constant 0 : index
    %c0_161 = arith.constant 0 : index
    %219 = vector.load %arg24[%c0_160, %c0_161] : memref<32x21xf32, #tpu.memory_space<vmem>>, vector<32x21xf32>
    %cst_162 = arith.constant dense<0.000000e+00> : vector<1x21xf32>
    %220 = tpu.matmul %218, %219, %cst_162 {dimension_numbers = #tpu.dot_dimension_numbers<[1], [0], [0], [1], [0, 0, 1, 1], [], []>} : vector<1x32xf32>, vector<32x21xf32>, vector<1x21xf32> -> vector<1x21xf32>
    %c0_163 = arith.constant 0 : index
    %c0_164 = arith.constant 0 : index
    %221 = vector.load %arg25[%c0_163, %c0_164] : memref<1x21xf32, #tpu.memory_space<vmem>>, vector<1x21xf32>
    %222 = arith.addf %220, %221 : vector<1x21xf32>
    %c0_165 = arith.constant 0 : index
    %c0_166 = arith.constant 0 : index
    %c0_167 = arith.constant 0 : index
    %223 = vector.load %arg26[%c0_165, %c0_166, %c0_167] : memref<1x1x21xf32, #tpu.memory_space<vmem>>, vector<1x1x21xf32>
    %224 = vector.shape_cast %223 : vector<1x1x21xf32> to vector<1x21xf32>
    %225 = vector.shape_cast %222 : vector<1x21xf32> to vector<1x1x21xf32>
    tpu.vector_store %arg26[%c0_165, %c0_166, %c0_167], %225 {strides = array<i32>} : memref<1x1x21xf32, #tpu.memory_space<vmem>>, vector<1x1x21xf32>,
    return
  }
  func.func @transform_0(%arg0: i32) -> (i32, i32, i32) {
    %c0_i32 = arith.constant 0 : i32
    %c0_i32_0 = arith.constant 0 : i32
    %c0_i32_1 = arith.constant 0 : i32
    return %arg0, %c0_i32, %c0_i32_0 : i32, i32, i32
  }
  func.func @transform_1(%arg0: i32) -> (i32, i32, i32) {
    %c0_i32 = arith.constant 0 : i32
    %c0_i32_0 = arith.constant 0 : i32
    %c0_i32_1 = arith.constant 0 : i32
    %c0_i32_2 = arith.constant 0 : i32
    return %c0_i32, %c0_i32_0, %c0_i32_1 : i32, i32, i32
  }
  func.func @transform_2(%arg0: i32) -> (i32, i32) {
    %c0_i32 = arith.constant 0 : i32
    %c0_i32_0 = arith.constant 0 : i32
    %c0_i32_1 = arith.constant 0 : i32
    return %c0_i32, %c0_i32_0 : i32, i32
  }
  func.func @transform_3(%arg0: i32) -> (i32, i32, i32) {
    %c0_i32 = arith.constant 0 : i32
    %c0_i32_0 = arith.constant 0 : i32
    %c0_i32_1 = arith.constant 0 : i32
    %c0_i32_2 = arith.constant 0 : i32
    return %c0_i32, %c0_i32_0, %c0_i32_1 : i32, i32, i32
  }
  func.func @transform_4(%arg0: i32) -> (i32, i32) {
    %c0_i32 = arith.constant 0 : i32
    %c0_i32_0 = arith.constant 0 : i32
    %c0_i32_1 = arith.constant 0 : i32
    return %c0_i32, %c0_i32_0 : i32, i32
  }
  func.func @transform_5(%arg0: i32) -> (i32, i32, i32) {
    %c0_i32 = arith.constant 0 : i32
    %c0_i32_0 = arith.constant 0 : i32
    %c0_i32_1 = arith.constant 0 : i32
    %c0_i32_2 = arith.constant 0 : i32
    return %c0_i32, %c0_i32_0, %c0_i32_1 : i32, i32, i32
  }
  func.func @transform_6(%arg0: i32) -> (i32, i32) {
    %c0_i32 = arith.constant 0 : i32
    %c0_i32_0 = arith.constant 0 : i32
    %c0_i32_1 = arith.constant 0 : i32
    return %c0_i32, %c0_i32_0 : i32, i32
  }
  func.func @transform_7(%arg0: i32) -> (i32, i32) {
    %c0_i32 = arith.constant 0 : i32
    %c0_i32_0 = arith.constant 0 : i32
    %c0_i32_1 = arith.constant 0 : i32
    return %c0_i32, %c0_i32_0 : i32, i32
  }
  func.func @transform_8(%arg0: i32) -> (i32, i32, i32) {
    %c0_i32 = arith.constant 0 : i32
    %c0_i32_0 = arith.constant 0 : i32
    %c0_i32_1 = arith.constant 0 : i32
    %c0_i32_2 = arith.constant 0 : i32
    return %c0_i32, %c0_i32_0, %c0_i32_1 : i32, i32, i32
  }
  func.func @transform_9(%arg0: i32) -> (i32, i32) {
    %c0_i32 = arith.constant 0 : i32
    %c0_i32_0 = arith.constant 0 : i32
    %c0_i32_1 = arith.constant 0 : i32
    return %c0_i32, %c0_i32_0 : i32, i32
  }
  func.func @transform_10(%arg0: i32) -> (i32, i32) {
    %c0_i32 = arith.constant 0 : i32
    %c0_i32_0 = arith.constant 0 : i32
    %c0_i32_1 = arith.constant 0 : i32
    return %c0_i32, %c0_i32_0 : i32, i32
  }
  func.func @transform_11(%arg0: i32) -> (i32, i32, i32) {
    %c0_i32 = arith.constant 0 : i32
    %c0_i32_0 = arith.constant 0 : i32
    %c0_i32_1 = arith.constant 0 : i32
    %c0_i32_2 = arith.constant 0 : i32
    return %c0_i32, %c0_i32_0, %c0_i32_1 : i32, i32, i32
  }
  func.func @transform_12(%arg0: i32) -> (i32, i32) {
    %c0_i32 = arith.constant 0 : i32
    %c0_i32_0 = arith.constant 0 : i32
    %c0_i32_1 = arith.constant 0 : i32
    return %c0_i32, %c0_i32_0 : i32, i32
  }
  func.func @transform_13(%arg0: i32) -> (i32, i32) {
    %c0_i32 = arith.constant 0 : i32
    %c0_i32_0 = arith.constant 0 : i32
    %c0_i32_1 = arith.constant 0 : i32
    return %c0_i32, %c0_i32_0 : i32, i32
  }
  func.func @transform_14(%arg0: i32) -> (i32, i32, i32) {
    %c0_i32 = arith.constant 0 : i32
    %c0_i32_0 = arith.constant 0 : i32
    %c0_i32_1 = arith.constant 0 : i32
    %c0_i32_2 = arith.constant 0 : i32
    return %c0_i32, %c0_i32_0, %c0_i32_1 : i32, i32, i32
  }
  func.func @transform_15(%arg0: i32) -> (i32, i32) {
    %c0_i32 = arith.constant 0 : i32
    %c0_i32_0 = arith.constant 0 : i32
    %c0_i32_1 = arith.constant 0 : i32
    return %c0_i32, %c0_i32_0 : i32, i32
  }
  func.func @transform_16(%arg0: i32) -> (i32, i32) {
    %c0_i32 = arith.constant 0 : i32
    %c0_i32_0 = arith.constant 0 : i32
    %c0_i32_1 = arith.constant 0 : i32
    return %c0_i32, %c0_i32_0 : i32, i32
  }
  func.func @transform_17(%arg0: i32) -> (i32, i32, i32) {
    %c0_i32 = arith.constant 0 : i32
    %c0_i32_0 = arith.constant 0 : i32
    %c0_i32_1 = arith.constant 0 : i32
    %c0_i32_2 = arith.constant 0 : i32
    return %c0_i32, %c0_i32_0, %c0_i32_1 : i32, i32, i32
  }
  func.func @transform_18(%arg0: i32) -> (i32, i32) {
    %c0_i32 = arith.constant 0 : i32
    %c0_i32_0 = arith.constant 0 : i32
    %c0_i32_1 = arith.constant 0 : i32
    return %c0_i32, %c0_i32_0 : i32, i32
  }
  func.func @transform_19(%arg0: i32) -> (i32, i32) {
    %c0_i32 = arith.constant 0 : i32
    %c0_i32_0 = arith.constant 0 : i32
    %c0_i32_1 = arith.constant 0 : i32
    return %c0_i32, %c0_i32_0 : i32, i32
  }
  func.func @transform_20(%arg0: i32) -> (i32, i32, i32) {
    %c0_i32 = arith.constant 0 : i32
    %c0_i32_0 = arith.constant 0 : i32
    %c0_i32_1 = arith.constant 0 : i32
    %c0_i32_2 = arith.constant 0 : i32
    return %c0_i32, %c0_i32_0, %c0_i32_1 : i32, i32, i32
  }
  func.func @transform_21(%arg0: i32) -> (i32, i32) {
    %c0_i32 = arith.constant 0 : i32
    %c0_i32_0 = arith.constant 0 : i32
    %c0_i32_1 = arith.constant 0 : i32
    return %c0_i32, %c0_i32_0 : i32, i32
  }
  func.func @transform_22(%arg0: i32) -> (i32, i32) {
    %c0_i32 = arith.constant 0 : i32
    %c0_i32_0 = arith.constant 0 : i32
    %c0_i32_1 = arith.constant 0 : i32
    return %c0_i32, %c0_i32_0 : i32, i32
  }
  func.func @transform_23(%arg0: i32) -> (i32, i32) {
    %c0_i32 = arith.constant 0 : i32
    %c0_i32_0 = arith.constant 0 : i32
    %c0_i32_1 = arith.constant 0 : i32
    return %c0_i32, %c0_i32_0 : i32, i32
  }
  func.func @transform_24(%arg0: i32) -> (i32, i32) {
    %c0_i32 = arith.constant 0 : i32
    %c0_i32_0 = arith.constant 0 : i32
    %c0_i32_1 = arith.constant 0 : i32
    return %c0_i32, %c0_i32_0 : i32, i32
  }
  func.func @transform_25(%arg0: i32) -> (i32, i32, i32) {
    %c0_i32 = arith.constant 0 : i32
    %c0_i32_0 = arith.constant 0 : i32
    %c0_i32_1 = arith.constant 0 : i32
    return %arg0, %c0_i32, %c0_i32_0 : i32, i32, i32
  }
}

</mosaic_0001>

<llo_original>
// kernel: tpu_custom_call.1
$region0: #{tpu_custom_call.1}
  #allocation0 [shape = 'u32[]', space=smem, size = 0x4, offset = 0x4, fixed_abs, tag = 'smem constant byte address 0x4 - core index']
  #allocation1 [shape = 'u32[144,128]{1,0:T(1,128)}', space=vmem, size = 0x12000, scoped, tag = 'internal scratch']
  %s0 = inlined_call_operand.hbm [shape: f32[2,16,64], index: 0, kind: input, shape index: {}]
  %s1 = inlined_call_operand.vmem [shape: f32[3,64,48], index: 1, kind: input, shape index: {}]
  %s2 = inlined_call_operand.vmem [shape: f32[1,48], index: 2, kind: input, shape index: {}]
  %s3 = inlined_call_operand.hbm [shape: f32[3,48,96], index: 3, kind: input, shape index: {}]
  %s4 = inlined_call_operand.vmem [shape: f32[1,96], index: 4, kind: input, shape index: {}]
  %s5 = inlined_call_operand.vmem [shape: f32[3,96,96], index: 5, kind: input, shape index: {}]
  %s6 = inlined_call_operand.vmem [shape: f32[1,96], index: 6, kind: input, shape index: {}]
  %s7 = inlined_call_operand.vmem [shape: f32[1,96], index: 7, kind: input, shape index: {}]
  %s8 = inlined_call_operand.vmem [shape: f32[3,96,96], index: 8, kind: input, shape index: {}]
  %s9 = inlined_call_operand.vmem [shape: f32[1,96], index: 9, kind: input, shape index: {}]
  %s10 = inlined_call_operand.vmem [shape: f32[1,96], index: 10, kind: input, shape index: {}]
  %s11 = inlined_call_operand.vmem [shape: f32[3,96,96], index: 11, kind: input, shape index: {}]
  %s12 = inlined_call_operand.vmem [shape: f32[1,96], index: 12, kind: input, shape index: {}]
  %s13 = inlined_call_operand.vmem [shape: f32[1,96], index: 13, kind: input, shape index: {}]
  %s14 = inlined_call_operand.vmem [shape: f32[3,96,96], index: 14, kind: input, shape index: {}]
  %s15 = inlined_call_operand.vmem [shape: f32[1,96], index: 15, kind: input, shape index: {}]
  %s16 = inlined_call_operand.vmem [shape: f32[1,96], index: 16, kind: input, shape index: {}]
  %s17 = inlined_call_operand.vmem [shape: f32[3,96,64], index: 17, kind: input, shape index: {}]
  %s18 = inlined_call_operand.vmem [shape: f32[1,64], index: 18, kind: input, shape index: {}]
  %s19 = inlined_call_operand.vmem [shape: f32[1,64], index: 19, kind: input, shape index: {}]
  %s20 = inlined_call_operand.vmem [shape: f32[3,64,32], index: 20, kind: input, shape index: {}]
  %s21 = inlined_call_operand.vmem [shape: f32[1,32], index: 21, kind: input, shape index: {}]
  %s22 = inlined_call_operand.vmem [shape: f32[1,32], index: 22, kind: input, shape index: {}]
  %s23 = inlined_call_operand.vmem [shape: f32[32,21], index: 23, kind: input, shape index: {}]
  %s24 = inlined_call_operand.vmem [shape: f32[1,21], index: 24, kind: input, shape index: {}]
  %s25 = inlined_call_operand.hbm [shape: f32[2,1,21], index: 25, kind: output, shape index: {}]
  %s26 = sld [smem:[#allocation0]]
  $region141: #{tpu_custom_call.1} parent=0
    _
  %s28 = ssub.s32 1, %s26
  %s29 = scalar_select 0, %s28, %s26
  $region1: #{tpu_custom_call.1} parent=0
    #allocation2 [shape = 'u8[16384]{0}', space=vmem, size = 0x4000, scoped, tag = 'input window, operand 0']
    #allocation3 [shape = 's32[2]{0}', space=sflag, size = 0x8, scoped, tag = 'scoped memory for tpu_custom_call.1']
    #allocation4 [shape = 's32[2]{0}', space=sflag, size = 0x8, scoped, tag = 'scoped memory for tpu_custom_call.1']
    #allocation5 [shape = 'u8[73728]{0}', space=vmem, size = 0x12000, scoped, tag = 'input window, operand 3, single buffered']
    #allocation6 [shape = 's32[1]{0}', space=sflag, size = 0x4, scoped, tag = 'scoped memory for tpu_custom_call.1']
    #allocation7 [shape = 'u8[1024]{0}', space=vmem, size = 0x400, scoped, tag = 'output window, operand 0']
    %30 = vsyncpa [#allocation3], 0
    %s31 = scalar_lea.sflag [#allocation3], 1
    %32 = vsyncpa %s31, 0
    %33 = vsyncpa [#allocation6], 0
    %34 = vsyncpa [#allocation4], 0
    %s35 = scalar_lea.sflag [#allocation4], 1
    %36 = vsyncpa %s35, 0
    loop: start=0, step=1, limit=4
    $region2: #{tpu_custom_call.1} parent=1 // loop_pre_header
      _
    $region3: #{tpu_custom_call.1} parent=1 // loop_header
      %s38 = sphi 0, %s42
      %p39 = scmp.ge.s32.totalorder %s38, 4
      %s48 = sphi 0, %s50
      %s51 = sphi 0, %s48
      %s52 = sphi 0, %s51
      %s68 = sphi 0, %s52
      %s72 = sphi 0, %s72
      %s74 = sphi 0, %s72
      %s75 = sphi 0, %s74
      %s89 = sphi 0, %s75
      %s93 = sphi 0, %s93
      %s95 = sphi 0, %s93
      %s96 = sphi 0, %s95
      %s110 = sphi 0, %s96
      %s114 = sphi 0, %s114
      %s116 = sphi 0, %s114
      %s117 = sphi 0, %s116
      %s131 = sphi 0, %s117
      %s135 = sphi 0, %s135
      %s137 = sphi 0, %s135
      %s138 = sphi 0, %s137
      %s152 = sphi 0, %s138
      %s156 = sphi 0, %s156
      %s158 = sphi 0, %s156
      %s159 = sphi 0, %s158
      %s173 = sphi 0, %s159
      %s177 = sphi 0, %s177
      %s179 = sphi 0, %s177
      %s180 = sphi 0, %s179
      %s194 = sphi 0, %s180
      %s198 = sphi 0, %s198
      %s200 = sphi 0, %s198
      %s201 = sphi 0, %s200
      %s215 = sphi 0, %s201
      %s219 = sphi 0, %s219
      %s221 = sphi 0, %s219
      %s222 = sphi 0, %s221
      %s236 = sphi 0, %s222
      %s240 = sphi 0, %s240
      %s242 = sphi 0, %s240
      %s243 = sphi 0, %s242
      %s257 = sphi 0, %s243
      %s261 = sphi 0, %s261
      %s263 = sphi 0, %s261
      %s264 = sphi 0, %s263
      %s278 = sphi 0, %s264
      %s282 = sphi 0, %s282
      %s284 = sphi 0, %s282
      %s285 = sphi 0, %s284
      %s299 = sphi 0, %s285
      %s303 = sphi 0, %s303
      %s305 = sphi 0, %s303
      %s306 = sphi 0, %s305
      %s320 = sphi 0, %s306
      %s324 = sphi 0, %s324
      %s326 = sphi 0, %s324
      %s327 = sphi 0, %s326
      %s341 = sphi 0, %s327
      %s345 = sphi 0, %s345
      %s347 = sphi 0, %s345
      %s348 = sphi 0, %s347
      %s362 = sphi 0, %s348
      %s366 = sphi 0, %s366
      %s368 = sphi 0, %s366
      %s369 = sphi 0, %s368
      %s383 = sphi 0, %s369
      %s387 = sphi 0, %s387
      %s389 = sphi 0, %s387
      %s390 = sphi 0, %s389
      %s404 = sphi 0, %s390
      %s408 = sphi 0, %s408
      %s410 = sphi 0, %s408
      %s411 = sphi 0, %s410
      %s425 = sphi 0, %s411
      %s429 = sphi 0, %s429
      %s431 = sphi 0, %s429
      %s432 = sphi 0, %s431
      %s446 = sphi 0, %s432
      %s450 = sphi 0, %s450
      %s452 = sphi 0, %s450
      %s453 = sphi 0, %s452
      %s467 = sphi 0, %s453
      %s471 = sphi 0, %s471
      %s473 = sphi 0, %s471
      %s474 = sphi 0, %s473
      %s488 = sphi 0, %s474
      %s492 = sphi 0, %s492
      %s494 = sphi 0, %s492
      %s495 = sphi 0, %s494
      %s509 = sphi 0, %s495
      %s513 = sphi 0, %s513
      %s515 = sphi 0, %s513
      %s516 = sphi 0, %s515
      %s530 = sphi 0, %s516
      %s534 = sphi 0, %s534
      %s536 = sphi 0, %s534
      %s537 = sphi 0, %s536
      %s551 = sphi 0, %s537
      %s555 = sphi 0, %s555
      %s557 = sphi 0, %s555
      %s558 = sphi 0, %s557
      %s572 = sphi 0, %s558
      %s578 = sphi 0, %s580
      %s581 = sphi 0, %s578
      %s582 = sphi 0, %s581
      %s598 = sphi 0, %s582
    $region4: #{tpu_custom_call.1} parent=1 // loop_header_branch
      %41 = sbr.rel (%p39) target = $region8
    $region5: #{tpu_custom_call.1} parent=1 // loop_body
      %s43 = ssub.s32 %s38, 1
      %s44 = ssub.s32 %s38, 2
      %s45 = sadd.s32 %s38, 1
      %s46 = ssub.s32 %s38, %s45
      %p47 = scmp.eq.s32.totalorder %s46, 0
      %s49 = sadd.s32 %s48, 1
      %s50 = scalar_select %p47, %s48, %s49
      %p53 = pneg %p47
      %p54 = scmp.eq.s32.totalorder %s38, 1
      %p55 = por %p53, %p54
      %p56 = scmp.ne.s32.totalorder %s48, %s51
      %p57 = scmp.eq.s32.totalorder %s38, 0
      %p58 = por %p56, %p57
      %p59 = scmp.ne.s32.totalorder %s48, %s51
      %p60 = scmp.eq.s32.totalorder %s43, 1
      %p61 = por %p59, %p60
      %p62 = scmp.ne.s32.totalorder %s51, %s52
      %p63 = scmp.eq.s32.totalorder %s43, 0
      %p64 = por %p62, %p63
      %p65 = scmp.ne.s32.totalorder %s51, %s52
      %p66 = scmp.eq.s32.totalorder %s44, 1
      %p67 = por %p65, %p66
      %p69 = scmp.ne.s32.totalorder %s52, %s68
      %p70 = scmp.eq.s32.totalorder %s44, 0
      %p71 = por %p69, %p70
      %s73 = sadd.s32 %s72, 1
      %p76 = scmp.eq.s32.totalorder %s38, 1
      %p77 = scmp.ne.s32.totalorder %s72, %s74
      %p78 = scmp.eq.s32.totalorder %s38, 0
      %p79 = por %p77, %p78
      %p80 = scmp.ne.s32.totalorder %s72, %s74
      %p81 = scmp.eq.s32.totalorder %s43, 1
      %p82 = por %p80, %p81
      %p83 = scmp.ne.s32.totalorder %s74, %s75
      %p84 = scmp.eq.s32.totalorder %s43, 0
      %p85 = por %p83, %p84
      %p86 = scmp.ne.s32.totalorder %s74, %s75
      %p87 = scmp.eq.s32.totalorder %s44, 1
      %p88 = por %p86, %p87
      %p90 = scmp.ne.s32.totalorder %s75, %s89
      %p91 = scmp.eq.s32.totalorder %s44, 0
      %p92 = por %p90, %p91
      %s94 = sadd.s32 %s93, 1
      %p97 = scmp.eq.s32.totalorder %s38, 1
      %p98 = scmp.ne.s32.totalorder %s93, %s95
      %p99 = scmp.eq.s32.totalorder %s38, 0
      %p100 = por %p98, %p99
      %p101 = scmp.ne.s32.totalorder %s93, %s95
      %p102 = scmp.eq.s32.totalorder %s43, 1
      %p103 = por %p101, %p102
      %p104 = scmp.ne.s32.totalorder %s95, %s96
      %p105 = scmp.eq.s32.totalorder %s43, 0
      %p106 = por %p104, %p105
      %p107 = scmp.ne.s32.totalorder %s95, %s96
      %p108 = scmp.eq.s32.totalorder %s44, 1
      %p109 = por %p107, %p108
      %p111 = scmp.ne.s32.totalorder %s96, %s110
      %p112 = scmp.eq.s32.totalorder %s44, 0
      %p113 = por %p111, %p112
      %s115 = sadd.s32 %s114, 1
      %p118 = scmp.eq.s32.totalorder %s38, 1
      %p119 = scmp.ne.s32.totalorder %s114, %s116
      %p120 = scmp.eq.s32.totalorder %s38, 0
      %p121 = por %p119, %p120
      %p122 = scmp.ne.s32.totalorder %s114, %s116
      %p123 = scmp.eq.s32.totalorder %s43, 1
      %p124 = por %p122, %p123
      %p125 = scmp.ne.s32.totalorder %s116, %s117
      %p126 = scmp.eq.s32.totalorder %s43, 0
      %p127 = por %p125, %p126
      %p128 = scmp.ne.s32.totalorder %s116, %s117
      %p129 = scmp.eq.s32.totalorder %s44, 1
      %p130 = por %p128, %p129
      %p132 = scmp.ne.s32.totalorder %s117, %s131
      %p133 = scmp.eq.s32.totalorder %s44, 0
      %p134 = por %p132, %p133
      %s136 = sadd.s32 %s135, 1
      %p139 = scmp.eq.s32.totalorder %s38, 1
      %p140 = scmp.ne.s32.totalorder %s135, %s137
      %p141 = scmp.eq.s32.totalorder %s38, 0
      %p142 = por %p140, %p141
      %p143 = scmp.ne.s32.totalorder %s135, %s137
      %p144 = scmp.eq.s32.totalorder %s43, 1
      %p145 = por %p143, %p144
      %p146 = scmp.ne.s32.totalorder %s137, %s138
      %p147 = scmp.eq.s32.totalorder %s43, 0
      %p148 = por %p146, %p147
      %p149 = scmp.ne.s32.totalorder %s137, %s138
      %p150 = scmp.eq.s32.totalorder %s44, 1
      %p151 = por %p149, %p150
      %p153 = scmp.ne.s32.totalorder %s138, %s152
      %p154 = scmp.eq.s32.totalorder %s44, 0
      %p155 = por %p153, %p154
      %s157 = sadd.s32 %s156, 1
      %p160 = scmp.eq.s32.totalorder %s38, 1
      %p161 = scmp.ne.s32.totalorder %s156, %s158
      %p162 = scmp.eq.s32.totalorder %s38, 0
      %p163 = por %p161, %p162
      %p164 = scmp.ne.s32.totalorder %s156, %s158
      %p165 = scmp.eq.s32.totalorder %s43, 1
      %p166 = por %p164, %p165
      %p167 = scmp.ne.s32.totalorder %s158, %s159
      %p168 = scmp.eq.s32.totalorder %s43, 0
      %p169 = por %p167, %p168
      %p170 = scmp.ne.s32.totalorder %s158, %s159
      %p171 = scmp.eq.s32.totalorder %s44, 1
      %p172 = por %p170, %p171
      %p174 = scmp.ne.s32.totalorder %s159, %s173
      %p175 = scmp.eq.s32.totalorder %s44, 0
      %p176 = por %p174, %p175
      %s178 = sadd.s32 %s177, 1
      %p181 = scmp.eq.s32.totalorder %s38, 1
      %p182 = scmp.ne.s32.totalorder %s177, %s179
      %p183 = scmp.eq.s32.totalorder %s38, 0
      %p184 = por %p182, %p183
      %p185 = scmp.ne.s32.totalorder %s177, %s179
      %p186 = scmp.eq.s32.totalorder %s43, 1
      %p187 = por %p185, %p186
      %p188 = scmp.ne.s32.totalorder %s179, %s180
      %p189 = scmp.eq.s32.totalorder %s43, 0
      %p190 = por %p188, %p189
      %p191 = scmp.ne.s32.totalorder %s179, %s180
      %p192 = scmp.eq.s32.totalorder %s44, 1
      %p193 = por %p191, %p192
      %p195 = scmp.ne.s32.totalorder %s180, %s194
      %p196 = scmp.eq.s32.totalorder %s44, 0
      %p197 = por %p195, %p196
      %s199 = sadd.s32 %s198, 1
      %p202 = scmp.eq.s32.totalorder %s38, 1
      %p203 = scmp.ne.s32.totalorder %s198, %s200
      %p204 = scmp.eq.s32.totalorder %s38, 0
      %p205 = por %p203, %p204
      %p206 = scmp.ne.s32.totalorder %s198, %s200
      %p207 = scmp.eq.s32.totalorder %s43, 1
      %p208 = por %p206, %p207
      %p209 = scmp.ne.s32.totalorder %s200, %s201
      %p210 = scmp.eq.s32.totalorder %s43, 0
      %p211 = por %p209, %p210
      %p212 = scmp.ne.s32.totalorder %s200, %s201
      %p213 = scmp.eq.s32.totalorder %s44, 1
      %p214 = por %p212, %p213
      %p216 = scmp.ne.s32.totalorder %s201, %s215
      %p217 = scmp.eq.s32.totalorder %s44, 0
      %p218 = por %p216, %p217
      %s220 = sadd.s32 %s219, 1
      %p223 = scmp.eq.s32.totalorder %s38, 1
      %p224 = scmp.ne.s32.totalorder %s219, %s221
      %p225 = scmp.eq.s32.totalorder %s38, 0
      %p226 = por %p224, %p225
      %p227 = scmp.ne.s32.totalorder %s219, %s221
      %p228 = scmp.eq.s32.totalorder %s43, 1
      %p229 = por %p227, %p228
      %p230 = scmp.ne.s32.totalorder %s221, %s222
      %p231 = scmp.eq.s32.totalorder %s43, 0
      %p232 = por %p230, %p231
      %p233 = scmp.ne.s32.totalorder %s221, %s222
      %p234 = scmp.eq.s32.totalorder %s44, 1
      %p235 = por %p233, %p234
      %p237 = scmp.ne.s32.totalorder %s222, %s236
      %p238 = scmp.eq.s32.totalorder %s44, 0
      %p239 = por %p237, %p238
      %s241 = sadd.s32 %s240, 1
      %p244 = scmp.eq.s32.totalorder %s38, 1
      %p245 = scmp.ne.s32.totalorder %s240, %s242
      %p246 = scmp.eq.s32.totalorder %s38, 0
      %p247 = por %p245, %p246
      %p248 = scmp.ne.s32.totalorder %s240, %s242
      %p249 = scmp.eq.s32.totalorder %s43, 1
      %p250 = por %p248, %p249
      %p251 = scmp.ne.s32.totalorder %s242, %s243
      %p252 = scmp.eq.s32.totalorder %s43, 0
      %p253 = por %p251, %p252
      %p254 = scmp.ne.s32.totalorder %s242, %s243
      %p255 = scmp.eq.s32.totalorder %s44, 1
      %p256 = por %p254, %p255
      %p258 = scmp.ne.s32.totalorder %s243, %s257
      %p259 = scmp.eq.s32.totalorder %s44, 0
      %p260 = por %p258, %p259
      %s262 = sadd.s32 %s261, 1
      %p265 = scmp.eq.s32.totalorder %s38, 1
      %p266 = scmp.ne.s32.totalorder %s261, %s263
      %p267 = scmp.eq.s32.totalorder %s38, 0
      %p268 = por %p266, %p267
      %p269 = scmp.ne.s32.totalorder %s261, %s263
      %p270 = scmp.eq.s32.totalorder %s43, 1
      %p271 = por %p269, %p270
      %p272 = scmp.ne.s32.totalorder %s263, %s264
      %p273 = scmp.eq.s32.totalorder %s43, 0
      %p274 = por %p272, %p273
      %p275 = scmp.ne.s32.totalorder %s263, %s264
      %p276 = scmp.eq.s32.totalorder %s44, 1
      %p277 = por %p275, %p276
      %p279 = scmp.ne.s32.totalorder %s264, %s278
      %p280 = scmp.eq.s32.totalorder %s44, 0
      %p281 = por %p279, %p280
      %s283 = sadd.s32 %s282, 1
      %p286 = scmp.eq.s32.totalorder %s38, 1
      %p287 = scmp.ne.s32.totalorder %s282, %s284
      %p288 = scmp.eq.s32.totalorder %s38, 0
      %p289 = por %p287, %p288
      %p290 = scmp.ne.s32.totalorder %s282, %s284
      %p291 = scmp.eq.s32.totalorder %s43, 1
      %p292 = por %p290, %p291
      %p293 = scmp.ne.s32.totalorder %s284, %s285
      %p294 = scmp.eq.s32.totalorder %s43, 0
      %p295 = por %p293, %p294
      %p296 = scmp.ne.s32.totalorder %s284, %s285
      %p297 = scmp.eq.s32.totalorder %s44, 1
      %p298 = por %p296, %p297
      %p300 = scmp.ne.s32.totalorder %s285, %s299
      %p301 = scmp.eq.s32.totalorder %s44, 0
      %p302 = por %p300, %p301
      %s304 = sadd.s32 %s303, 1
      %p307 = scmp.eq.s32.totalorder %s38, 1
      %p308 = scmp.ne.s32.totalorder %s303, %s305
      %p309 = scmp.eq.s32.totalorder %s38, 0
      %p310 = por %p308, %p309
      %p311 = scmp.ne.s32.totalorder %s303, %s305
      %p312 = scmp.eq.s32.totalorder %s43, 1
      %p313 = por %p311, %p312
      %p314 = scmp.ne.s32.totalorder %s305, %s306
      %p315 = scmp.eq.s32.totalorder %s43, 0
      %p316 = por %p314, %p315
      %p317 = scmp.ne.s32.totalorder %s305, %s306
      %p318 = scmp.eq.s32.totalorder %s44, 1
      %p319 = por %p317, %p318
      %p321 = scmp.ne.s32.totalorder %s306, %s320
      %p322 = scmp.eq.s32.totalorder %s44, 0
      %p323 = por %p321, %p322
      %s325 = sadd.s32 %s324, 1
      %p328 = scmp.eq.s32.totalorder %s38, 1
      %p329 = scmp.ne.s32.totalorder %s324, %s326
      %p330 = scmp.eq.s32.totalorder %s38, 0
      %p331 = por %p329, %p330
      %p332 = scmp.ne.s32.totalorder %s324, %s326
      %p333 = scmp.eq.s32.totalorder %s43, 1
      %p334 = por %p332, %p333
      %p335 = scmp.ne.s32.totalorder %s326, %s327
      %p336 = scmp.eq.s32.totalorder %s43, 0
      %p337 = por %p335, %p336
      %p338 = scmp.ne.s32.totalorder %s326, %s327
      %p339 = scmp.eq.s32.totalorder %s44, 1
      %p340 = por %p338, %p339
      %p342 = scmp.ne.s32.totalorder %s327, %s341
      %p343 = scmp.eq.s32.totalorder %s44, 0
      %p344 = por %p342, %p343
      %s346 = sadd.s32 %s345, 1
      %p349 = scmp.eq.s32.totalorder %s38, 1
      %p350 = scmp.ne.s32.totalorder %s345, %s347
      %p351 = scmp.eq.s32.totalorder %s38, 0
      %p352 = por %p350, %p351
      %p353 = scmp.ne.s32.totalorder %s345, %s347
      %p354 = scmp.eq.s32.totalorder %s43, 1
      %p355 = por %p353, %p354
      %p356 = scmp.ne.s32.totalorder %s347, %s348
      %p357 = scmp.eq.s32.totalorder %s43, 0
      %p358 = por %p356, %p357
      %p359 = scmp.ne.s32.totalorder %s347, %s348
      %p360 = scmp.eq.s32.totalorder %s44, 1
      %p361 = por %p359, %p360
      %p363 = scmp.ne.s32.totalorder %s348, %s362
      %p364 = scmp.eq.s32.totalorder %s44, 0
      %p365 = por %p363, %p364
      %s367 = sadd.s32 %s366, 1
      %p370 = scmp.eq.s32.totalorder %s38, 1
      %p371 = scmp.ne.s32.totalorder %s366, %s368
      %p372 = scmp.eq.s32.totalorder %s38, 0
      %p373 = por %p371, %p372
      %p374 = scmp.ne.s32.totalorder %s366, %s368
      %p375 = scmp.eq.s32.totalorder %s43, 1
      %p376 = por %p374, %p375
      %p377 = scmp.ne.s32.totalorder %s368, %s369
      %p378 = scmp.eq.s32.totalorder %s43, 0
      %p379 = por %p377, %p378
      %p380 = scmp.ne.s32.totalorder %s368, %s369
      %p381 = scmp.eq.s32.totalorder %s44, 1
      %p382 = por %p380, %p381
      %p384 = scmp.ne.s32.totalorder %s369, %s383
      %p385 = scmp.eq.s32.totalorder %s44, 0
      %p386 = por %p384, %p385
      %s388 = sadd.s32 %s387, 1
      %p391 = scmp.eq.s32.totalorder %s38, 1
      %p392 = scmp.ne.s32.totalorder %s387, %s389
      %p393 = scmp.eq.s32.totalorder %s38, 0
      %p394 = por %p392, %p393
      %p395 = scmp.ne.s32.totalorder %s387, %s389
      %p396 = scmp.eq.s32.totalorder %s43, 1
      %p397 = por %p395, %p396
      %p398 = scmp.ne.s32.totalorder %s389, %s390
      %p399 = scmp.eq.s32.totalorder %s43, 0
      %p400 = por %p398, %p399
      %p401 = scmp.ne.s32.totalorder %s389, %s390
      %p402 = scmp.eq.s32.totalorder %s44, 1
      %p403 = por %p401, %p402
      %p405 = scmp.ne.s32.totalorder %s390, %s404
      %p406 = scmp.eq.s32.totalorder %s44, 0
      %p407 = por %p405, %p406
      %s409 = sadd.s32 %s408, 1
      %p412 = scmp.eq.s32.totalorder %s38, 1
      %p413 = scmp.ne.s32.totalorder %s408, %s410
      %p414 = scmp.eq.s32.totalorder %s38, 0
      %p415 = por %p413, %p414
      %p416 = scmp.ne.s32.totalorder %s408, %s410
      %p417 = scmp.eq.s32.totalorder %s43, 1
      %p418 = por %p416, %p417
      %p419 = scmp.ne.s32.totalorder %s410, %s411
      %p420 = scmp.eq.s32.totalorder %s43, 0
      %p421 = por %p419, %p420
      %p422 = scmp.ne.s32.totalorder %s410, %s411
      %p423 = scmp.eq.s32.totalorder %s44, 1
      %p424 = por %p422, %p423
      %p426 = scmp.ne.s32.totalorder %s411, %s425
      %p427 = scmp.eq.s32.totalorder %s44, 0
      %p428 = por %p426, %p427
      %s430 = sadd.s32 %s429, 1
      %p433 = scmp.eq.s32.totalorder %s38, 1
      %p434 = scmp.ne.s32.totalorder %s429, %s431
      %p435 = scmp.eq.s32.totalorder %s38, 0
      %p436 = por %p434, %p435
      %p437 = scmp.ne.s32.totalorder %s429, %s431
      %p438 = scmp.eq.s32.totalorder %s43, 1
      %p439 = por %p437, %p438
      %p440 = scmp.ne.s32.totalorder %s431, %s432
      %p441 = scmp.eq.s32.totalorder %s43, 0
      %p442 = por %p440, %p441
      %p443 = scmp.ne.s32.totalorder %s431, %s432
      %p444 = scmp.eq.s32.totalorder %s44, 1
      %p445 = por %p443, %p444
      %p447 = scmp.ne.s32.totalorder %s432, %s446
      %p448 = scmp.eq.s32.totalorder %s44, 0
      %p449 = por %p447, %p448
      %s451 = sadd.s32 %s450, 1
      %p454 = scmp.eq.s32.totalorder %s38, 1
      %p455 = scmp.ne.s32.totalorder %s450, %s452
      %p456 = scmp.eq.s32.totalorder %s38, 0
      %p457 = por %p455, %p456
      %p458 = scmp.ne.s32.totalorder %s450, %s452
      %p459 = scmp.eq.s32.totalorder %s43, 1
      %p460 = por %p458, %p459
      %p461 = scmp.ne.s32.totalorder %s452, %s453
      %p462 = scmp.eq.s32.totalorder %s43, 0
      %p463 = por %p461, %p462
      %p464 = scmp.ne.s32.totalorder %s452, %s453
      %p465 = scmp.eq.s32.totalorder %s44, 1
      %p466 = por %p464, %p465
      %p468 = scmp.ne.s32.totalorder %s453, %s467
      %p469 = scmp.eq.s32.totalorder %s44, 0
      %p470 = por %p468, %p469
      %s472 = sadd.s32 %s471, 1
      %p475 = scmp.eq.s32.totalorder %s38, 1
      %p476 = scmp.ne.s32.totalorder %s471, %s473
      %p477 = scmp.eq.s32.totalorder %s38, 0
      %p478 = por %p476, %p477
      %p479 = scmp.ne.s32.totalorder %s471, %s473
      %p480 = scmp.eq.s32.totalorder %s43, 1
      %p481 = por %p479, %p480
      %p482 = scmp.ne.s32.totalorder %s473, %s474
      %p483 = scmp.eq.s32.totalorder %s43, 0
      %p484 = por %p482, %p483
      %p485 = scmp.ne.s32.totalorder %s473, %s474
      %p486 = scmp.eq.s32.totalorder %s44, 1
      %p487 = por %p485, %p486
      %p489 = scmp.ne.s32.totalorder %s474, %s488
      %p490 = scmp.eq.s32.totalorder %s44, 0
      %p491 = por %p489, %p490
      %s493 = sadd.s32 %s492, 1
      %p496 = scmp.eq.s32.totalorder %s38, 1
      %p497 = scmp.ne.s32.totalorder %s492, %s494
      %p498 = scmp.eq.s32.totalorder %s38, 0
      %p499 = por %p497, %p498
      %p500 = scmp.ne.s32.totalorder %s492, %s494
      %p501 = scmp.eq.s32.totalorder %s43, 1
      %p502 = por %p500, %p501
      %p503 = scmp.ne.s32.totalorder %s494, %s495
      %p504 = scmp.eq.s32.totalorder %s43, 0
      %p505 = por %p503, %p504
      %p506 = scmp.ne.s32.totalorder %s494, %s495
      %p507 = scmp.eq.s32.totalorder %s44, 1
      %p508 = por %p506, %p507
      %p510 = scmp.ne.s32.totalorder %s495, %s509
      %p511 = scmp.eq.s32.totalorder %s44, 0
      %p512 = por %p510, %p511
      %s514 = sadd.s32 %s513, 1
      %p517 = scmp.eq.s32.totalorder %s38, 1
      %p518 = scmp.ne.s32.totalorder %s513, %s515
      %p519 = scmp.eq.s32.totalorder %s38, 0
      %p520 = por %p518, %p519
      %p521 = scmp.ne.s32.totalorder %s513, %s515
      %p522 = scmp.eq.s32.totalorder %s43, 1
      %p523 = por %p521, %p522
      %p524 = scmp.ne.s32.totalorder %s515, %s516
      %p525 = scmp.eq.s32.totalorder %s43, 0
      %p526 = por %p524, %p525
      %p527 = scmp.ne.s32.totalorder %s515, %s516
      %p528 = scmp.eq.s32.totalorder %s44, 1
      %p529 = por %p527, %p528
      %p531 = scmp.ne.s32.totalorder %s516, %s530
      %p532 = scmp.eq.s32.totalorder %s44, 0
      %p533 = por %p531, %p532
      %s535 = sadd.s32 %s534, 1
      %p538 = scmp.eq.s32.totalorder %s38, 1
      %p539 = scmp.ne.s32.totalorder %s534, %s536
      %p540 = scmp.eq.s32.totalorder %s38, 0
      %p541 = por %p539, %p540
      %p542 = scmp.ne.s32.totalorder %s534, %s536
      %p543 = scmp.eq.s32.totalorder %s43, 1
      %p544 = por %p542, %p543
      %p545 = scmp.ne.s32.totalorder %s536, %s537
      %p546 = scmp.eq.s32.totalorder %s43, 0
      %p547 = por %p545, %p546
      %p548 = scmp.ne.s32.totalorder %s536, %s537
      %p549 = scmp.eq.s32.totalorder %s44, 1
      %p550 = por %p548, %p549
      %p552 = scmp.ne.s32.totalorder %s537, %s551
      %p553 = scmp.eq.s32.totalorder %s44, 0
      %p554 = por %p552, %p553
      %s556 = sadd.s32 %s555, 1
      %p559 = scmp.eq.s32.totalorder %s38, 1
      %p560 = scmp.ne.s32.totalorder %s555, %s557
      %p561 = scmp.eq.s32.totalorder %s38, 0
      %p562 = por %p560, %p561
      %p563 = scmp.ne.s32.totalorder %s555, %s557
      %p564 = scmp.eq.s32.totalorder %s43, 1
      %p565 = por %p563, %p564
      %p566 = scmp.ne.s32.totalorder %s557, %s558
      %p567 = scmp.eq.s32.totalorder %s43, 0
      %p568 = por %p566, %p567
      %p569 = scmp.ne.s32.totalorder %s557, %s558
      %p570 = scmp.eq.s32.totalorder %s44, 1
      %p571 = por %p569, %p570
      %p573 = scmp.ne.s32.totalorder %s558, %s572
      %p574 = scmp.eq.s32.totalorder %s44, 0
      %p575 = por %p573, %p574
      %s576 = ssub.s32 %s38, %s45
      %p577 = scmp.eq.s32.totalorder %s576, 0
      %s579 = sadd.s32 %s578, 1
      %s580 = scalar_select %p577, %s578, %s579
      %p583 = pneg %p577
      %p584 = scmp.eq.s32.totalorder %s38, 1
      %p585 = por %p583, %p584
      %p586 = scmp.ne.s32.totalorder %s578, %s581
      %p587 = scmp.eq.s32.totalorder %s38, 0
      %p588 = por %p586, %p587
      %p589 = scmp.ne.s32.totalorder %s578, %s581
      %p590 = scmp.eq.s32.totalorder %s43, 1
      %p591 = por %p589, %p590
      %p592 = scmp.ne.s32.totalorder %s581, %s582
      %p593 = scmp.eq.s32.totalorder %s43, 0
      %p594 = por %p592, %p593
      %p595 = scmp.ne.s32.totalorder %s581, %s582
      %p596 = scmp.eq.s32.totalorder %s44, 1
      %p597 = por %p595, %p596
      %p599 = scmp.ne.s32.totalorder %s582, %s598
      %p600 = scmp.eq.s32.totalorder %s44, 0
      %p601 = por %p599, %p600
      %p602 = scmp.le.s32.totalorder 1, %s38
      %p603 = scmp.lt.s32.totalorder %s38, 3
      %p604 = pnand %p602, %p603
      %p605 = pneg %p604
      // Predicated region
      $region9: #{tpu_custom_call.1} parent=5 // pred_check
        _
      $region10: #{tpu_custom_call.1} parent=5 // pred_check_branch
        %607 = sbr.rel (%p604) target = $region12
      $region11: #{tpu_custom_call.1} parent=5 // pred_region
        %s608 = ssub.s32 %s38, 1
        // Predicated region
        $region13: #{tpu_custom_call.1} parent=11 // pred_check
          %p609 = pneg %p85
        $region14: #{tpu_custom_call.1} parent=11 // pred_check_branch
          %611 = sbr.rel (%p609) target = $region16
        $region15: #{tpu_custom_call.1} parent=11 // pred_region
          _
        $region16: #{tpu_custom_call.1} parent=11 // pred_fallthru
          _
        // Predicated region
        $region17: #{tpu_custom_call.1} parent=11 // pred_check
          %p612 = pneg %p106
        $region18: #{tpu_custom_call.1} parent=11 // pred_check_branch
          %614 = sbr.rel (%p612) target = $region20
        $region19: #{tpu_custom_call.1} parent=11 // pred_region
          _
        $region20: #{tpu_custom_call.1} parent=11 // pred_fallthru
          _
        // Predicated region
        $region21: #{tpu_custom_call.1} parent=11 // pred_check
          %p615 = pneg %p127
        $region22: #{tpu_custom_call.1} parent=11 // pred_check_branch
          %617 = sbr.rel (%p615) target = $region24
        $region23: #{tpu_custom_call.1} parent=11 // pred_region
          %s619 = ssub.s32 2304, 2304
          %620 = vsyncadd [#allocation6], %s619
          %s621 = sshll.u32 [#allocation5], 4
          %s622 = int_to_ptr.vmem [resolvable:$true] %s621
          %627 = dma.hbm_to_vmem [thread:$0]  %s3, 2304, %s622, [#allocation6], 128, 128, 8
        $region24: #{tpu_custom_call.1} parent=11 // pred_fallthru
          _
        // Predicated region
        $region25: #{tpu_custom_call.1} parent=11 // pred_check
          %p628 = pneg %p148
        $region26: #{tpu_custom_call.1} parent=11 // pred_check_branch
          %630 = sbr.rel (%p628) target = $region28
        $region27: #{tpu_custom_call.1} parent=11 // pred_region
          _
        $region28: #{tpu_custom_call.1} parent=11 // pred_fallthru
          _
        // Predicated region
        $region29: #{tpu_custom_call.1} parent=11 // pred_check
          %p631 = pneg %p169
        $region30: #{tpu_custom_call.1} parent=11 // pred_check_branch
          %633 = sbr.rel (%p631) target = $region32
        $region31: #{tpu_custom_call.1} parent=11 // pred_region
          _
        $region32: #{tpu_custom_call.1} parent=11 // pred_fallthru
          _
        // Predicated region
        $region33: #{tpu_custom_call.1} parent=11 // pred_check
          %p634 = pneg %p190
        $region34: #{tpu_custom_call.1} parent=11 // pred_check_branch
          %636 = sbr.rel (%p634) target = $region36
        $region35: #{tpu_custom_call.1} parent=11 // pred_region
          _
        $region36: #{tpu_custom_call.1} parent=11 // pred_fallthru
          _
        // Predicated region
        $region37: #{tpu_custom_call.1} parent=11 // pred_check
          %p637 = pneg %p211
        $region38: #{tpu_custom_call.1} parent=11 // pred_check_branch
          %639 = sbr.rel (%p637) target = $region40
        $region39: #{tpu_custom_call.1} parent=11 // pred_region
          _
        $region40: #{tpu_custom_call.1} parent=11 // pred_fallthru
          _
        // Predicated region
        $region41: #{tpu_custom_call.1} parent=11 // pred_check
          %p640 = pneg %p232
        $region42: #{tpu_custom_call.1} parent=11 // pred_check_branch
          %642 = sbr.rel (%p640) target = $region44
        $region43: #{tpu_custom_call.1} parent=11 // pred_region
          _
        $region44: #{tpu_custom_call.1} parent=11 // pred_fallthru
          _
        // Predicated region
        $region45: #{tpu_custom_call.1} parent=11 // pred_check
          %p643 = pneg %p253
        $region46: #{tpu_custom_call.1} parent=11 // pred_check_branch
          %645 = sbr.rel (%p643) target = $region48
        $region47: #{tpu_custom_call.1} parent=11 // pred_region
          _
        $region48: #{tpu_custom_call.1} parent=11 // pred_fallthru
          _
        // Predicated region
        $region49: #{tpu_custom_call.1} parent=11 // pred_check
          %p646 = pneg %p274
        $region50: #{tpu_custom_call.1} parent=11 // pred_check_branch
          %648 = sbr.rel (%p646) target = $region52
        $region51: #{tpu_custom_call.1} parent=11 // pred_region
          _
        $region52: #{tpu_custom_call.1} parent=11 // pred_fallthru
          _
        // Predicated region
        $region53: #{tpu_custom_call.1} parent=11 // pred_check
          %p649 = pneg %p295
        $region54: #{tpu_custom_call.1} parent=11 // pred_check_branch
          %651 = sbr.rel (%p649) target = $region56
        $region55: #{tpu_custom_call.1} parent=11 // pred_region
          _
        $region56: #{tpu_custom_call.1} parent=11 // pred_fallthru
          _
        // Predicated region
        $region57: #{tpu_custom_call.1} parent=11 // pred_check
          %p652 = pneg %p316
        $region58: #{tpu_custom_call.1} parent=11 // pred_check_branch
          %654 = sbr.rel (%p652) target = $region60
        $region59: #{tpu_custom_call.1} parent=11 // pred_region
          _
        $region60: #{tpu_custom_call.1} parent=11 // pred_fallthru
          _
        // Predicated region
        $region61: #{tpu_custom_call.1} parent=11 // pred_check
          %p655 = pneg %p337
        $region62: #{tpu_custom_call.1} parent=11 // pred_check_branch
          %657 = sbr.rel (%p655) target = $region64
        $region63: #{tpu_custom_call.1} parent=11 // pred_region
          _
        $region64: #{tpu_custom_call.1} parent=11 // pred_fallthru
          _
        // Predicated region
        $region65: #{tpu_custom_call.1} parent=11 // pred_check
          %p658 = pneg %p358
        $region66: #{tpu_custom_call.1} parent=11 // pred_check_branch
          %660 = sbr.rel (%p658) target = $region68
        $region67: #{tpu_custom_call.1} parent=11 // pred_region
          _
        $region68: #{tpu_custom_call.1} parent=11 // pred_fallthru
          _
        // Predicated region
        $region69: #{tpu_custom_call.1} parent=11 // pred_check
          %p661 = pneg %p379
        $region70: #{tpu_custom_call.1} parent=11 // pred_check_branch
          %663 = sbr.rel (%p661) target = $region72
        $region71: #{tpu_custom_call.1} parent=11 // pred_region
          _
        $region72: #{tpu_custom_call.1} parent=11 // pred_fallthru
          _
        // Predicated region
        $region73: #{tpu_custom_call.1} parent=11 // pred_check
          %p664 = pneg %p400
        $region74: #{tpu_custom_call.1} parent=11 // pred_check_branch
          %666 = sbr.rel (%p664) target = $region76
        $region75: #{tpu_custom_call.1} parent=11 // pred_region
          _
        $region76: #{tpu_custom_call.1} parent=11 // pred_fallthru
          _
        // Predicated region
        $region77: #{tpu_custom_call.1} parent=11 // pred_check
          %p667 = pneg %p421
        $region78: #{tpu_custom_call.1} parent=11 // pred_check_branch
          %669 = sbr.rel (%p667) target = $region80
        $region79: #{tpu_custom_call.1} parent=11 // pred_region
          _
        $region80: #{tpu_custom_call.1} parent=11 // pred_fallthru
          _
        // Predicated region
        $region81: #{tpu_custom_call.1} parent=11 // pred_check
          %p670 = pneg %p442
        $region82: #{tpu_custom_call.1} parent=11 // pred_check_branch
          %672 = sbr.rel (%p670) target = $region84
        $region83: #{tpu_custom_call.1} parent=11 // pred_region
          _
        $region84: #{tpu_custom_call.1} parent=11 // pred_fallthru
          _
        // Predicated region
        $region85: #{tpu_custom_call.1} parent=11 // pred_check
          %p673 = pneg %p463
        $region86: #{tpu_custom_call.1} parent=11 // pred_check_branch
          %675 = sbr.rel (%p673) target = $region88
        $region87: #{tpu_custom_call.1} parent=11 // pred_region
          _
        $region88: #{tpu_custom_call.1} parent=11 // pred_fallthru
          _
        // Predicated region
        $region89: #{tpu_custom_call.1} parent=11 // pred_check
          %p676 = pneg %p484
        $region90: #{tpu_custom_call.1} parent=11 // pred_check_branch
          %678 = sbr.rel (%p676) target = $region92
        $region91: #{tpu_custom_call.1} parent=11 // pred_region
          _
        $region92: #{tpu_custom_call.1} parent=11 // pred_fallthru
          _
        // Predicated region
        $region93: #{tpu_custom_call.1} parent=11 // pred_check
          %p679 = pneg %p505
        $region94: #{tpu_custom_call.1} parent=11 // pred_check_branch
          %681 = sbr.rel (%p679) target = $region96
        $region95: #{tpu_custom_call.1} parent=11 // pred_region
          _
        $region96: #{tpu_custom_call.1} parent=11 // pred_fallthru
          _
        // Predicated region
        $region97: #{tpu_custom_call.1} parent=11 // pred_check
          %p682 = pneg %p526
        $region98: #{tpu_custom_call.1} parent=11 // pred_check_branch
          %684 = sbr.rel (%p682) target = $region100
        $region99: #{tpu_custom_call.1} parent=11 // pred_region
          _
        $region100: #{tpu_custom_call.1} parent=11 // pred_fallthru
          _
        // Predicated region
        $region101: #{tpu_custom_call.1} parent=11 // pred_check
          %p685 = pneg %p547
        $region102: #{tpu_custom_call.1} parent=11 // pred_check_branch
          %687 = sbr.rel (%p685) target = $region104
        $region103: #{tpu_custom_call.1} parent=11 // pred_region
          _
        $region104: #{tpu_custom_call.1} parent=11 // pred_fallthru
          _
        // Predicated region
        $region105: #{tpu_custom_call.1} parent=11 // pred_check
          %p688 = pneg %p568
        $region106: #{tpu_custom_call.1} parent=11 // pred_check_branch
          %690 = sbr.rel (%p688) target = $region108
        $region107: #{tpu_custom_call.1} parent=11 // pred_region
          _
        $region108: #{tpu_custom_call.1} parent=11 // pred_fallthru
          _
      $region12: #{tpu_custom_call.1} parent=5 // pred_fallthru
        _
      %p691 = scmp.lt.s32.totalorder %s38, 2
      // Predicated region
      $region109: #{tpu_custom_call.1} parent=5 // pred_check
        %p692 = pneg %p691
      $region110: #{tpu_custom_call.1} parent=5 // pred_check_branch
        %694 = sbr.rel (%p692) target = $region112
      $region111: #{tpu_custom_call.1} parent=5 // pred_region
        // Predicated region
        $region113: #{tpu_custom_call.1} parent=111 // pred_check
          %p695 = pneg %p58
        $region114: #{tpu_custom_call.1} parent=111 // pred_check_branch
          %697 = sbr.rel (%p695) target = $region116
        $region115: #{tpu_custom_call.1} parent=111 // pred_region
          %s698 = sand.u32 %s48, 1
          %s699 = scalar_lea.sflag [#allocation3], %s698
          %s700 = sand.u32 %s48, 1
          %s701 = smul.addr %s700, 16
          %s702 = scalar_lea.vmem [#allocation2], %s701
          %s704 = ssub.s32 256, 256
          %705 = vsyncadd %s699, %s704
          %s706 = smul.addr %s38, 2
          %s707 = smul.addr %s706, 128
          %s708 = scalar_lea.hbm %s0, %s707
          %s709 = sshll.u32 %s702, 4
          %s710 = int_to_ptr.vmem [resolvable:$true] %s709
          %715 = dma.hbm_to_vmem [thread:$0]  %s708, 256, %s710, %s699, 128, 128, 8
        $region116: #{tpu_custom_call.1} parent=111 // pred_fallthru
          _
      $region112: #{tpu_custom_call.1} parent=5 // pred_fallthru
        _
      %p716 = scmp.le.s32.totalorder 1, %s38
      %p717 = scmp.lt.s32.totalorder %s38, 3
      %p718 = pnand %p716, %p717
      %p719 = pneg %p718
      // Predicated region
      $region117: #{tpu_custom_call.1} parent=5 // pred_check
        _
      $region118: #{tpu_custom_call.1} parent=5 // pred_check_branch
        %721 = sbr.rel (%p718) target = $region120
      $region119: #{tpu_custom_call.1} parent=5 // pred_region
        %s722 = ssub.s32 %s38, 1
        %s723 = sand.u32 %s51, 1
        %s724 = scalar_lea.sflag [#allocation3], %s723
        %s725 = sand.u32 %s51, 1
        %s726 = smul.addr %s725, 16
        %s727 = scalar_lea.vmem [#allocation2], %s726
        // Predicated region
        $region121: #{tpu_custom_call.1} parent=119 // pred_check
          %p728 = pneg %p64
        $region122: #{tpu_custom_call.1} parent=119 // pred_check_branch
          %730 = sbr.rel (%p728) target = $region124
        $region123: #{tpu_custom_call.1} parent=119 // pred_region
          %731 = dma.done %s724, 256
        $region124: #{tpu_custom_call.1} parent=119 // pred_fallthru
          _
        // Predicated region
        $region125: #{tpu_custom_call.1} parent=119 // pred_check
          %p732 = pneg %p127
        $region126: #{tpu_custom_call.1} parent=119 // pred_check_branch
          %734 = sbr.rel (%p732) target = $region128
        $region127: #{tpu_custom_call.1} parent=119 // pred_region
          %735 = dma.done [#allocation6], 2304
        $region128: #{tpu_custom_call.1} parent=119 // pred_fallthru
          _
        %s736 = sand.u32 %s51, 1
        %s737 = scalar_lea.sflag [#allocation3], %s736
        %s738 = sand.u32 %s51, 1
        %s739 = smul.addr %s738, 16
        %s740 = scalar_lea.vmem [#allocation2], %s739
        %p741 = pneg %p64
        %p742 = pneg %p61
        %p743 = pneg %p85
        %p744 = pneg %p82
        %p745 = pneg %p106
        %p746 = pneg %p103
        %p747 = pneg %p127
        %p748 = pneg %p124
        %p749 = pneg %p148
        %p750 = pneg %p145
        %p751 = pneg %p169
        %p752 = pneg %p166
        %p753 = pneg %p190
        %p754 = pneg %p187
        %p755 = pneg %p211
        %p756 = pneg %p208
        %p757 = pneg %p232
        %p758 = pneg %p229
        %p759 = pneg %p253
        %p760 = pneg %p250
        %p761 = pneg %p274
        %p762 = pneg %p271
        %p763 = pneg %p295
        %p764 = pneg %p292
        %p765 = pneg %p316
        %p766 = pneg %p313
        %p767 = pneg %p337
        %p768 = pneg %p334
        %p769 = pneg %p358
        %p770 = pneg %p355
        %p771 = pneg %p379
        %p772 = pneg %p376
        %p773 = pneg %p400
        %p774 = pneg %p397
        %p775 = pneg %p421
        %p776 = pneg %p418
        %p777 = pneg %p442
        %p778 = pneg %p439
        %p779 = pneg %p463
        %p780 = pneg %p460
        %p781 = pneg %p484
        %p782 = pneg %p481
        %p783 = pneg %p505
        %p784 = pneg %p502
        %p785 = pneg %p526
        %p786 = pneg %p523
        %p787 = pneg %p547
        %p788 = pneg %p544
        %p789 = pneg %p568
        %p790 = pneg %p565
        %p791 = pneg %p594
        %p792 = pneg %p591
        %s793 = sand.u32 %s581, 1
        %s794 = scalar_lea.sflag [#allocation4], %s793
        %s795 = sand.u32 %s581, 1
        %s796 = scalar_lea.vmem [#allocation7], %s795
        %v797 = vld [vmem:[%s727] sm:$0xff]
        %v798 = vld [vmem:[%s727 + $0x8] sm:$0xff]
        %v799 = vld [vmem:[%s2] sm:$0x1]
        %vm802 = vcmask 1040384
        %v803 = vrot.slane %v797, 7
        %v804 = vrot.slane %v798, 7
        %v805 = vsel %vm802, %v803, %v804
        %v807 = vsel %vm802, 0.0, %v803
        %v808 = vld [vmem:[%s1] sm:$0xff]
        %v809 = vld [vmem:[%s1 + $0x8] sm:$0xff]
        %v810 = vld [vmem:[%s1 + $0x10] sm:$0xff]
        %v811 = vld [vmem:[%s1 + $0x18] sm:$0xff]
        %v812 = vld [vmem:[%s1 + $0x20] sm:$0xff]
        %v813 = vld [vmem:[%s1 + $0x28] sm:$0xff]
        %v814 = vld [vmem:[%s1 + $0x30] sm:$0xff]
        %v815 = vld [vmem:[%s1 + $0x38] sm:$0xff]
        %s816 = scalar_lea.vmem %s1, 64
        %v817 = vld [vmem:[%s816] sm:$0xff]
        %v818 = vld [vmem:[%s816 + $0x8] sm:$0xff]
        %v819 = vld [vmem:[%s816 + $0x10] sm:$0xff]
        %v820 = vld [vmem:[%s816 + $0x18] sm:$0xff]
        %v821 = vld [vmem:[%s816 + $0x20] sm:$0xff]
        %v822 = vld [vmem:[%s816 + $0x28] sm:$0xff]
        %v823 = vld [vmem:[%s816 + $0x30] sm:$0xff]
        %v824 = vld [vmem:[%s816 + $0x38] sm:$0xff]
        %vm825 = vcmask 523264
        %v826 = vsel %vm825, %v797, 0
        %v828 = vsel %vm825, %v798, 0
        %830 = vmatprep.subr.mxu0 0.0
        %831 = vmatpush1.msra.mxu0 %v817
        %832 = vmatprep.subr.mxu0 0.0
        %833 = vmatpush1.msra.mxu0 %v818
        %834 = vmatprep.subr.mxu0 0.0
        %835 = vmatpush1.msra.mxu0 %v819
        %836 = vmatprep.subr.mxu0 0.0
        %837 = vmatpush1.msra.mxu0 %v820
        %838 = vmatprep.subr.mxu0 0.0
        %839 = vmatpush1.msra.mxu0 %v821
        %840 = vmatprep.subr.mxu0 0.0
        %841 = vmatpush1.msra.mxu0 %v822
        %842 = vmatprep.subr.mxu0 0.0
        %843 = vmatpush1.msra.mxu0 %v823
        %844 = vmatprep.subr.mxu0 0.0
        %845 = vmatpush1.msra.mxu0 %v824
        %846 = vmatprep.subr.mxu0 0.0
        %847 = vmatpush1.msra.mxu0 0.0
        %848 = vmatprep.subr.mxu0 0.0
        %849 = vmatpush1.msra.mxu0 0.0
        %850 = vmatprep.subr.mxu0 0.0
        %851 = vmatpush1.msra.mxu0 0.0
        %852 = vmatprep.subr.mxu0 0.0
        %853 = vmatpush1.msra.mxu0 0.0
        %854 = vmatprep.subr.mxu0 0.0
        %855 = vmatpush1.msra.mxu0 0.0
        %856 = vmatprep.subr.mxu0 0.0
        %857 = vmatpush1.msra.mxu0 0.0
        %858 = vmatprep.subr.mxu0 0.0
        %859 = vmatpush1.msra.mxu0 0.0
        %860 = vmatprep.subr.mxu0 0.0
        %861 = vmatpush1.msra.mxu0 0.0
        %862 = vmatprep.subr.mxu0 0.0
        %863 = vmatpush1.msra.mxu0 0.0
        %864 = vmatprep.subr.mxu0 0.0
        %865 = vmatpush1.msra.mxu0 0.0
        %866 = vmatprep.subr.mxu0 0.0
        %867 = vmatpush1.msra.mxu0 0.0
        %868 = vmatprep.subr.mxu0 0.0
        %869 = vmatpush1.msra.mxu0 0.0
        %870 = vmatprep.subr.mxu0 0.0
        %871 = vmatpush1.msra.mxu0 0.0
        %872 = vmatprep.subr.mxu0 0.0
        %873 = vmatpush1.msra.mxu0 0.0
        %874 = vmatprep.subr.mxu0 0.0
        %875 = vmatpush1.msra.mxu0 0.0
        %876 = vmatprep.subr.mxu0 0.0
        %877 = vmatpush1.msra.mxu0 0.0
        %878 = vmatprep.subr.mxu0 0.0
        %879 = vmatpush1.msra.mxu0 0.0
        %880 = vmatprep.subr.mxu0 0.0
        %881 = vmatpush1.msra.mxu0 0.0
        %882 = vmatprep.subr.mxu0 0.0
        %883 = vmatpush1.msra.mxu0 0.0
        %884 = vmatprep.subr.mxu0 0.0
        %885 = vmatpush1.msra.mxu0 0.0
        %886 = vmatprep.subr.mxu0 0.0
        %887 = vmatpush1.msra.mxu0 0.0
        %888 = vmatprep.subr.mxu0 0.0
        %889 = vmatpush1.msra.mxu0 0.0
        %890 = vmatprep.subr.mxu0 0.0
        %891 = vmatpush1.msra.mxu0 0.0
        %892 = vmatprep.subr.mxu0 0.0
        %893 = vmatpush1.msra.mxu0 0.0
        %894 = vmatprep.mubr.f32.mxu0 0.0
        %895 = vmatmul.mubr.f32.gmra.mrb[0].mxu0 %v826
        %v896 = vpop.f32.mrb[0].mxu0
        %v897 = vadd.f32 0.0, %v896
        %v898 = vpop.f32.mrb[0].mxu0
        %899 = vmatprep.mubr.f32.mxu0 0.0
        %900 = vmatmul.mubr.f32.gmra.mrb[0].mxu0 %v828
        %v901 = vpop.f32.mrb[0].mxu0
        %v902 = vadd.f32 0.0, %v901
        %v903 = vpop.f32.mrb[0].mxu0
        %904 = vdwg.mxu0
        %v906 = vsel %vm825, %v807, 0
        %v908 = vsel %vm825, %v805, 0
        %910 = vmatprep.subr.mxu0 0.0
        %911 = vmatpush1.msra.mxu0 %v808
        %912 = vmatprep.subr.mxu0 0.0
        %913 = vmatpush1.msra.mxu0 %v809
        %914 = vmatprep.subr.mxu0 0.0
        %915 = vmatpush1.msra.mxu0 %v810
        %916 = vmatprep.subr.mxu0 0.0
        %917 = vmatpush1.msra.mxu0 %v811
        %918 = vmatprep.subr.mxu0 0.0
        %919 = vmatpush1.msra.mxu0 %v812
        %920 = vmatprep.subr.mxu0 0.0
        %921 = vmatpush1.msra.mxu0 %v813
        %922 = vmatprep.subr.mxu0 0.0
        %923 = vmatpush1.msra.mxu0 %v814
        %924 = vmatprep.subr.mxu0 0.0
        %925 = vmatpush1.msra.mxu0 %v815
        %926 = vmatprep.subr.mxu0 0.0
        %927 = vmatpush1.msra.mxu0 0.0
        %928 = vmatprep.subr.mxu0 0.0
        %929 = vmatpush1.msra.mxu0 0.0
        %930 = vmatprep.subr.mxu0 0.0
        %931 = vmatpush1.msra.mxu0 0.0
        %932 = vmatprep.subr.mxu0 0.0
        %933 = vmatpush1.msra.mxu0 0.0
        %934 = vmatprep.subr.mxu0 0.0
        %935 = vmatpush1.msra.mxu0 0.0
        %936 = vmatprep.subr.mxu0 0.0
        %937 = vmatpush1.msra.mxu0 0.0
        %938 = vmatprep.subr.mxu0 0.0
        %939 = vmatpush1.msra.mxu0 0.0
        %940 = vmatprep.subr.mxu0 0.0
        %941 = vmatpush1.msra.mxu0 0.0
        %942 = vmatprep.subr.mxu0 0.0
        %943 = vmatpush1.msra.mxu0 0.0
        %944 = vmatprep.subr.mxu0 0.0
        %945 = vmatpush1.msra.mxu0 0.0
        %946 = vmatprep.subr.mxu0 0.0
        %947 = vmatpush1.msra.mxu0 0.0
        %948 = vmatprep.subr.mxu0 0.0
        %949 = vmatpush1.msra.mxu0 0.0
        %950 = vmatprep.subr.mxu0 0.0
        %951 = vmatpush1.msra.mxu0 0.0
        %952 = vmatprep.subr.mxu0 0.0
        %953 = vmatpush1.msra.mxu0 0.0
        %954 = vmatprep.subr.mxu0 0.0
        %955 = vmatpush1.msra.mxu0 0.0
        %956 = vmatprep.subr.mxu0 0.0
        %957 = vmatpush1.msra.mxu0 0.0
        %958 = vmatprep.subr.mxu0 0.0
        %959 = vmatpush1.msra.mxu0 0.0
        %960 = vmatprep.subr.mxu0 0.0
        %961 = vmatpush1.msra.mxu0 0.0
        %962 = vmatprep.subr.mxu0 0.0
        %963 = vmatpush1.msra.mxu0 0.0
        %964 = vmatprep.subr.mxu0 0.0
        %965 = vmatpush1.msra.mxu0 0.0
        %966 = vmatprep.subr.mxu0 0.0
        %967 = vmatpush1.msra.mxu0 0.0
        %968 = vmatprep.subr.mxu0 0.0
        %969 = vmatpush1.msra.mxu0 0.0
        %970 = vmatprep.subr.mxu0 0.0
        %971 = vmatpush1.msra.mxu0 0.0
        %972 = vmatprep.subr.mxu0 0.0
        %973 = vmatpush1.msra.mxu0 0.0
        %974 = vmatprep.mubr.f32.mxu0 0.0
        %975 = vmatmul.mubr.f32.gmra.mrb[0].mxu0 %v906
        %v976 = vpop.f32.mrb[0].mxu0
        %v977 = vadd.f32 %v897, %v976
        %v978 = vpop.f32.mrb[0].mxu0
        %979 = vmatprep.mubr.f32.mxu0 0.0
        %980 = vmatmul.mubr.f32.gmra.mrb[0].mxu0 %v908
        %v981 = vpop.f32.mrb[0].mxu0
        %v982 = vadd.f32 %v902, %v981
        %v983 = vpop.f32.mrb[0].mxu0
        %984 = vdwg.mxu0
        %vm985 = vcmask 1046528
        %v986 = vrot.slane %v797, 1
        %v987 = vrot.slane %v798, 1
        %v988 = vsel %vm985, %v986, %v987
        %v990 = vsel %vm985, %v987, 0.0
        %s991 = scalar_lea.vmem %s1, 128
        %v992 = vld [vmem:[%s991] sm:$0xff]
        %v993 = vld [vmem:[%s991 + $0x8] sm:$0xff]
        %v994 = vld [vmem:[%s991 + $0x10] sm:$0xff]
        %v995 = vld [vmem:[%s991 + $0x18] sm:$0xff]
        %v996 = vld [vmem:[%s991 + $0x20] sm:$0xff]
        %v997 = vld [vmem:[%s991 + $0x28] sm:$0xff]
        %v998 = vld [vmem:[%s991 + $0x30] sm:$0xff]
        %v999 = vld [vmem:[%s991 + $0x38] sm:$0xff]
        %v1000 = vsel %vm825, %v988, 0
        %v1003 = vsel %vm825, %v990, 0
        %1005 = vmatprep.subr.mxu0 0.0
        %1006 = vmatpush1.msra.mxu0 %v992
        %1007 = vmatprep.subr.mxu0 0.0
        %1008 = vmatpush1.msra.mxu0 %v993
        %1009 = vmatprep.subr.mxu0 0.0
        %1010 = vmatpush1.msra.mxu0 %v994
        %1011 = vmatprep.subr.mxu0 0.0
        %1012 = vmatpush1.msra.mxu0 %v995
        %1013 = vmatprep.subr.mxu0 0.0
        %1014 = vmatpush1.msra.mxu0 %v996
        %1015 = vmatprep.subr.mxu0 0.0
        %1016 = vmatpush1.msra.mxu0 %v997
        %1017 = vmatprep.subr.mxu0 0.0
        %1018 = vmatpush1.msra.mxu0 %v998
        %1019 = vmatprep.subr.mxu0 0.0
        %1020 = vmatpush1.msra.mxu0 %v999
        %1021 = vmatprep.subr.mxu0 0.0
        %1022 = vmatpush1.msra.mxu0 0.0
        %1023 = vmatprep.subr.mxu0 0.0
        %1024 = vmatpush1.msra.mxu0 0.0
        %1025 = vmatprep.subr.mxu0 0.0
        %1026 = vmatpush1.msra.mxu0 0.0
        %1027 = vmatprep.subr.mxu0 0.0
        %1028 = vmatpush1.msra.mxu0 0.0
        %1029 = vmatprep.subr.mxu0 0.0
        %1030 = vmatpush1.msra.mxu0 0.0
        %1031 = vmatprep.subr.mxu0 0.0
        %1032 = vmatpush1.msra.mxu0 0.0
        %1033 = vmatprep.subr.mxu0 0.0
        %1034 = vmatpush1.msra.mxu0 0.0
        %1035 = vmatprep.subr.mxu0 0.0
        %1036 = vmatpush1.msra.mxu0 0.0
        %1037 = vmatprep.subr.mxu0 0.0
        %1038 = vmatpush1.msra.mxu0 0.0
        %1039 = vmatprep.subr.mxu0 0.0
        %1040 = vmatpush1.msra.mxu0 0.0
        %1041 = vmatprep.subr.mxu0 0.0
        %1042 = vmatpush1.msra.mxu0 0.0
        %1043 = vmatprep.subr.mxu0 0.0
        %1044 = vmatpush1.msra.mxu0 0.0
        %1045 = vmatprep.subr.mxu0 0.0
        %1046 = vmatpush1.msra.mxu0 0.0
        %1047 = vmatprep.subr.mxu0 0.0
        %1048 = vmatpush1.msra.mxu0 0.0
        %1049 = vmatprep.subr.mxu0 0.0
        %1050 = vmatpush1.msra.mxu0 0.0
        %1051 = vmatprep.subr.mxu0 0.0
        %1052 = vmatpush1.msra.mxu0 0.0
        %1053 = vmatprep.subr.mxu0 0.0
        %1054 = vmatpush1.msra.mxu0 0.0
        %1055 = vmatprep.subr.mxu0 0.0
        %1056 = vmatpush1.msra.mxu0 0.0
        %1057 = vmatprep.subr.mxu0 0.0
        %1058 = vmatpush1.msra.mxu0 0.0
        %1059 = vmatprep.subr.mxu0 0.0
        %1060 = vmatpush1.msra.mxu0 0.0
        %1061 = vmatprep.subr.mxu0 0.0
        %1062 = vmatpush1.msra.mxu0 0.0
        %1063 = vmatprep.subr.mxu0 0.0
        %1064 = vmatpush1.msra.mxu0 0.0
        %1065 = vmatprep.subr.mxu0 0.0
        %1066 = vmatpush1.msra.mxu0 0.0
        %1067 = vmatprep.subr.mxu0 0.0
        %1068 = vmatpush1.msra.mxu0 0.0
        %1069 = vmatprep.mubr.f32.mxu0 0.0
        %1070 = vmatmul.mubr.f32.gmra.mrb[0].mxu0 %v1000
        %v1071 = vpop.f32.mrb[0].mxu0
        %v1072 = vadd.f32 0.0, %v1071
        %v1073 = vpop.f32.mrb[0].mxu0
        %1074 = vmatprep.mubr.f32.mxu0 0.0
        %1075 = vmatmul.mubr.f32.gmra.mrb[0].mxu0 %v1003
        %v1076 = vpop.f32.mrb[0].mxu0
        %v1077 = vadd.f32 0.0, %v1076
        %v1078 = vpop.f32.mrb[0].mxu0
        %1079 = vdwg.mxu0
        %v1080 = vadd.f32 %v977, %v1072
        %v1081 = vadd.f32 %v982, %v1077
        %v1083 = vlaneseq
        %v1084 = vshrl.u32 %v1083, 7
        %v1085 = vsub.s32 0, %v1084
        %v1086 = vrot.slane %v799, %v1085
        %v1088 = vadd.f32 %v1080, %v1086
        %v1089 = vadd.f32 %v1081, %v1086
        %v1090 = vmax.f32 %v1088, 0.0
        %v1091 = vmax.f32 %v1089, 0.0
        %v1094 = vcombine.high %v1090, %v1090
        %v1096 = vunpack.c.l.s4 1983009808
        %v1097 = vunpack.c.0.s8 %v1096
        %v1098 = vlaneseq
        %v1099 = vshrl.u32 %v1098, 7
        %v1100 = vsub.s32 %v1097, %v1099
        %v1101 = vrot.slane %v1090, %v1100
        %v1103 = vunpack.c.l.s4 1983009808
        %v1104 = vunpack.c.0.s8 %v1103
        %v1105 = vlaneseq
        %v1106 = vshrl.u32 %v1105, 7
        %v1107 = vsub.s32 %v1104, %v1106
        %v1108 = vrot.slane %v1094, %v1107
        %v1109 = vcombine.high %v1101, %v1101
        %v1110 = vcombine.high %v1108, %v1108
        %v1111 = vcombine.high %v1091, %v1091
        %v1113 = vunpack.c.l.s4 1983009808
        %v1114 = vunpack.c.0.s8 %v1113
        %v1115 = vlaneseq
        %v1116 = vshrl.u32 %v1115, 7
        %v1117 = vsub.s32 %v1114, %v1116
        %v1118 = vrot.slane %v1091, %v1117
        %v1120 = vunpack.c.l.s4 1983009808
        %v1121 = vunpack.c.0.s8 %v1120
        %v1122 = vlaneseq
        %v1123 = vshrl.u32 %v1122, 7
        %v1124 = vsub.s32 %v1121, %v1123
        %v1125 = vrot.slane %v1111, %v1124
        %v1126 = vcombine.high %v1118, %v1118
        %v1127 = vcombine.high %v1125, %v1125
        %vm1136 = vcmask 386048
        %v1137 = vsel %vm1136, %v1101, -inf
        %v1138 = vrot.slane %v1137, 4
        %v1139 = vmax.f32 %v1137, %v1138
        %v1140 = vrot.slane %v1139, 2
        %v1141 = vmax.f32 %v1139, %v1140
        %v1142 = vrot.slane %v1141, 1
        %v1143 = vmax.f32 %v1141, %v1142
        %v1144 = vsel %vm1136, %v1109, -inf
        %v1145 = vrot.slane %v1144, 4
        %v1146 = vmax.f32 %v1144, %v1145
        %v1147 = vrot.slane %v1146, 2
        %v1148 = vmax.f32 %v1146, %v1147
        %v1149 = vrot.slane %v1148, 1
        %v1150 = vmax.f32 %v1148, %v1149
        %v1151 = vsel %vm1136, %v1108, -inf
        %v1152 = vrot.slane %v1151, 4
        %v1153 = vmax.f32 %v1151, %v1152
        %v1154 = vrot.slane %v1153, 2
        %v1155 = vmax.f32 %v1153, %v1154
        %v1156 = vrot.slane %v1155, 1
        %v1157 = vmax.f32 %v1155, %v1156
        %v1158 = vsel %vm1136, %v1110, -inf
        %v1159 = vrot.slane %v1158, 4
        %v1160 = vmax.f32 %v1158, %v1159
        %v1161 = vrot.slane %v1160, 2
        %v1162 = vmax.f32 %v1160, %v1161
        %v1163 = vrot.slane %v1162, 1
        %v1164 = vmax.f32 %v1162, %v1163
        %v1165 = vsel %vm1136, %v1118, -inf
        %v1166 = vrot.slane %v1165, 4
        %v1167 = vmax.f32 %v1165, %v1166
        %v1168 = vrot.slane %v1167, 2
        %v1169 = vmax.f32 %v1167, %v1168
        %v1170 = vrot.slane %v1169, 1
        %v1171 = vmax.f32 %v1169, %v1170
        %v1172 = vsel %vm1136, %v1126, -inf
        %v1173 = vrot.slane %v1172, 4
        %v1174 = vmax.f32 %v1172, %v1173
        %v1175 = vrot.slane %v1174, 2
        %v1176 = vmax.f32 %v1174, %v1175
        %v1177 = vrot.slane %v1176, 1
        %v1178 = vmax.f32 %v1176, %v1177
        %v1179 = vsel %vm1136, %v1125, -inf
        %v1180 = vrot.slane %v1179, 4
        %v1181 = vmax.f32 %v1179, %v1180
        %v1182 = vrot.slane %v1181, 2
        %v1183 = vmax.f32 %v1181, %v1182
        %v1184 = vrot.slane %v1183, 1
        %v1185 = vmax.f32 %v1183, %v1184
        %v1186 = vsel %vm1136, %v1127, -inf
        %v1187 = vrot.slane %v1186, 4
        %v1188 = vmax.f32 %v1186, %v1187
        %v1189 = vrot.slane %v1188, 2
        %v1190 = vmax.f32 %v1188, %v1189
        %v1191 = vrot.slane %v1190, 1
        %v1192 = vmax.f32 %v1190, %v1191
        %v1193 = vld [vmem:[%s4] sm:$0x1]
        %vm1201 = vcmask 1042434
        %v1202 = vsel %vm1201, %v1150, %v1143
        %vm1203 = vcmask 1043459
        %v1204 = vsel %vm1203, %v1157, %v1202
        %vm1205 = vcmask 1044484
        %v1206 = vsel %vm1205, %v1164, %v1204
        %vm1207 = vcmask 1045509
        %v1208 = vsel %vm1207, %v1171, %v1206
        %vm1209 = vcmask 1046534
        %v1210 = vsel %vm1209, %v1178, %v1208
        %vm1211 = vcmask 1047559
        %v1212 = vsel %vm1211, %v1185, %v1210
        %v1214 = vsel %vm802, 0.0, %v1212
        %v1215 = vld [vmem:[#allocation5] sm:$0xff]
        %v1216 = vld [vmem:[#allocation5 + $0x8] sm:$0xff]
        %v1217 = vld [vmem:[#allocation5 + $0x10] sm:$0xff]
        %v1218 = vld [vmem:[#allocation5 + $0x18] sm:$0xff]
        %v1219 = vld [vmem:[#allocation5 + $0x20] sm:$0xff]
        %v1220 = vld [vmem:[#allocation5 + $0x28] sm:$0xff]
        %s1221 = scalar_lea.vmem [#allocation5], 48
        %v1222 = vld [vmem:[%s1221] sm:$0xff]
        %v1223 = vld [vmem:[%s1221 + $0x8] sm:$0xff]
        %v1224 = vld [vmem:[%s1221 + $0x10] sm:$0xff]
        %v1225 = vld [vmem:[%s1221 + $0x18] sm:$0xff]
        %v1226 = vld [vmem:[%s1221 + $0x20] sm:$0xff]
        %v1227 = vld [vmem:[%s1221 + $0x28] sm:$0xff]
        %vm1229 = vcmask 1041409
        %v1230 = vsel %vm1229, %v1150, %v1143
        %v1231 = vsel %vm1201, %v1157, %v1230
        %v1232 = vsel %vm1203, %v1164, %v1231
        %v1233 = vsel %vm1205, %v1171, %v1232
        %v1234 = vsel %vm1207, %v1178, %v1233
        %v1235 = vsel %vm1209, %v1185, %v1234
        %v1236 = vsel %vm1211, %v1192, %v1235
        %vm1237 = vcmask 392192
        %v1238 = vsel %vm1237, %v1236, 0
        %1240 = vmatprep.subr.mxu0 0.0
        %1241 = vmatpush1.msra.mxu0 %v1222
        %1242 = vmatprep.subr.mxu0 0.0
        %1243 = vmatpush1.msra.mxu0 %v1223
        %1244 = vmatprep.subr.mxu0 0.0
        %1245 = vmatpush1.msra.mxu0 %v1224
        %1246 = vmatprep.subr.mxu0 0.0
        %1247 = vmatpush1.msra.mxu0 %v1225
        %1248 = vmatprep.subr.mxu0 0.0
        %1249 = vmatpush1.msra.mxu0 %v1226
        %1250 = vmatprep.subr.mxu0 0.0
        %1251 = vmatpush1.msra.mxu0 %v1227
        %1252 = vmatprep.subr.mxu0 0.0
        %1253 = vmatpush1.msra.mxu0 0.0
        %1254 = vmatprep.subr.mxu0 0.0
        %1255 = vmatpush1.msra.mxu0 0.0
        %1256 = vmatprep.subr.mxu0 0.0
        %1257 = vmatpush1.msra.mxu0 0.0
        %1258 = vmatprep.subr.mxu0 0.0
        %1259 = vmatpush1.msra.mxu0 0.0
        %1260 = vmatprep.subr.mxu0 0.0
        %1261 = vmatpush1.msra.mxu0 0.0
        %1262 = vmatprep.subr.mxu0 0.0
        %1263 = vmatpush1.msra.mxu0 0.0
        %1264 = vmatprep.subr.mxu0 0.0
        %1265 = vmatpush1.msra.mxu0 0.0
        %1266 = vmatprep.subr.mxu0 0.0
        %1267 = vmatpush1.msra.mxu0 0.0
        %1268 = vmatprep.subr.mxu0 0.0
        %1269 = vmatpush1.msra.mxu0 0.0
        %1270 = vmatprep.subr.mxu0 0.0
        %1271 = vmatpush1.msra.mxu0 0.0
        %1272 = vmatprep.subr.mxu0 0.0
        %1273 = vmatpush1.msra.mxu0 0.0
        %1274 = vmatprep.subr.mxu0 0.0
        %1275 = vmatpush1.msra.mxu0 0.0
        %1276 = vmatprep.subr.mxu0 0.0
        %1277 = vmatpush1.msra.mxu0 0.0
        %1278 = vmatprep.subr.mxu0 0.0
        %1279 = vmatpush1.msra.mxu0 0.0
        %1280 = vmatprep.subr.mxu0 0.0
        %1281 = vmatpush1.msra.mxu0 0.0
        %1282 = vmatprep.subr.mxu0 0.0
        %1283 = vmatpush1.msra.mxu0 0.0
        %1284 = vmatprep.subr.mxu0 0.0
        %1285 = vmatpush1.msra.mxu0 0.0
        %1286 = vmatprep.subr.mxu0 0.0
        %1287 = vmatpush1.msra.mxu0 0.0
        %1288 = vmatprep.subr.mxu0 0.0
        %1289 = vmatpush1.msra.mxu0 0.0
        %1290 = vmatprep.subr.mxu0 0.0
        %1291 = vmatpush1.msra.mxu0 0.0
        %1292 = vmatprep.subr.mxu0 0.0
        %1293 = vmatpush1.msra.mxu0 0.0
        %1294 = vmatprep.subr.mxu0 0.0
        %1295 = vmatpush1.msra.mxu0 0.0
        %1296 = vmatprep.subr.mxu0 0.0
        %1297 = vmatpush1.msra.mxu0 0.0
        %1298 = vmatprep.subr.mxu0 0.0
        %1299 = vmatpush1.msra.mxu0 0.0
        %1300 = vmatprep.subr.mxu0 0.0
        %1301 = vmatpush1.msra.mxu0 0.0
        %1302 = vmatprep.subr.mxu0 0.0
        %1303 = vmatpush1.msra.mxu0 0.0
        %1304 = vmatprep.mubr.f32.mxu0 0.0
        %1305 = vmatmul.mubr.f32.gmra.mrb[0].mxu0 %v1238
        %v1306 = vpop.f32.mrb[0].mxu0
        %v1307 = vadd.f32 0.0, %v1306
        %v1308 = vpop.f32.mrb[0].mxu0
        %1309 = vdwg.mxu0
        %v1311 = vsel %vm1237, %v1214, 0
        %1313 = vmatprep.subr.mxu0 0.0
        %1314 = vmatpush1.msra.mxu0 %v1215
        %1315 = vmatprep.subr.mxu0 0.0
        %1316 = vmatpush1.msra.mxu0 %v1216
        %1317 = vmatprep.subr.mxu0 0.0
        %1318 = vmatpush1.msra.mxu0 %v1217
        %1319 = vmatprep.subr.mxu0 0.0
        %1320 = vmatpush1.msra.mxu0 %v1218
        %1321 = vmatprep.subr.mxu0 0.0
        %1322 = vmatpush1.msra.mxu0 %v1219
        %1323 = vmatprep.subr.mxu0 0.0
        %1324 = vmatpush1.msra.mxu0 %v1220
        %1325 = vmatprep.subr.mxu0 0.0
        %1326 = vmatpush1.msra.mxu0 0.0
        %1327 = vmatprep.subr.mxu0 0.0
        %1328 = vmatpush1.msra.mxu0 0.0
        %1329 = vmatprep.subr.mxu0 0.0
        %1330 = vmatpush1.msra.mxu0 0.0
        %1331 = vmatprep.subr.mxu0 0.0
        %1332 = vmatpush1.msra.mxu0 0.0
        %1333 = vmatprep.subr.mxu0 0.0
        %1334 = vmatpush1.msra.mxu0 0.0
        %1335 = vmatprep.subr.mxu0 0.0
        %1336 = vmatpush1.msra.mxu0 0.0
        %1337 = vmatprep.subr.mxu0 0.0
        %1338 = vmatpush1.msra.mxu0 0.0
        %1339 = vmatprep.subr.mxu0 0.0
        %1340 = vmatpush1.msra.mxu0 0.0
        %1341 = vmatprep.subr.mxu0 0.0
        %1342 = vmatpush1.msra.mxu0 0.0
        %1343 = vmatprep.subr.mxu0 0.0
        %1344 = vmatpush1.msra.mxu0 0.0
        %1345 = vmatprep.subr.mxu0 0.0
        %1346 = vmatpush1.msra.mxu0 0.0
        %1347 = vmatprep.subr.mxu0 0.0
        %1348 = vmatpush1.msra.mxu0 0.0
        %1349 = vmatprep.subr.mxu0 0.0
        %1350 = vmatpush1.msra.mxu0 0.0
        %1351 = vmatprep.subr.mxu0 0.0
        %1352 = vmatpush1.msra.mxu0 0.0
        %1353 = vmatprep.subr.mxu0 0.0
        %1354 = vmatpush1.msra.mxu0 0.0
        %1355 = vmatprep.subr.mxu0 0.0
        %1356 = vmatpush1.msra.mxu0 0.0
        %1357 = vmatprep.subr.mxu0 0.0
        %1358 = vmatpush1.msra.mxu0 0.0
        %1359 = vmatprep.subr.mxu0 0.0
        %1360 = vmatpush1.msra.mxu0 0.0
        %1361 = vmatprep.subr.mxu0 0.0
        %1362 = vmatpush1.msra.mxu0 0.0
        %1363 = vmatprep.subr.mxu0 0.0
        %1364 = vmatpush1.msra.mxu0 0.0
        %1365 = vmatprep.subr.mxu0 0.0
        %1366 = vmatpush1.msra.mxu0 0.0
        %1367 = vmatprep.subr.mxu0 0.0
        %1368 = vmatpush1.msra.mxu0 0.0
        %1369 = vmatprep.subr.mxu0 0.0
        %1370 = vmatpush1.msra.mxu0 0.0
        %1371 = vmatprep.subr.mxu0 0.0
        %1372 = vmatpush1.msra.mxu0 0.0
        %1373 = vmatprep.subr.mxu0 0.0
        %1374 = vmatpush1.msra.mxu0 0.0
        %1375 = vmatprep.subr.mxu0 0.0
        %1376 = vmatpush1.msra.mxu0 0.0
        %1377 = vmatprep.mubr.f32.mxu0 0.0
        %1378 = vmatmul.mubr.f32.gmra.mrb[0].mxu0 %v1311
        %v1379 = vpop.f32.mrb[0].mxu0
        %v1380 = vadd.f32 %v1307, %v1379
        %v1381 = vpop.f32.mrb[0].mxu0
        %1382 = vdwg.mxu0
        %v1383 = vsel %vm1229, %v1157, %v1150
        %v1384 = vsel %vm1201, %v1164, %v1383
        %v1385 = vsel %vm1203, %v1171, %v1384
        %v1386 = vsel %vm1205, %v1178, %v1385
        %v1387 = vsel %vm1207, %v1185, %v1386
        %v1388 = vsel %vm1209, %v1192, %v1387
        %v1390 = vsel %vm985, %v1388, 0.0
        %s1391 = scalar_lea.vmem [#allocation5], 96
        %v1392 = vld [vmem:[%s1391] sm:$0xff]
        %v1393 = vld [vmem:[%s1391 + $0x8] sm:$0xff]
        %v1394 = vld [vmem:[%s1391 + $0x10] sm:$0xff]
        %v1395 = vld [vmem:[%s1391 + $0x18] sm:$0xff]
        %v1396 = vld [vmem:[%s1391 + $0x20] sm:$0xff]
        %v1397 = vld [vmem:[%s1391 + $0x28] sm:$0xff]
        %v1399 = vsel %vm1237, %v1390, 0
        %1401 = vmatprep.subr.mxu0 0.0
        %1402 = vmatpush1.msra.mxu0 %v1392
        %1403 = vmatprep.subr.mxu0 0.0
        %1404 = vmatpush1.msra.mxu0 %v1393
        %1405 = vmatprep.subr.mxu0 0.0
        %1406 = vmatpush1.msra.mxu0 %v1394
        %1407 = vmatprep.subr.mxu0 0.0
        %1408 = vmatpush1.msra.mxu0 %v1395
        %1409 = vmatprep.subr.mxu0 0.0
        %1410 = vmatpush1.msra.mxu0 %v1396
        %1411 = vmatprep.subr.mxu0 0.0
        %1412 = vmatpush1.msra.mxu0 %v1397
        %1413 = vmatprep.subr.mxu0 0.0
        %1414 = vmatpush1.msra.mxu0 0.0
        %1415 = vmatprep.subr.mxu0 0.0
        %1416 = vmatpush1.msra.mxu0 0.0
        %1417 = vmatprep.subr.mxu0 0.0
        %1418 = vmatpush1.msra.mxu0 0.0
        %1419 = vmatprep.subr.mxu0 0.0
        %1420 = vmatpush1.msra.mxu0 0.0
        %1421 = vmatprep.subr.mxu0 0.0
        %1422 = vmatpush1.msra.mxu0 0.0
        %1423 = vmatprep.subr.mxu0 0.0
        %1424 = vmatpush1.msra.mxu0 0.0
        %1425 = vmatprep.subr.mxu0 0.0
        %1426 = vmatpush1.msra.mxu0 0.0
        %1427 = vmatprep.subr.mxu0 0.0
        %1428 = vmatpush1.msra.mxu0 0.0
        %1429 = vmatprep.subr.mxu0 0.0
        %1430 = vmatpush1.msra.mxu0 0.0
        %1431 = vmatprep.subr.mxu0 0.0
        %1432 = vmatpush1.msra.mxu0 0.0
        %1433 = vmatprep.subr.mxu0 0.0
        %1434 = vmatpush1.msra.mxu0 0.0
        %1435 = vmatprep.subr.mxu0 0.0
        %1436 = vmatpush1.msra.mxu0 0.0
        %1437 = vmatprep.subr.mxu0 0.0
        %1438 = vmatpush1.msra.mxu0 0.0
        %1439 = vmatprep.subr.mxu0 0.0
        %1440 = vmatpush1.msra.mxu0 0.0
        %1441 = vmatprep.subr.mxu0 0.0
        %1442 = vmatpush1.msra.mxu0 0.0
        %1443 = vmatprep.subr.mxu0 0.0
        %1444 = vmatpush1.msra.mxu0 0.0
        %1445 = vmatprep.subr.mxu0 0.0
        %1446 = vmatpush1.msra.mxu0 0.0
        %1447 = vmatprep.subr.mxu0 0.0
        %1448 = vmatpush1.msra.mxu0 0.0
        %1449 = vmatprep.subr.mxu0 0.0
        %1450 = vmatpush1.msra.mxu0 0.0
        %1451 = vmatprep.subr.mxu0 0.0
        %1452 = vmatpush1.msra.mxu0 0.0
        %1453 = vmatprep.subr.mxu0 0.0
        %1454 = vmatpush1.msra.mxu0 0.0
        %1455 = vmatprep.subr.mxu0 0.0
        %1456 = vmatpush1.msra.mxu0 0.0
        %1457 = vmatprep.subr.mxu0 0.0
        %1458 = vmatpush1.msra.mxu0 0.0
        %1459 = vmatprep.subr.mxu0 0.0
        %1460 = vmatpush1.msra.mxu0 0.0
        %1461 = vmatprep.subr.mxu0 0.0
        %1462 = vmatpush1.msra.mxu0 0.0
        %1463 = vmatprep.subr.mxu0 0.0
        %1464 = vmatpush1.msra.mxu0 0.0
        %1465 = vmatprep.mubr.f32.mxu0 0.0
        %1466 = vmatmul.mubr.f32.gmra.mrb[0].mxu0 %v1399
        %v1467 = vpop.f32.mrb[0].mxu0
        %v1468 = vadd.f32 0.0, %v1467
        %v1469 = vpop.f32.mrb[0].mxu0
        %1470 = vdwg.mxu0
        %v1471 = vadd.f32 %v1380, %v1468
        %v1473 = vlaneseq
        %v1474 = vshrl.u32 %v1473, 7
        %v1475 = vsub.s32 0, %v1474
        %v1476 = vrot.slane %v1193, %v1475
        %v1478 = vadd.f32 %v1471, %v1476
        %v1479 = vmax.f32 %v1478, 0.0
        %v1481 = vcombine.high %v1479, %v1479
        %v1483 = vunpack.c.l.s4 1983009808
        %v1484 = vunpack.c.0.s8 %v1483
        %v1485 = vlaneseq
        %v1486 = vshrl.u32 %v1485, 7
        %v1487 = vsub.s32 %v1484, %v1486
        %v1488 = vrot.slane %v1479, %v1487
        %v1490 = vunpack.c.l.s4 1983009808
        %v1491 = vunpack.c.0.s8 %v1490
        %v1492 = vlaneseq
        %v1493 = vshrl.u32 %v1492, 7
        %v1494 = vsub.s32 %v1491, %v1493
        %v1495 = vrot.slane %v1481, %v1494
        %v1496 = vcombine.high %v1488, %v1488
        %v1497 = vcombine.high %v1495, %v1495
        %vm1502 = vcmask 779264
        %v1503 = vsel %vm1502, %v1488, -inf
        %v1504 = vrot.slane %v1503, 4
        %v1505 = vmax.f32 %v1503, %v1504
        %v1506 = vrot.slane %v1505, 2
        %v1507 = vmax.f32 %v1505, %v1506
        %v1508 = vrot.slane %v1507, 1
        %v1509 = vmax.f32 %v1507, %v1508
        %v1510 = vsel %vm1502, %v1496, -inf
        %v1511 = vrot.slane %v1510, 4
        %v1512 = vmax.f32 %v1510, %v1511
        %v1513 = vrot.slane %v1512, 2
        %v1514 = vmax.f32 %v1512, %v1513
        %v1515 = vrot.slane %v1514, 1
        %v1516 = vmax.f32 %v1514, %v1515
        %v1517 = vsel %vm1502, %v1495, -inf
        %v1518 = vrot.slane %v1517, 4
        %v1519 = vmax.f32 %v1517, %v1518
        %v1520 = vrot.slane %v1519, 2
        %v1521 = vmax.f32 %v1519, %v1520
        %v1522 = vrot.slane %v1521, 1
        %v1523 = vmax.f32 %v1521, %v1522
        %v1524 = vsel %vm1502, %v1497, -inf
        %v1525 = vrot.slane %v1524, 4
        %v1526 = vmax.f32 %v1524, %v1525
        %v1527 = vrot.slane %v1526, 2
        %v1528 = vmax.f32 %v1526, %v1527
        %v1529 = vrot.slane %v1528, 1
        %v1530 = vmax.f32 %v1528, %v1529
        %v1531 = vld [vmem:[%s6] sm:$0x1]
        %v1532 = vld [vmem:[%s7] sm:$0x1]
        %v1536 = vsel %vm1201, %v1516, %v1509
        %v1537 = vsel %vm1203, %v1523, %v1536
        %v1539 = vsel %vm802, 0.0, %v1537
        %v1540 = vld [vmem:[%s5] sm:$0xff]
        %v1541 = vld [vmem:[%s5 + $0x8] sm:$0xff]
        %v1542 = vld [vmem:[%s5 + $0x10] sm:$0xff]
        %v1543 = vld [vmem:[%s5 + $0x18] sm:$0xff]
        %v1544 = vld [vmem:[%s5 + $0x20] sm:$0xff]
        %v1545 = vld [vmem:[%s5 + $0x28] sm:$0xff]
        %v1546 = vld [vmem:[%s5 + $0x30] sm:$0xff]
        %v1547 = vld [vmem:[%s5 + $0x38] sm:$0xff]
        %v1548 = vld [vmem:[%s5 + $0x40] sm:$0xff]
        %v1549 = vld [vmem:[%s5 + $0x48] sm:$0xff]
        %v1550 = vld [vmem:[%s5 + $0x50] sm:$0xff]
        %v1551 = vld [vmem:[%s5 + $0x58] sm:$0xff]
        %s1552 = scalar_lea.vmem %s5, 96
        %v1553 = vld [vmem:[%s1552] sm:$0xff]
        %v1554 = vld [vmem:[%s1552 + $0x8] sm:$0xff]
        %v1555 = vld [vmem:[%s1552 + $0x10] sm:$0xff]
        %v1556 = vld [vmem:[%s1552 + $0x18] sm:$0xff]
        %v1557 = vld [vmem:[%s1552 + $0x20] sm:$0xff]
        %v1558 = vld [vmem:[%s1552 + $0x28] sm:$0xff]
        %v1559 = vld [vmem:[%s1552 + $0x30] sm:$0xff]
        %v1560 = vld [vmem:[%s1552 + $0x38] sm:$0xff]
        %v1561 = vld [vmem:[%s1552 + $0x40] sm:$0xff]
        %v1562 = vld [vmem:[%s1552 + $0x48] sm:$0xff]
        %v1563 = vld [vmem:[%s1552 + $0x50] sm:$0xff]
        %v1564 = vld [vmem:[%s1552 + $0x58] sm:$0xff]
        %v1566 = vsel %vm1229, %v1516, %v1509
        %v1567 = vsel %vm1201, %v1523, %v1566
        %v1568 = vsel %vm1203, %v1530, %v1567
        %vm1569 = vcmask 785408
        %v1570 = vsel %vm1569, %v1568, 0
        %1572 = vmatprep.subr.mxu0 0.0
        %1573 = vmatpush1.msra.mxu0 %v1553
        %1574 = vmatprep.subr.mxu0 0.0
        %1575 = vmatpush1.msra.mxu0 %v1554
        %1576 = vmatprep.subr.mxu0 0.0
        %1577 = vmatpush1.msra.mxu0 %v1555
        %1578 = vmatprep.subr.mxu0 0.0
        %1579 = vmatpush1.msra.mxu0 %v1556
        %1580 = vmatprep.subr.mxu0 0.0
        %1581 = vmatpush1.msra.mxu0 %v1557
        %1582 = vmatprep.subr.mxu0 0.0
        %1583 = vmatpush1.msra.mxu0 %v1558
        %1584 = vmatprep.subr.mxu0 0.0
        %1585 = vmatpush1.msra.mxu0 %v1559
        %1586 = vmatprep.subr.mxu0 0.0
        %1587 = vmatpush1.msra.mxu0 %v1560
        %1588 = vmatprep.subr.mxu0 0.0
        %1589 = vmatpush1.msra.mxu0 %v1561
        %1590 = vmatprep.subr.mxu0 0.0
        %1591 = vmatpush1.msra.mxu0 %v1562
        %1592 = vmatprep.subr.mxu0 0.0
        %1593 = vmatpush1.msra.mxu0 %v1563
        %1594 = vmatprep.subr.mxu0 0.0
        %1595 = vmatpush1.msra.mxu0 %v1564
        %1596 = vmatprep.subr.mxu0 0.0
        %1597 = vmatpush1.msra.mxu0 0.0
        %1598 = vmatprep.subr.mxu0 0.0
        %1599 = vmatpush1.msra.mxu0 0.0
        %1600 = vmatprep.subr.mxu0 0.0
        %1601 = vmatpush1.msra.mxu0 0.0
        %1602 = vmatprep.subr.mxu0 0.0
        %1603 = vmatpush1.msra.mxu0 0.0
        %1604 = vmatprep.subr.mxu0 0.0
        %1605 = vmatpush1.msra.mxu0 0.0
        %1606 = vmatprep.subr.mxu0 0.0
        %1607 = vmatpush1.msra.mxu0 0.0
        %1608 = vmatprep.subr.mxu0 0.0
        %1609 = vmatpush1.msra.mxu0 0.0
        %1610 = vmatprep.subr.mxu0 0.0
        %1611 = vmatpush1.msra.mxu0 0.0
        %1612 = vmatprep.subr.mxu0 0.0
        %1613 = vmatpush1.msra.mxu0 0.0
        %1614 = vmatprep.subr.mxu0 0.0
        %1615 = vmatpush1.msra.mxu0 0.0
        %1616 = vmatprep.subr.mxu0 0.0
        %1617 = vmatpush1.msra.mxu0 0.0
        %1618 = vmatprep.subr.mxu0 0.0
        %1619 = vmatpush1.msra.mxu0 0.0
        %1620 = vmatprep.subr.mxu0 0.0
        %1621 = vmatpush1.msra.mxu0 0.0
        %1622 = vmatprep.subr.mxu0 0.0
        %1623 = vmatpush1.msra.mxu0 0.0
        %1624 = vmatprep.subr.mxu0 0.0
        %1625 = vmatpush1.msra.mxu0 0.0
        %1626 = vmatprep.subr.mxu0 0.0
        %1627 = vmatpush1.msra.mxu0 0.0
        %1628 = vmatprep.subr.mxu0 0.0
        %1629 = vmatpush1.msra.mxu0 0.0
        %1630 = vmatprep.subr.mxu0 0.0
        %1631 = vmatpush1.msra.mxu0 0.0
        %1632 = vmatprep.subr.mxu0 0.0
        %1633 = vmatpush1.msra.mxu0 0.0
        %1634 = vmatprep.subr.mxu0 0.0
        %1635 = vmatpush1.msra.mxu0 0.0
        %1636 = vmatprep.mubr.f32.mxu0 0.0
        %1637 = vmatmul.mubr.f32.gmra.mrb[0].mxu0 %v1570
        %v1638 = vpop.f32.mrb[0].mxu0
        %v1639 = vadd.f32 0.0, %v1638
        %v1640 = vpop.f32.mrb[0].mxu0
        %1641 = vdwg.mxu0
        %v1643 = vsel %vm1569, %v1539, 0
        %1645 = vmatprep.subr.mxu0 0.0
        %1646 = vmatpush1.msra.mxu0 %v1540
        %1647 = vmatprep.subr.mxu0 0.0
        %1648 = vmatpush1.msra.mxu0 %v1541
        %1649 = vmatprep.subr.mxu0 0.0
        %1650 = vmatpush1.msra.mxu0 %v1542
        %1651 = vmatprep.subr.mxu0 0.0
        %1652 = vmatpush1.msra.mxu0 %v1543
        %1653 = vmatprep.subr.mxu0 0.0
        %1654 = vmatpush1.msra.mxu0 %v1544
        %1655 = vmatprep.subr.mxu0 0.0
        %1656 = vmatpush1.msra.mxu0 %v1545
        %1657 = vmatprep.subr.mxu0 0.0
        %1658 = vmatpush1.msra.mxu0 %v1546
        %1659 = vmatprep.subr.mxu0 0.0
        %1660 = vmatpush1.msra.mxu0 %v1547
        %1661 = vmatprep.subr.mxu0 0.0
        %1662 = vmatpush1.msra.mxu0 %v1548
        %1663 = vmatprep.subr.mxu0 0.0
        %1664 = vmatpush1.msra.mxu0 %v1549
        %1665 = vmatprep.subr.mxu0 0.0
        %1666 = vmatpush1.msra.mxu0 %v1550
        %1667 = vmatprep.subr.mxu0 0.0
        %1668 = vmatpush1.msra.mxu0 %v1551
        %1669 = vmatprep.subr.mxu0 0.0
        %1670 = vmatpush1.msra.mxu0 0.0
        %1671 = vmatprep.subr.mxu0 0.0
        %1672 = vmatpush1.msra.mxu0 0.0
        %1673 = vmatprep.subr.mxu0 0.0
        %1674 = vmatpush1.msra.mxu0 0.0
        %1675 = vmatprep.subr.mxu0 0.0
        %1676 = vmatpush1.msra.mxu0 0.0
        %1677 = vmatprep.subr.mxu0 0.0
        %1678 = vmatpush1.msra.mxu0 0.0
        %1679 = vmatprep.subr.mxu0 0.0
        %1680 = vmatpush1.msra.mxu0 0.0
        %1681 = vmatprep.subr.mxu0 0.0
        %1682 = vmatpush1.msra.mxu0 0.0
        %1683 = vmatprep.subr.mxu0 0.0
        %1684 = vmatpush1.msra.mxu0 0.0
        %1685 = vmatprep.subr.mxu0 0.0
        %1686 = vmatpush1.msra.mxu0 0.0
        %1687 = vmatprep.subr.mxu0 0.0
        %1688 = vmatpush1.msra.mxu0 0.0
        %1689 = vmatprep.subr.mxu0 0.0
        %1690 = vmatpush1.msra.mxu0 0.0
        %1691 = vmatprep.subr.mxu0 0.0
        %1692 = vmatpush1.msra.mxu0 0.0
        %1693 = vmatprep.subr.mxu0 0.0
        %1694 = vmatpush1.msra.mxu0 0.0
        %1695 = vmatprep.subr.mxu0 0.0
        %1696 = vmatpush1.msra.mxu0 0.0
        %1697 = vmatprep.subr.mxu0 0.0
        %1698 = vmatpush1.msra.mxu0 0.0
        %1699 = vmatprep.subr.mxu0 0.0
        %1700 = vmatpush1.msra.mxu0 0.0
        %1701 = vmatprep.subr.mxu0 0.0
        %1702 = vmatpush1.msra.mxu0 0.0
        %1703 = vmatprep.subr.mxu0 0.0
        %1704 = vmatpush1.msra.mxu0 0.0
        %1705 = vmatprep.subr.mxu0 0.0
        %1706 = vmatpush1.msra.mxu0 0.0
        %1707 = vmatprep.subr.mxu0 0.0
        %1708 = vmatpush1.msra.mxu0 0.0
        %1709 = vmatprep.mubr.f32.mxu0 0.0
        %1710 = vmatmul.mubr.f32.gmra.mrb[0].mxu0 %v1643
        %v1711 = vpop.f32.mrb[0].mxu0
        %v1712 = vadd.f32 %v1639, %v1711
        %v1713 = vpop.f32.mrb[0].mxu0
        %1714 = vdwg.mxu0
        %v1715 = vsel %vm1229, %v1523, %v1516
        %v1716 = vsel %vm1201, %v1530, %v1715
        %vm1718 = vcmask 1042432
        %v1719 = vsel %vm1718, %v1716, 0.0
        %s1720 = scalar_lea.vmem %s5, 192
        %v1721 = vld [vmem:[%s1720] sm:$0xff]
        %v1722 = vld [vmem:[%s1720 + $0x8] sm:$0xff]
        %v1723 = vld [vmem:[%s1720 + $0x10] sm:$0xff]
        %v1724 = vld [vmem:[%s1720 + $0x18] sm:$0xff]
        %v1725 = vld [vmem:[%s1720 + $0x20] sm:$0xff]
        %v1726 = vld [vmem:[%s1720 + $0x28] sm:$0xff]
        %v1727 = vld [vmem:[%s1720 + $0x30] sm:$0xff]
        %v1728 = vld [vmem:[%s1720 + $0x38] sm:$0xff]
        %v1729 = vld [vmem:[%s1720 + $0x40] sm:$0xff]
        %v1730 = vld [vmem:[%s1720 + $0x48] sm:$0xff]
        %v1731 = vld [vmem:[%s1720 + $0x50] sm:$0xff]
        %v1732 = vld [vmem:[%s1720 + $0x58] sm:$0xff]
        %v1734 = vsel %vm1569, %v1719, 0
        %1736 = vmatprep.subr.mxu0 0.0
        %1737 = vmatpush1.msra.mxu0 %v1721
        %1738 = vmatprep.subr.mxu0 0.0
        %1739 = vmatpush1.msra.mxu0 %v1722
        %1740 = vmatprep.subr.mxu0 0.0
        %1741 = vmatpush1.msra.mxu0 %v1723
        %1742 = vmatprep.subr.mxu0 0.0
        %1743 = vmatpush1.msra.mxu0 %v1724
        %1744 = vmatprep.subr.mxu0 0.0
        %1745 = vmatpush1.msra.mxu0 %v1725
        %1746 = vmatprep.subr.mxu0 0.0
        %1747 = vmatpush1.msra.mxu0 %v1726
        %1748 = vmatprep.subr.mxu0 0.0
        %1749 = vmatpush1.msra.mxu0 %v1727
        %1750 = vmatprep.subr.mxu0 0.0
        %1751 = vmatpush1.msra.mxu0 %v1728
        %1752 = vmatprep.subr.mxu0 0.0
        %1753 = vmatpush1.msra.mxu0 %v1729
        %1754 = vmatprep.subr.mxu0 0.0
        %1755 = vmatpush1.msra.mxu0 %v1730
        %1756 = vmatprep.subr.mxu0 0.0
        %1757 = vmatpush1.msra.mxu0 %v1731
        %1758 = vmatprep.subr.mxu0 0.0
        %1759 = vmatpush1.msra.mxu0 %v1732
        %1760 = vmatprep.subr.mxu0 0.0
        %1761 = vmatpush1.msra.mxu0 0.0
        %1762 = vmatprep.subr.mxu0 0.0
        %1763 = vmatpush1.msra.mxu0 0.0
        %1764 = vmatprep.subr.mxu0 0.0
        %1765 = vmatpush1.msra.mxu0 0.0
        %1766 = vmatprep.subr.mxu0 0.0
        %1767 = vmatpush1.msra.mxu0 0.0
        %1768 = vmatprep.subr.mxu0 0.0
        %1769 = vmatpush1.msra.mxu0 0.0
        %1770 = vmatprep.subr.mxu0 0.0
        %1771 = vmatpush1.msra.mxu0 0.0
        %1772 = vmatprep.subr.mxu0 0.0
        %1773 = vmatpush1.msra.mxu0 0.0
        %1774 = vmatprep.subr.mxu0 0.0
        %1775 = vmatpush1.msra.mxu0 0.0
        %1776 = vmatprep.subr.mxu0 0.0
        %1777 = vmatpush1.msra.mxu0 0.0
        %1778 = vmatprep.subr.mxu0 0.0
        %1779 = vmatpush1.msra.mxu0 0.0
        %1780 = vmatprep.subr.mxu0 0.0
        %1781 = vmatpush1.msra.mxu0 0.0
        %1782 = vmatprep.subr.mxu0 0.0
        %1783 = vmatpush1.msra.mxu0 0.0
        %1784 = vmatprep.subr.mxu0 0.0
        %1785 = vmatpush1.msra.mxu0 0.0
        %1786 = vmatprep.subr.mxu0 0.0
        %1787 = vmatpush1.msra.mxu0 0.0
        %1788 = vmatprep.subr.mxu0 0.0
        %1789 = vmatpush1.msra.mxu0 0.0
        %1790 = vmatprep.subr.mxu0 0.0
        %1791 = vmatpush1.msra.mxu0 0.0
        %1792 = vmatprep.subr.mxu0 0.0
        %1793 = vmatpush1.msra.mxu0 0.0
        %1794 = vmatprep.subr.mxu0 0.0
        %1795 = vmatpush1.msra.mxu0 0.0
        %1796 = vmatprep.subr.mxu0 0.0
        %1797 = vmatpush1.msra.mxu0 0.0
        %1798 = vmatprep.subr.mxu0 0.0
        %1799 = vmatpush1.msra.mxu0 0.0
        %1800 = vmatprep.mubr.f32.mxu0 0.0
        %1801 = vmatmul.mubr.f32.gmra.mrb[0].mxu0 %v1734
        %v1802 = vpop.f32.mrb[0].mxu0
        %v1803 = vadd.f32 0.0, %v1802
        %v1804 = vpop.f32.mrb[0].mxu0
        %1805 = vdwg.mxu0
        %v1806 = vadd.f32 %v1712, %v1803
        %v1808 = vlaneseq
        %v1809 = vshrl.u32 %v1808, 7
        %v1810 = vsub.s32 0, %v1809
        %v1811 = vrot.slane %v1531, %v1810
        %v1813 = vmul.f32 %v1806, %v1811
        %v1815 = vlaneseq
        %v1816 = vshrl.u32 %v1815, 7
        %v1817 = vsub.s32 0, %v1816
        %v1818 = vrot.slane %v1532, %v1817
        %v1820 = vadd.f32 %v1813, %v1818
        %v1821 = vmax.f32 %v1820, 0.0
        %v1822 = vld [vmem:[%s9] sm:$0x1]
        %v1823 = vld [vmem:[%s10] sm:$0x1]
        %v1825 = vrot.slane %v1821, 7
        %v1827 = vsel %vm802, 0.0, %v1825
        %v1828 = vld [vmem:[%s8] sm:$0xff]
        %v1829 = vld [vmem:[%s8 + $0x8] sm:$0xff]
        %v1830 = vld [vmem:[%s8 + $0x10] sm:$0xff]
        %v1831 = vld [vmem:[%s8 + $0x18] sm:$0xff]
        %v1832 = vld [vmem:[%s8 + $0x20] sm:$0xff]
        %v1833 = vld [vmem:[%s8 + $0x28] sm:$0xff]
        %v1834 = vld [vmem:[%s8 + $0x30] sm:$0xff]
        %v1835 = vld [vmem:[%s8 + $0x38] sm:$0xff]
        %v1836 = vld [vmem:[%s8 + $0x40] sm:$0xff]
        %v1837 = vld [vmem:[%s8 + $0x48] sm:$0xff]
        %v1838 = vld [vmem:[%s8 + $0x50] sm:$0xff]
        %v1839 = vld [vmem:[%s8 + $0x58] sm:$0xff]
        %s1840 = scalar_lea.vmem %s8, 96
        %v1841 = vld [vmem:[%s1840] sm:$0xff]
        %v1842 = vld [vmem:[%s1840 + $0x8] sm:$0xff]
        %v1843 = vld [vmem:[%s1840 + $0x10] sm:$0xff]
        %v1844 = vld [vmem:[%s1840 + $0x18] sm:$0xff]
        %v1845 = vld [vmem:[%s1840 + $0x20] sm:$0xff]
        %v1846 = vld [vmem:[%s1840 + $0x28] sm:$0xff]
        %v1847 = vld [vmem:[%s1840 + $0x30] sm:$0xff]
        %v1848 = vld [vmem:[%s1840 + $0x38] sm:$0xff]
        %v1849 = vld [vmem:[%s1840 + $0x40] sm:$0xff]
        %v1850 = vld [vmem:[%s1840 + $0x48] sm:$0xff]
        %v1851 = vld [vmem:[%s1840 + $0x50] sm:$0xff]
        %v1852 = vld [vmem:[%s1840 + $0x58] sm:$0xff]
        %v1853 = vsel %vm1569, %v1821, 0
        %1855 = vmatprep.subr.mxu0 0.0
        %1856 = vmatpush1.msra.mxu0 %v1841
        %1857 = vmatprep.subr.mxu0 0.0
        %1858 = vmatpush1.msra.mxu0 %v1842
        %1859 = vmatprep.subr.mxu0 0.0
        %1860 = vmatpush1.msra.mxu0 %v1843
        %1861 = vmatprep.subr.mxu0 0.0
        %1862 = vmatpush1.msra.mxu0 %v1844
        %1863 = vmatprep.subr.mxu0 0.0
        %1864 = vmatpush1.msra.mxu0 %v1845
        %1865 = vmatprep.subr.mxu0 0.0
        %1866 = vmatpush1.msra.mxu0 %v1846
        %1867 = vmatprep.subr.mxu0 0.0
        %1868 = vmatpush1.msra.mxu0 %v1847
        %1869 = vmatprep.subr.mxu0 0.0
        %1870 = vmatpush1.msra.mxu0 %v1848
        %1871 = vmatprep.subr.mxu0 0.0
        %1872 = vmatpush1.msra.mxu0 %v1849
        %1873 = vmatprep.subr.mxu0 0.0
        %1874 = vmatpush1.msra.mxu0 %v1850
        %1875 = vmatprep.subr.mxu0 0.0
        %1876 = vmatpush1.msra.mxu0 %v1851
        %1877 = vmatprep.subr.mxu0 0.0
        %1878 = vmatpush1.msra.mxu0 %v1852
        %1879 = vmatprep.subr.mxu0 0.0
        %1880 = vmatpush1.msra.mxu0 0.0
        %1881 = vmatprep.subr.mxu0 0.0
        %1882 = vmatpush1.msra.mxu0 0.0
        %1883 = vmatprep.subr.mxu0 0.0
        %1884 = vmatpush1.msra.mxu0 0.0
        %1885 = vmatprep.subr.mxu0 0.0
        %1886 = vmatpush1.msra.mxu0 0.0
        %1887 = vmatprep.subr.mxu0 0.0
        %1888 = vmatpush1.msra.mxu0 0.0
        %1889 = vmatprep.subr.mxu0 0.0
        %1890 = vmatpush1.msra.mxu0 0.0
        %1891 = vmatprep.subr.mxu0 0.0
        %1892 = vmatpush1.msra.mxu0 0.0
        %1893 = vmatprep.subr.mxu0 0.0
        %1894 = vmatpush1.msra.mxu0 0.0
        %1895 = vmatprep.subr.mxu0 0.0
        %1896 = vmatpush1.msra.mxu0 0.0
        %1897 = vmatprep.subr.mxu0 0.0
        %1898 = vmatpush1.msra.mxu0 0.0
        %1899 = vmatprep.subr.mxu0 0.0
        %1900 = vmatpush1.msra.mxu0 0.0
        %1901 = vmatprep.subr.mxu0 0.0
        %1902 = vmatpush1.msra.mxu0 0.0
        %1903 = vmatprep.subr.mxu0 0.0
        %1904 = vmatpush1.msra.mxu0 0.0
        %1905 = vmatprep.subr.mxu0 0.0
        %1906 = vmatpush1.msra.mxu0 0.0
        %1907 = vmatprep.subr.mxu0 0.0
        %1908 = vmatpush1.msra.mxu0 0.0
        %1909 = vmatprep.subr.mxu0 0.0
        %1910 = vmatpush1.msra.mxu0 0.0
        %1911 = vmatprep.subr.mxu0 0.0
        %1912 = vmatpush1.msra.mxu0 0.0
        %1913 = vmatprep.subr.mxu0 0.0
        %1914 = vmatpush1.msra.mxu0 0.0
        %1915 = vmatprep.subr.mxu0 0.0
        %1916 = vmatpush1.msra.mxu0 0.0
        %1917 = vmatprep.subr.mxu0 0.0
        %1918 = vmatpush1.msra.mxu0 0.0
        %1919 = vmatprep.mubr.f32.mxu0 0.0
        %1920 = vmatmul.mubr.f32.gmra.mrb[0].mxu0 %v1853
        %v1921 = vpop.f32.mrb[0].mxu0
        %v1922 = vadd.f32 0.0, %v1921
        %v1923 = vpop.f32.mrb[0].mxu0
        %1924 = vdwg.mxu0
        %v1926 = vsel %vm1569, %v1827, 0
        %1928 = vmatprep.subr.mxu0 0.0
        %1929 = vmatpush1.msra.mxu0 %v1828
        %1930 = vmatprep.subr.mxu0 0.0
        %1931 = vmatpush1.msra.mxu0 %v1829
        %1932 = vmatprep.subr.mxu0 0.0
        %1933 = vmatpush1.msra.mxu0 %v1830
        %1934 = vmatprep.subr.mxu0 0.0
        %1935 = vmatpush1.msra.mxu0 %v1831
        %1936 = vmatprep.subr.mxu0 0.0
        %1937 = vmatpush1.msra.mxu0 %v1832
        %1938 = vmatprep.subr.mxu0 0.0
        %1939 = vmatpush1.msra.mxu0 %v1833
        %1940 = vmatprep.subr.mxu0 0.0
        %1941 = vmatpush1.msra.mxu0 %v1834
        %1942 = vmatprep.subr.mxu0 0.0
        %1943 = vmatpush1.msra.mxu0 %v1835
        %1944 = vmatprep.subr.mxu0 0.0
        %1945 = vmatpush1.msra.mxu0 %v1836
        %1946 = vmatprep.subr.mxu0 0.0
        %1947 = vmatpush1.msra.mxu0 %v1837
        %1948 = vmatprep.subr.mxu0 0.0
        %1949 = vmatpush1.msra.mxu0 %v1838
        %1950 = vmatprep.subr.mxu0 0.0
        %1951 = vmatpush1.msra.mxu0 %v1839
        %1952 = vmatprep.subr.mxu0 0.0
        %1953 = vmatpush1.msra.mxu0 0.0
        %1954 = vmatprep.subr.mxu0 0.0
        %1955 = vmatpush1.msra.mxu0 0.0
        %1956 = vmatprep.subr.mxu0 0.0
        %1957 = vmatpush1.msra.mxu0 0.0
        %1958 = vmatprep.subr.mxu0 0.0
        %1959 = vmatpush1.msra.mxu0 0.0
        %1960 = vmatprep.subr.mxu0 0.0
        %1961 = vmatpush1.msra.mxu0 0.0
        %1962 = vmatprep.subr.mxu0 0.0
        %1963 = vmatpush1.msra.mxu0 0.0
        %1964 = vmatprep.subr.mxu0 0.0
        %1965 = vmatpush1.msra.mxu0 0.0
        %1966 = vmatprep.subr.mxu0 0.0
        %1967 = vmatpush1.msra.mxu0 0.0
        %1968 = vmatprep.subr.mxu0 0.0
        %1969 = vmatpush1.msra.mxu0 0.0
        %1970 = vmatprep.subr.mxu0 0.0
        %1971 = vmatpush1.msra.mxu0 0.0
        %1972 = vmatprep.subr.mxu0 0.0
        %1973 = vmatpush1.msra.mxu0 0.0
        %1974 = vmatprep.subr.mxu0 0.0
        %1975 = vmatpush1.msra.mxu0 0.0
        %1976 = vmatprep.subr.mxu0 0.0
        %1977 = vmatpush1.msra.mxu0 0.0
        %1978 = vmatprep.subr.mxu0 0.0
        %1979 = vmatpush1.msra.mxu0 0.0
        %1980 = vmatprep.subr.mxu0 0.0
        %1981 = vmatpush1.msra.mxu0 0.0
        %1982 = vmatprep.subr.mxu0 0.0
        %1983 = vmatpush1.msra.mxu0 0.0
        %1984 = vmatprep.subr.mxu0 0.0
        %1985 = vmatpush1.msra.mxu0 0.0
        %1986 = vmatprep.subr.mxu0 0.0
        %1987 = vmatpush1.msra.mxu0 0.0
        %1988 = vmatprep.subr.mxu0 0.0
        %1989 = vmatpush1.msra.mxu0 0.0
        %1990 = vmatprep.subr.mxu0 0.0
        %1991 = vmatpush1.msra.mxu0 0.0
        %1992 = vmatprep.mubr.f32.mxu0 0.0
        %1993 = vmatmul.mubr.f32.gmra.mrb[0].mxu0 %v1926
        %v1994 = vpop.f32.mrb[0].mxu0
        %v1995 = vadd.f32 %v1922, %v1994
        %v1996 = vpop.f32.mrb[0].mxu0
        %1997 = vdwg.mxu0
        %v1998 = vrot.slane %v1821, 1
        %v2000 = vsel %vm1718, %v1998, 0.0
        %s2001 = scalar_lea.vmem %s8, 192
        %v2002 = vld [vmem:[%s2001] sm:$0xff]
        %v2003 = vld [vmem:[%s2001 + $0x8] sm:$0xff]
        %v2004 = vld [vmem:[%s2001 + $0x10] sm:$0xff]
        %v2005 = vld [vmem:[%s2001 + $0x18] sm:$0xff]
        %v2006 = vld [vmem:[%s2001 + $0x20] sm:$0xff]
        %v2007 = vld [vmem:[%s2001 + $0x28] sm:$0xff]
        %v2008 = vld [vmem:[%s2001 + $0x30] sm:$0xff]
        %v2009 = vld [vmem:[%s2001 + $0x38] sm:$0xff]
        %v2010 = vld [vmem:[%s2001 + $0x40] sm:$0xff]
        %v2011 = vld [vmem:[%s2001 + $0x48] sm:$0xff]
        %v2012 = vld [vmem:[%s2001 + $0x50] sm:$0xff]
        %v2013 = vld [vmem:[%s2001 + $0x58] sm:$0xff]
        %v2015 = vsel %vm1569, %v2000, 0
        %2017 = vmatprep.subr.mxu0 0.0
        %2018 = vmatpush1.msra.mxu0 %v2002
        %2019 = vmatprep.subr.mxu0 0.0
        %2020 = vmatpush1.msra.mxu0 %v2003
        %2021 = vmatprep.subr.mxu0 0.0
        %2022 = vmatpush1.msra.mxu0 %v2004
        %2023 = vmatprep.subr.mxu0 0.0
        %2024 = vmatpush1.msra.mxu0 %v2005
        %2025 = vmatprep.subr.mxu0 0.0
        %2026 = vmatpush1.msra.mxu0 %v2006
        %2027 = vmatprep.subr.mxu0 0.0
        %2028 = vmatpush1.msra.mxu0 %v2007
        %2029 = vmatprep.subr.mxu0 0.0
        %2030 = vmatpush1.msra.mxu0 %v2008
        %2031 = vmatprep.subr.mxu0 0.0
        %2032 = vmatpush1.msra.mxu0 %v2009
        %2033 = vmatprep.subr.mxu0 0.0
        %2034 = vmatpush1.msra.mxu0 %v2010
        %2035 = vmatprep.subr.mxu0 0.0
        %2036 = vmatpush1.msra.mxu0 %v2011
        %2037 = vmatprep.subr.mxu0 0.0
        %2038 = vmatpush1.msra.mxu0 %v2012
        %2039 = vmatprep.subr.mxu0 0.0
        %2040 = vmatpush1.msra.mxu0 %v2013
        %2041 = vmatprep.subr.mxu0 0.0
        %2042 = vmatpush1.msra.mxu0 0.0
        %2043 = vmatprep.subr.mxu0 0.0
        %2044 = vmatpush1.msra.mxu0 0.0
        %2045 = vmatprep.subr.mxu0 0.0
        %2046 = vmatpush1.msra.mxu0 0.0
        %2047 = vmatprep.subr.mxu0 0.0
        %2048 = vmatpush1.msra.mxu0 0.0
        %2049 = vmatprep.subr.mxu0 0.0
        %2050 = vmatpush1.msra.mxu0 0.0
        %2051 = vmatprep.subr.mxu0 0.0
        %2052 = vmatpush1.msra.mxu0 0.0
        %2053 = vmatprep.subr.mxu0 0.0
        %2054 = vmatpush1.msra.mxu0 0.0
        %2055 = vmatprep.subr.mxu0 0.0
        %2056 = vmatpush1.msra.mxu0 0.0
        %2057 = vmatprep.subr.mxu0 0.0
        %2058 = vmatpush1.msra.mxu0 0.0
        %2059 = vmatprep.subr.mxu0 0.0
        %2060 = vmatpush1.msra.mxu0 0.0
        %2061 = vmatprep.subr.mxu0 0.0
        %2062 = vmatpush1.msra.mxu0 0.0
        %2063 = vmatprep.subr.mxu0 0.0
        %2064 = vmatpush1.msra.mxu0 0.0
        %2065 = vmatprep.subr.mxu0 0.0
        %2066 = vmatpush1.msra.mxu0 0.0
        %2067 = vmatprep.subr.mxu0 0.0
        %2068 = vmatpush1.msra.mxu0 0.0
        %2069 = vmatprep.subr.mxu0 0.0
        %2070 = vmatpush1.msra.mxu0 0.0
        %2071 = vmatprep.subr.mxu0 0.0
        %2072 = vmatpush1.msra.mxu0 0.0
        %2073 = vmatprep.subr.mxu0 0.0
        %2074 = vmatpush1.msra.mxu0 0.0
        %2075 = vmatprep.subr.mxu0 0.0
        %2076 = vmatpush1.msra.mxu0 0.0
        %2077 = vmatprep.subr.mxu0 0.0
        %2078 = vmatpush1.msra.mxu0 0.0
        %2079 = vmatprep.subr.mxu0 0.0
        %2080 = vmatpush1.msra.mxu0 0.0
        %2081 = vmatprep.mubr.f32.mxu0 0.0
        %2082 = vmatmul.mubr.f32.gmra.mrb[0].mxu0 %v2015
        %v2083 = vpop.f32.mrb[0].mxu0
        %v2084 = vadd.f32 0.0, %v2083
        %v2085 = vpop.f32.mrb[0].mxu0
        %2086 = vdwg.mxu0
        %v2087 = vadd.f32 %v1995, %v2084
        %v2089 = vlaneseq
        %v2090 = vshrl.u32 %v2089, 7
        %v2091 = vsub.s32 0, %v2090
        %v2092 = vrot.slane %v1822, %v2091
        %v2094 = vmul.f32 %v2087, %v2092
        %v2096 = vlaneseq
        %v2097 = vshrl.u32 %v2096, 7
        %v2098 = vsub.s32 0, %v2097
        %v2099 = vrot.slane %v1823, %v2098
        %v2101 = vadd.f32 %v2094, %v2099
        %v2103 = vadd.f32 %v2101, %v1568
        %v2104 = vmax.f32 %v2103, 0.0
        %v2105 = vld [vmem:[%s12] sm:$0x1]
        %v2106 = vld [vmem:[%s13] sm:$0x1]
        %v2108 = vrot.slane %v2104, 7
        %v2110 = vsel %vm802, 0.0, %v2108
        %v2111 = vld [vmem:[%s11] sm:$0xff]
        %v2112 = vld [vmem:[%s11 + $0x8] sm:$0xff]
        %v2113 = vld [vmem:[%s11 + $0x10] sm:$0xff]
        %v2114 = vld [vmem:[%s11 + $0x18] sm:$0xff]
        %v2115 = vld [vmem:[%s11 + $0x20] sm:$0xff]
        %v2116 = vld [vmem:[%s11 + $0x28] sm:$0xff]
        %v2117 = vld [vmem:[%s11 + $0x30] sm:$0xff]
        %v2118 = vld [vmem:[%s11 + $0x38] sm:$0xff]
        %v2119 = vld [vmem:[%s11 + $0x40] sm:$0xff]
        %v2120 = vld [vmem:[%s11 + $0x48] sm:$0xff]
        %v2121 = vld [vmem:[%s11 + $0x50] sm:$0xff]
        %v2122 = vld [vmem:[%s11 + $0x58] sm:$0xff]
        %s2123 = scalar_lea.vmem %s11, 96
        %v2124 = vld [vmem:[%s2123] sm:$0xff]
        %v2125 = vld [vmem:[%s2123 + $0x8] sm:$0xff]
        %v2126 = vld [vmem:[%s2123 + $0x10] sm:$0xff]
        %v2127 = vld [vmem:[%s2123 + $0x18] sm:$0xff]
        %v2128 = vld [vmem:[%s2123 + $0x20] sm:$0xff]
        %v2129 = vld [vmem:[%s2123 + $0x28] sm:$0xff]
        %v2130 = vld [vmem:[%s2123 + $0x30] sm:$0xff]
        %v2131 = vld [vmem:[%s2123 + $0x38] sm:$0xff]
        %v2132 = vld [vmem:[%s2123 + $0x40] sm:$0xff]
        %v2133 = vld [vmem:[%s2123 + $0x48] sm:$0xff]
        %v2134 = vld [vmem:[%s2123 + $0x50] sm:$0xff]
        %v2135 = vld [vmem:[%s2123 + $0x58] sm:$0xff]
        %v2136 = vsel %vm1569, %v2104, 0
        %2138 = vmatprep.subr.mxu0 0.0
        %2139 = vmatpush1.msra.mxu0 %v2124
        %2140 = vmatprep.subr.mxu0 0.0
        %2141 = vmatpush1.msra.mxu0 %v2125
        %2142 = vmatprep.subr.mxu0 0.0
        %2143 = vmatpush1.msra.mxu0 %v2126
        %2144 = vmatprep.subr.mxu0 0.0
        %2145 = vmatpush1.msra.mxu0 %v2127
        %2146 = vmatprep.subr.mxu0 0.0
        %2147 = vmatpush1.msra.mxu0 %v2128
        %2148 = vmatprep.subr.mxu0 0.0
        %2149 = vmatpush1.msra.mxu0 %v2129
        %2150 = vmatprep.subr.mxu0 0.0
        %2151 = vmatpush1.msra.mxu0 %v2130
        %2152 = vmatprep.subr.mxu0 0.0
        %2153 = vmatpush1.msra.mxu0 %v2131
        %2154 = vmatprep.subr.mxu0 0.0
        %2155 = vmatpush1.msra.mxu0 %v2132
        %2156 = vmatprep.subr.mxu0 0.0
        %2157 = vmatpush1.msra.mxu0 %v2133
        %2158 = vmatprep.subr.mxu0 0.0
        %2159 = vmatpush1.msra.mxu0 %v2134
        %2160 = vmatprep.subr.mxu0 0.0
        %2161 = vmatpush1.msra.mxu0 %v2135
        %2162 = vmatprep.subr.mxu0 0.0
        %2163 = vmatpush1.msra.mxu0 0.0
        %2164 = vmatprep.subr.mxu0 0.0
        %2165 = vmatpush1.msra.mxu0 0.0
        %2166 = vmatprep.subr.mxu0 0.0
        %2167 = vmatpush1.msra.mxu0 0.0
        %2168 = vmatprep.subr.mxu0 0.0
        %2169 = vmatpush1.msra.mxu0 0.0
        %2170 = vmatprep.subr.mxu0 0.0
        %2171 = vmatpush1.msra.mxu0 0.0
        %2172 = vmatprep.subr.mxu0 0.0
        %2173 = vmatpush1.msra.mxu0 0.0
        %2174 = vmatprep.subr.mxu0 0.0
        %2175 = vmatpush1.msra.mxu0 0.0
        %2176 = vmatprep.subr.mxu0 0.0
        %2177 = vmatpush1.msra.mxu0 0.0
        %2178 = vmatprep.subr.mxu0 0.0
        %2179 = vmatpush1.msra.mxu0 0.0
        %2180 = vmatprep.subr.mxu0 0.0
        %2181 = vmatpush1.msra.mxu0 0.0
        %2182 = vmatprep.subr.mxu0 0.0
        %2183 = vmatpush1.msra.mxu0 0.0
        %2184 = vmatprep.subr.mxu0 0.0
        %2185 = vmatpush1.msra.mxu0 0.0
        %2186 = vmatprep.subr.mxu0 0.0
        %2187 = vmatpush1.msra.mxu0 0.0
        %2188 = vmatprep.subr.mxu0 0.0
        %2189 = vmatpush1.msra.mxu0 0.0
        %2190 = vmatprep.subr.mxu0 0.0
        %2191 = vmatpush1.msra.mxu0 0.0
        %2192 = vmatprep.subr.mxu0 0.0
        %2193 = vmatpush1.msra.mxu0 0.0
        %2194 = vmatprep.subr.mxu0 0.0
        %2195 = vmatpush1.msra.mxu0 0.0
        %2196 = vmatprep.subr.mxu0 0.0
        %2197 = vmatpush1.msra.mxu0 0.0
        %2198 = vmatprep.subr.mxu0 0.0
        %2199 = vmatpush1.msra.mxu0 0.0
        %2200 = vmatprep.subr.mxu0 0.0
        %2201 = vmatpush1.msra.mxu0 0.0
        %2202 = vmatprep.mubr.f32.mxu0 0.0
        %2203 = vmatmul.mubr.f32.gmra.mrb[0].mxu0 %v2136
        %v2204 = vpop.f32.mrb[0].mxu0
        %v2205 = vadd.f32 0.0, %v2204
        %v2206 = vpop.f32.mrb[0].mxu0
        %2207 = vdwg.mxu0
        %v2209 = vsel %vm1569, %v2110, 0
        %2211 = vmatprep.subr.mxu0 0.0
        %2212 = vmatpush1.msra.mxu0 %v2111
        %2213 = vmatprep.subr.mxu0 0.0
        %2214 = vmatpush1.msra.mxu0 %v2112
        %2215 = vmatprep.subr.mxu0 0.0
        %2216 = vmatpush1.msra.mxu0 %v2113
        %2217 = vmatprep.subr.mxu0 0.0
        %2218 = vmatpush1.msra.mxu0 %v2114
        %2219 = vmatprep.subr.mxu0 0.0
        %2220 = vmatpush1.msra.mxu0 %v2115
        %2221 = vmatprep.subr.mxu0 0.0
        %2222 = vmatpush1.msra.mxu0 %v2116
        %2223 = vmatprep.subr.mxu0 0.0
        %2224 = vmatpush1.msra.mxu0 %v2117
        %2225 = vmatprep.subr.mxu0 0.0
        %2226 = vmatpush1.msra.mxu0 %v2118
        %2227 = vmatprep.subr.mxu0 0.0
        %2228 = vmatpush1.msra.mxu0 %v2119
        %2229 = vmatprep.subr.mxu0 0.0
        %2230 = vmatpush1.msra.mxu0 %v2120
        %2231 = vmatprep.subr.mxu0 0.0
        %2232 = vmatpush1.msra.mxu0 %v2121
        %2233 = vmatprep.subr.mxu0 0.0
        %2234 = vmatpush1.msra.mxu0 %v2122
        %2235 = vmatprep.subr.mxu0 0.0
        %2236 = vmatpush1.msra.mxu0 0.0
        %2237 = vmatprep.subr.mxu0 0.0
        %2238 = vmatpush1.msra.mxu0 0.0
        %2239 = vmatprep.subr.mxu0 0.0
        %2240 = vmatpush1.msra.mxu0 0.0
        %2241 = vmatprep.subr.mxu0 0.0
        %2242 = vmatpush1.msra.mxu0 0.0
        %2243 = vmatprep.subr.mxu0 0.0
        %2244 = vmatpush1.msra.mxu0 0.0
        %2245 = vmatprep.subr.mxu0 0.0
        %2246 = vmatpush1.msra.mxu0 0.0
        %2247 = vmatprep.subr.mxu0 0.0
        %2248 = vmatpush1.msra.mxu0 0.0
        %2249 = vmatprep.subr.mxu0 0.0
        %2250 = vmatpush1.msra.mxu0 0.0
        %2251 = vmatprep.subr.mxu0 0.0
        %2252 = vmatpush1.msra.mxu0 0.0
        %2253 = vmatprep.subr.mxu0 0.0
        %2254 = vmatpush1.msra.mxu0 0.0
        %2255 = vmatprep.subr.mxu0 0.0
        %2256 = vmatpush1.msra.mxu0 0.0
        %2257 = vmatprep.subr.mxu0 0.0
        %2258 = vmatpush1.msra.mxu0 0.0
        %2259 = vmatprep.subr.mxu0 0.0
        %2260 = vmatpush1.msra.mxu0 0.0
        %2261 = vmatprep.subr.mxu0 0.0
        %2262 = vmatpush1.msra.mxu0 0.0
        %2263 = vmatprep.subr.mxu0 0.0
        %2264 = vmatpush1.msra.mxu0 0.0
        %2265 = vmatprep.subr.mxu0 0.0
        %2266 = vmatpush1.msra.mxu0 0.0
        %2267 = vmatprep.subr.mxu0 0.0
        %2268 = vmatpush1.msra.mxu0 0.0
        %2269 = vmatprep.subr.mxu0 0.0
        %2270 = vmatpush1.msra.mxu0 0.0
        %2271 = vmatprep.subr.mxu0 0.0
        %2272 = vmatpush1.msra.mxu0 0.0
        %2273 = vmatprep.subr.mxu0 0.0
        %2274 = vmatpush1.msra.mxu0 0.0
        %2275 = vmatprep.mubr.f32.mxu0 0.0
        %2276 = vmatmul.mubr.f32.gmra.mrb[0].mxu0 %v2209
        %v2277 = vpop.f32.mrb[0].mxu0
        %v2278 = vadd.f32 %v2205, %v2277
        %v2279 = vpop.f32.mrb[0].mxu0
        %2280 = vdwg.mxu0
        %v2281 = vrot.slane %v2104, 1
        %v2283 = vsel %vm1718, %v2281, 0.0
        %s2284 = scalar_lea.vmem %s11, 192
        %v2285 = vld [vmem:[%s2284] sm:$0xff]
        %v2286 = vld [vmem:[%s2284 + $0x8] sm:$0xff]
        %v2287 = vld [vmem:[%s2284 + $0x10] sm:$0xff]
        %v2288 = vld [vmem:[%s2284 + $0x18] sm:$0xff]
        %v2289 = vld [vmem:[%s2284 + $0x20] sm:$0xff]
        %v2290 = vld [vmem:[%s2284 + $0x28] sm:$0xff]
        %v2291 = vld [vmem:[%s2284 + $0x30] sm:$0xff]
        %v2292 = vld [vmem:[%s2284 + $0x38] sm:$0xff]
        %v2293 = vld [vmem:[%s2284 + $0x40] sm:$0xff]
        %v2294 = vld [vmem:[%s2284 + $0x48] sm:$0xff]
        %v2295 = vld [vmem:[%s2284 + $0x50] sm:$0xff]
        %v2296 = vld [vmem:[%s2284 + $0x58] sm:$0xff]
        %v2298 = vsel %vm1569, %v2283, 0
        %2300 = vmatprep.subr.mxu0 0.0
        %2301 = vmatpush1.msra.mxu0 %v2285
        %2302 = vmatprep.subr.mxu0 0.0
        %2303 = vmatpush1.msra.mxu0 %v2286
        %2304 = vmatprep.subr.mxu0 0.0
        %2305 = vmatpush1.msra.mxu0 %v2287
        %2306 = vmatprep.subr.mxu0 0.0
        %2307 = vmatpush1.msra.mxu0 %v2288
        %2308 = vmatprep.subr.mxu0 0.0
        %2309 = vmatpush1.msra.mxu0 %v2289
        %2310 = vmatprep.subr.mxu0 0.0
        %2311 = vmatpush1.msra.mxu0 %v2290
        %2312 = vmatprep.subr.mxu0 0.0
        %2313 = vmatpush1.msra.mxu0 %v2291
        %2314 = vmatprep.subr.mxu0 0.0
        %2315 = vmatpush1.msra.mxu0 %v2292
        %2316 = vmatprep.subr.mxu0 0.0
        %2317 = vmatpush1.msra.mxu0 %v2293
        %2318 = vmatprep.subr.mxu0 0.0
        %2319 = vmatpush1.msra.mxu0 %v2294
        %2320 = vmatprep.subr.mxu0 0.0
        %2321 = vmatpush1.msra.mxu0 %v2295
        %2322 = vmatprep.subr.mxu0 0.0
        %2323 = vmatpush1.msra.mxu0 %v2296
        %2324 = vmatprep.subr.mxu0 0.0
        %2325 = vmatpush1.msra.mxu0 0.0
        %2326 = vmatprep.subr.mxu0 0.0
        %2327 = vmatpush1.msra.mxu0 0.0
        %2328 = vmatprep.subr.mxu0 0.0
        %2329 = vmatpush1.msra.mxu0 0.0
        %2330 = vmatprep.subr.mxu0 0.0
        %2331 = vmatpush1.msra.mxu0 0.0
        %2332 = vmatprep.subr.mxu0 0.0
        %2333 = vmatpush1.msra.mxu0 0.0
        %2334 = vmatprep.subr.mxu0 0.0
        %2335 = vmatpush1.msra.mxu0 0.0
        %2336 = vmatprep.subr.mxu0 0.0
        %2337 = vmatpush1.msra.mxu0 0.0
        %2338 = vmatprep.subr.mxu0 0.0
        %2339 = vmatpush1.msra.mxu0 0.0
        %2340 = vmatprep.subr.mxu0 0.0
        %2341 = vmatpush1.msra.mxu0 0.0
        %2342 = vmatprep.subr.mxu0 0.0
        %2343 = vmatpush1.msra.mxu0 0.0
        %2344 = vmatprep.subr.mxu0 0.0
        %2345 = vmatpush1.msra.mxu0 0.0
        %2346 = vmatprep.subr.mxu0 0.0
        %2347 = vmatpush1.msra.mxu0 0.0
        %2348 = vmatprep.subr.mxu0 0.0
        %2349 = vmatpush1.msra.mxu0 0.0
        %2350 = vmatprep.subr.mxu0 0.0
        %2351 = vmatpush1.msra.mxu0 0.0
        %2352 = vmatprep.subr.mxu0 0.0
        %2353 = vmatpush1.msra.mxu0 0.0
        %2354 = vmatprep.subr.mxu0 0.0
        %2355 = vmatpush1.msra.mxu0 0.0
        %2356 = vmatprep.subr.mxu0 0.0
        %2357 = vmatpush1.msra.mxu0 0.0
        %2358 = vmatprep.subr.mxu0 0.0
        %2359 = vmatpush1.msra.mxu0 0.0
        %2360 = vmatprep.subr.mxu0 0.0
        %2361 = vmatpush1.msra.mxu0 0.0
        %2362 = vmatprep.subr.mxu0 0.0
        %2363 = vmatpush1.msra.mxu0 0.0
        %2364 = vmatprep.mubr.f32.mxu0 0.0
        %2365 = vmatmul.mubr.f32.gmra.mrb[0].mxu0 %v2298
        %v2366 = vpop.f32.mrb[0].mxu0
        %v2367 = vadd.f32 0.0, %v2366
        %v2368 = vpop.f32.mrb[0].mxu0
        %2369 = vdwg.mxu0
        %v2370 = vadd.f32 %v2278, %v2367
        %v2372 = vlaneseq
        %v2373 = vshrl.u32 %v2372, 7
        %v2374 = vsub.s32 0, %v2373
        %v2375 = vrot.slane %v2105, %v2374
        %v2377 = vmul.f32 %v2370, %v2375
        %v2379 = vlaneseq
        %v2380 = vshrl.u32 %v2379, 7
        %v2381 = vsub.s32 0, %v2380
        %v2382 = vrot.slane %v2106, %v2381
        %v2384 = vadd.f32 %v2377, %v2382
        %v2385 = vmax.f32 %v2384, 0.0
        %v2386 = vld [vmem:[%s15] sm:$0x1]
        %v2387 = vld [vmem:[%s16] sm:$0x1]
        %v2389 = vrot.slane %v2385, 7
        %v2391 = vsel %vm802, 0.0, %v2389
        %v2392 = vld [vmem:[%s14] sm:$0xff]
        %v2393 = vld [vmem:[%s14 + $0x8] sm:$0xff]
        %v2394 = vld [vmem:[%s14 + $0x10] sm:$0xff]
        %v2395 = vld [vmem:[%s14 + $0x18] sm:$0xff]
        %v2396 = vld [vmem:[%s14 + $0x20] sm:$0xff]
        %v2397 = vld [vmem:[%s14 + $0x28] sm:$0xff]
        %v2398 = vld [vmem:[%s14 + $0x30] sm:$0xff]
        %v2399 = vld [vmem:[%s14 + $0x38] sm:$0xff]
        %v2400 = vld [vmem:[%s14 + $0x40] sm:$0xff]
        %v2401 = vld [vmem:[%s14 + $0x48] sm:$0xff]
        %v2402 = vld [vmem:[%s14 + $0x50] sm:$0xff]
        %v2403 = vld [vmem:[%s14 + $0x58] sm:$0xff]
        %s2404 = scalar_lea.vmem %s14, 96
        %v2405 = vld [vmem:[%s2404] sm:$0xff]
        %v2406 = vld [vmem:[%s2404 + $0x8] sm:$0xff]
        %v2407 = vld [vmem:[%s2404 + $0x10] sm:$0xff]
        %v2408 = vld [vmem:[%s2404 + $0x18] sm:$0xff]
        %v2409 = vld [vmem:[%s2404 + $0x20] sm:$0xff]
        %v2410 = vld [vmem:[%s2404 + $0x28] sm:$0xff]
        %v2411 = vld [vmem:[%s2404 + $0x30] sm:$0xff]
        %v2412 = vld [vmem:[%s2404 + $0x38] sm:$0xff]
        %v2413 = vld [vmem:[%s2404 + $0x40] sm:$0xff]
        %v2414 = vld [vmem:[%s2404 + $0x48] sm:$0xff]
        %v2415 = vld [vmem:[%s2404 + $0x50] sm:$0xff]
        %v2416 = vld [vmem:[%s2404 + $0x58] sm:$0xff]
        %v2417 = vsel %vm1569, %v2385, 0
        %2419 = vmatprep.subr.mxu0 0.0
        %2420 = vmatpush1.msra.mxu0 %v2405
        %2421 = vmatprep.subr.mxu0 0.0
        %2422 = vmatpush1.msra.mxu0 %v2406
        %2423 = vmatprep.subr.mxu0 0.0
        %2424 = vmatpush1.msra.mxu0 %v2407
        %2425 = vmatprep.subr.mxu0 0.0
        %2426 = vmatpush1.msra.mxu0 %v2408
        %2427 = vmatprep.subr.mxu0 0.0
        %2428 = vmatpush1.msra.mxu0 %v2409
        %2429 = vmatprep.subr.mxu0 0.0
        %2430 = vmatpush1.msra.mxu0 %v2410
        %2431 = vmatprep.subr.mxu0 0.0
        %2432 = vmatpush1.msra.mxu0 %v2411
        %2433 = vmatprep.subr.mxu0 0.0
        %2434 = vmatpush1.msra.mxu0 %v2412
        %2435 = vmatprep.subr.mxu0 0.0
        %2436 = vmatpush1.msra.mxu0 %v2413
        %2437 = vmatprep.subr.mxu0 0.0
        %2438 = vmatpush1.msra.mxu0 %v2414
        %2439 = vmatprep.subr.mxu0 0.0
        %2440 = vmatpush1.msra.mxu0 %v2415
        %2441 = vmatprep.subr.mxu0 0.0
        %2442 = vmatpush1.msra.mxu0 %v2416
        %2443 = vmatprep.subr.mxu0 0.0
        %2444 = vmatpush1.msra.mxu0 0.0
        %2445 = vmatprep.subr.mxu0 0.0
        %2446 = vmatpush1.msra.mxu0 0.0
        %2447 = vmatprep.subr.mxu0 0.0
        %2448 = vmatpush1.msra.mxu0 0.0
        %2449 = vmatprep.subr.mxu0 0.0
        %2450 = vmatpush1.msra.mxu0 0.0
        %2451 = vmatprep.subr.mxu0 0.0
        %2452 = vmatpush1.msra.mxu0 0.0
        %2453 = vmatprep.subr.mxu0 0.0
        %2454 = vmatpush1.msra.mxu0 0.0
        %2455 = vmatprep.subr.mxu0 0.0
        %2456 = vmatpush1.msra.mxu0 0.0
        %2457 = vmatprep.subr.mxu0 0.0
        %2458 = vmatpush1.msra.mxu0 0.0
        %2459 = vmatprep.subr.mxu0 0.0
        %2460 = vmatpush1.msra.mxu0 0.0
        %2461 = vmatprep.subr.mxu0 0.0
        %2462 = vmatpush1.msra.mxu0 0.0
        %2463 = vmatprep.subr.mxu0 0.0
        %2464 = vmatpush1.msra.mxu0 0.0
        %2465 = vmatprep.subr.mxu0 0.0
        %2466 = vmatpush1.msra.mxu0 0.0
        %2467 = vmatprep.subr.mxu0 0.0
        %2468 = vmatpush1.msra.mxu0 0.0
        %2469 = vmatprep.subr.mxu0 0.0
        %2470 = vmatpush1.msra.mxu0 0.0
        %2471 = vmatprep.subr.mxu0 0.0
        %2472 = vmatpush1.msra.mxu0 0.0
        %2473 = vmatprep.subr.mxu0 0.0
        %2474 = vmatpush1.msra.mxu0 0.0
        %2475 = vmatprep.subr.mxu0 0.0
        %2476 = vmatpush1.msra.mxu0 0.0
        %2477 = vmatprep.subr.mxu0 0.0
        %2478 = vmatpush1.msra.mxu0 0.0
        %2479 = vmatprep.subr.mxu0 0.0
        %2480 = vmatpush1.msra.mxu0 0.0
        %2481 = vmatprep.subr.mxu0 0.0
        %2482 = vmatpush1.msra.mxu0 0.0
        %2483 = vmatprep.mubr.f32.mxu0 0.0
        %2484 = vmatmul.mubr.f32.gmra.mrb[0].mxu0 %v2417
        %v2485 = vpop.f32.mrb[0].mxu0
        %v2486 = vadd.f32 0.0, %v2485
        %v2487 = vpop.f32.mrb[0].mxu0
        %2488 = vdwg.mxu0
        %v2490 = vsel %vm1569, %v2391, 0
        %2492 = vmatprep.subr.mxu0 0.0
        %2493 = vmatpush1.msra.mxu0 %v2392
        %2494 = vmatprep.subr.mxu0 0.0
        %2495 = vmatpush1.msra.mxu0 %v2393
        %2496 = vmatprep.subr.mxu0 0.0
        %2497 = vmatpush1.msra.mxu0 %v2394
        %2498 = vmatprep.subr.mxu0 0.0
        %2499 = vmatpush1.msra.mxu0 %v2395
        %2500 = vmatprep.subr.mxu0 0.0
        %2501 = vmatpush1.msra.mxu0 %v2396
        %2502 = vmatprep.subr.mxu0 0.0
        %2503 = vmatpush1.msra.mxu0 %v2397
        %2504 = vmatprep.subr.mxu0 0.0
        %2505 = vmatpush1.msra.mxu0 %v2398
        %2506 = vmatprep.subr.mxu0 0.0
        %2507 = vmatpush1.msra.mxu0 %v2399
        %2508 = vmatprep.subr.mxu0 0.0
        %2509 = vmatpush1.msra.mxu0 %v2400
        %2510 = vmatprep.subr.mxu0 0.0
        %2511 = vmatpush1.msra.mxu0 %v2401
        %2512 = vmatprep.subr.mxu0 0.0
        %2513 = vmatpush1.msra.mxu0 %v2402
        %2514 = vmatprep.subr.mxu0 0.0
        %2515 = vmatpush1.msra.mxu0 %v2403
        %2516 = vmatprep.subr.mxu0 0.0
        %2517 = vmatpush1.msra.mxu0 0.0
        %2518 = vmatprep.subr.mxu0 0.0
        %2519 = vmatpush1.msra.mxu0 0.0
        %2520 = vmatprep.subr.mxu0 0.0
        %2521 = vmatpush1.msra.mxu0 0.0
        %2522 = vmatprep.subr.mxu0 0.0
        %2523 = vmatpush1.msra.mxu0 0.0
        %2524 = vmatprep.subr.mxu0 0.0
        %2525 = vmatpush1.msra.mxu0 0.0
        %2526 = vmatprep.subr.mxu0 0.0
        %2527 = vmatpush1.msra.mxu0 0.0
        %2528 = vmatprep.subr.mxu0 0.0
        %2529 = vmatpush1.msra.mxu0 0.0
        %2530 = vmatprep.subr.mxu0 0.0
        %2531 = vmatpush1.msra.mxu0 0.0
        %2532 = vmatprep.subr.mxu0 0.0
        %2533 = vmatpush1.msra.mxu0 0.0
        %2534 = vmatprep.subr.mxu0 0.0
        %2535 = vmatpush1.msra.mxu0 0.0
        %2536 = vmatprep.subr.mxu0 0.0
        %2537 = vmatpush1.msra.mxu0 0.0
        %2538 = vmatprep.subr.mxu0 0.0
        %2539 = vmatpush1.msra.mxu0 0.0
        %2540 = vmatprep.subr.mxu0 0.0
        %2541 = vmatpush1.msra.mxu0 0.0
        %2542 = vmatprep.subr.mxu0 0.0
        %2543 = vmatpush1.msra.mxu0 0.0
        %2544 = vmatprep.subr.mxu0 0.0
        %2545 = vmatpush1.msra.mxu0 0.0
        %2546 = vmatprep.subr.mxu0 0.0
        %2547 = vmatpush1.msra.mxu0 0.0
        %2548 = vmatprep.subr.mxu0 0.0
        %2549 = vmatpush1.msra.mxu0 0.0
        %2550 = vmatprep.subr.mxu0 0.0
        %2551 = vmatpush1.msra.mxu0 0.0
        %2552 = vmatprep.subr.mxu0 0.0
        %2553 = vmatpush1.msra.mxu0 0.0
        %2554 = vmatprep.subr.mxu0 0.0
        %2555 = vmatpush1.msra.mxu0 0.0
        %2556 = vmatprep.mubr.f32.mxu0 0.0
        %2557 = vmatmul.mubr.f32.gmra.mrb[0].mxu0 %v2490
        %v2558 = vpop.f32.mrb[0].mxu0
        %v2559 = vadd.f32 %v2486, %v2558
        %v2560 = vpop.f32.mrb[0].mxu0
        %2561 = vdwg.mxu0
        %v2562 = vrot.slane %v2385, 1
        %v2564 = vsel %vm1718, %v2562, 0.0
        %s2565 = scalar_lea.vmem %s14, 192
        %v2566 = vld [vmem:[%s2565] sm:$0xff]
        %v2567 = vld [vmem:[%s2565 + $0x8] sm:$0xff]
        %v2568 = vld [vmem:[%s2565 + $0x10] sm:$0xff]
        %v2569 = vld [vmem:[%s2565 + $0x18] sm:$0xff]
        %v2570 = vld [vmem:[%s2565 + $0x20] sm:$0xff]
        %v2571 = vld [vmem:[%s2565 + $0x28] sm:$0xff]
        %v2572 = vld [vmem:[%s2565 + $0x30] sm:$0xff]
        %v2573 = vld [vmem:[%s2565 + $0x38] sm:$0xff]
        %v2574 = vld [vmem:[%s2565 + $0x40] sm:$0xff]
        %v2575 = vld [vmem:[%s2565 + $0x48] sm:$0xff]
        %v2576 = vld [vmem:[%s2565 + $0x50] sm:$0xff]
        %v2577 = vld [vmem:[%s2565 + $0x58] sm:$0xff]
        %v2579 = vsel %vm1569, %v2564, 0
        %2581 = vmatprep.subr.mxu0 0.0
        %2582 = vmatpush1.msra.mxu0 %v2566
        %2583 = vmatprep.subr.mxu0 0.0
        %2584 = vmatpush1.msra.mxu0 %v2567
        %2585 = vmatprep.subr.mxu0 0.0
        %2586 = vmatpush1.msra.mxu0 %v2568
        %2587 = vmatprep.subr.mxu0 0.0
        %2588 = vmatpush1.msra.mxu0 %v2569
        %2589 = vmatprep.subr.mxu0 0.0
        %2590 = vmatpush1.msra.mxu0 %v2570
        %2591 = vmatprep.subr.mxu0 0.0
        %2592 = vmatpush1.msra.mxu0 %v2571
        %2593 = vmatprep.subr.mxu0 0.0
        %2594 = vmatpush1.msra.mxu0 %v2572
        %2595 = vmatprep.subr.mxu0 0.0
        %2596 = vmatpush1.msra.mxu0 %v2573
        %2597 = vmatprep.subr.mxu0 0.0
        %2598 = vmatpush1.msra.mxu0 %v2574
        %2599 = vmatprep.subr.mxu0 0.0
        %2600 = vmatpush1.msra.mxu0 %v2575
        %2601 = vmatprep.subr.mxu0 0.0
        %2602 = vmatpush1.msra.mxu0 %v2576
        %2603 = vmatprep.subr.mxu0 0.0
        %2604 = vmatpush1.msra.mxu0 %v2577
        %2605 = vmatprep.subr.mxu0 0.0
        %2606 = vmatpush1.msra.mxu0 0.0
        %2607 = vmatprep.subr.mxu0 0.0
        %2608 = vmatpush1.msra.mxu0 0.0
        %2609 = vmatprep.subr.mxu0 0.0
        %2610 = vmatpush1.msra.mxu0 0.0
        %2611 = vmatprep.subr.mxu0 0.0
        %2612 = vmatpush1.msra.mxu0 0.0
        %2613 = vmatprep.subr.mxu0 0.0
        %2614 = vmatpush1.msra.mxu0 0.0
        %2615 = vmatprep.subr.mxu0 0.0
        %2616 = vmatpush1.msra.mxu0 0.0
        %2617 = vmatprep.subr.mxu0 0.0
        %2618 = vmatpush1.msra.mxu0 0.0
        %2619 = vmatprep.subr.mxu0 0.0
        %2620 = vmatpush1.msra.mxu0 0.0
        %2621 = vmatprep.subr.mxu0 0.0
        %2622 = vmatpush1.msra.mxu0 0.0
        %2623 = vmatprep.subr.mxu0 0.0
        %2624 = vmatpush1.msra.mxu0 0.0
        %2625 = vmatprep.subr.mxu0 0.0
        %2626 = vmatpush1.msra.mxu0 0.0
        %2627 = vmatprep.subr.mxu0 0.0
        %2628 = vmatpush1.msra.mxu0 0.0
        %2629 = vmatprep.subr.mxu0 0.0
        %2630 = vmatpush1.msra.mxu0 0.0
        %2631 = vmatprep.subr.mxu0 0.0
        %2632 = vmatpush1.msra.mxu0 0.0
        %2633 = vmatprep.subr.mxu0 0.0
        %2634 = vmatpush1.msra.mxu0 0.0
        %2635 = vmatprep.subr.mxu0 0.0
        %2636 = vmatpush1.msra.mxu0 0.0
        %2637 = vmatprep.subr.mxu0 0.0
        %2638 = vmatpush1.msra.mxu0 0.0
        %2639 = vmatprep.subr.mxu0 0.0
        %2640 = vmatpush1.msra.mxu0 0.0
        %2641 = vmatprep.subr.mxu0 0.0
        %2642 = vmatpush1.msra.mxu0 0.0
        %2643 = vmatprep.subr.mxu0 0.0
        %2644 = vmatpush1.msra.mxu0 0.0
        %2645 = vmatprep.mubr.f32.mxu0 0.0
        %2646 = vmatmul.mubr.f32.gmra.mrb[0].mxu0 %v2579
        %v2647 = vpop.f32.mrb[0].mxu0
        %v2648 = vadd.f32 0.0, %v2647
        %v2649 = vpop.f32.mrb[0].mxu0
        %2650 = vdwg.mxu0
        %v2651 = vadd.f32 %v2559, %v2648
        %v2653 = vlaneseq
        %v2654 = vshrl.u32 %v2653, 7
        %v2655 = vsub.s32 0, %v2654
        %v2656 = vrot.slane %v2386, %v2655
        %v2658 = vmul.f32 %v2651, %v2656
        %v2660 = vlaneseq
        %v2661 = vshrl.u32 %v2660, 7
        %v2662 = vsub.s32 0, %v2661
        %v2663 = vrot.slane %v2387, %v2662
        %v2665 = vadd.f32 %v2658, %v2663
        %v2666 = vadd.f32 %v2665, %v2104
        %v2667 = vmax.f32 %v2666, 0.0
        %v2669 = vrot.slane %v2667, 1
        %v2671 = vsel %vm1718, %v2669, 0.0
        %s2672 = scalar_lea.vmem %s17, 96
        %v2673 = vld [vmem:[%s2672] sm:$0xff]
        %v2674 = vld [vmem:[%s2672 + $0x8] sm:$0xff]
        %v2675 = vld [vmem:[%s2672 + $0x10] sm:$0xff]
        %v2676 = vld [vmem:[%s2672 + $0x18] sm:$0xff]
        %v2677 = vld [vmem:[%s2672 + $0x20] sm:$0xff]
        %v2678 = vld [vmem:[%s2672 + $0x28] sm:$0xff]
        %v2679 = vld [vmem:[%s2672 + $0x30] sm:$0xff]
        %v2680 = vld [vmem:[%s2672 + $0x38] sm:$0xff]
        %v2681 = vld [vmem:[%s2672 + $0x40] sm:$0xff]
        %v2682 = vld [vmem:[%s2672 + $0x48] sm:$0xff]
        %v2683 = vld [vmem:[%s2672 + $0x50] sm:$0xff]
        %v2684 = vld [vmem:[%s2672 + $0x58] sm:$0xff]
        %v2685 = vsel %vm1569, %v2667, 0
        %2687 = vmatprep.subr.mxu0 0.0
        %2688 = vmatpush1.msra.mxu0 %v2673
        %2689 = vmatprep.subr.mxu0 0.0
        %2690 = vmatpush1.msra.mxu0 %v2674
        %2691 = vmatprep.subr.mxu0 0.0
        %2692 = vmatpush1.msra.mxu0 %v2675
        %2693 = vmatprep.subr.mxu0 0.0
        %2694 = vmatpush1.msra.mxu0 %v2676
        %2695 = vmatprep.subr.mxu0 0.0
        %2696 = vmatpush1.msra.mxu0 %v2677
        %2697 = vmatprep.subr.mxu0 0.0
        %2698 = vmatpush1.msra.mxu0 %v2678
        %2699 = vmatprep.subr.mxu0 0.0
        %2700 = vmatpush1.msra.mxu0 %v2679
        %2701 = vmatprep.subr.mxu0 0.0
        %2702 = vmatpush1.msra.mxu0 %v2680
        %2703 = vmatprep.subr.mxu0 0.0
        %2704 = vmatpush1.msra.mxu0 %v2681
        %2705 = vmatprep.subr.mxu0 0.0
        %2706 = vmatpush1.msra.mxu0 %v2682
        %2707 = vmatprep.subr.mxu0 0.0
        %2708 = vmatpush1.msra.mxu0 %v2683
        %2709 = vmatprep.subr.mxu0 0.0
        %2710 = vmatpush1.msra.mxu0 %v2684
        %2711 = vmatprep.subr.mxu0 0.0
        %2712 = vmatpush1.msra.mxu0 0.0
        %2713 = vmatprep.subr.mxu0 0.0
        %2714 = vmatpush1.msra.mxu0 0.0
        %2715 = vmatprep.subr.mxu0 0.0
        %2716 = vmatpush1.msra.mxu0 0.0
        %2717 = vmatprep.subr.mxu0 0.0
        %2718 = vmatpush1.msra.mxu0 0.0
        %2719 = vmatprep.subr.mxu0 0.0
        %2720 = vmatpush1.msra.mxu0 0.0
        %2721 = vmatprep.subr.mxu0 0.0
        %2722 = vmatpush1.msra.mxu0 0.0
        %2723 = vmatprep.subr.mxu0 0.0
        %2724 = vmatpush1.msra.mxu0 0.0
        %2725 = vmatprep.subr.mxu0 0.0
        %2726 = vmatpush1.msra.mxu0 0.0
        %2727 = vmatprep.subr.mxu0 0.0
        %2728 = vmatpush1.msra.mxu0 0.0
        %2729 = vmatprep.subr.mxu0 0.0
        %2730 = vmatpush1.msra.mxu0 0.0
        %2731 = vmatprep.subr.mxu0 0.0
        %2732 = vmatpush1.msra.mxu0 0.0
        %2733 = vmatprep.subr.mxu0 0.0
        %2734 = vmatpush1.msra.mxu0 0.0
        %2735 = vmatprep.subr.mxu0 0.0
        %2736 = vmatpush1.msra.mxu0 0.0
        %2737 = vmatprep.subr.mxu0 0.0
        %2738 = vmatpush1.msra.mxu0 0.0
        %2739 = vmatprep.subr.mxu0 0.0
        %2740 = vmatpush1.msra.mxu0 0.0
        %2741 = vmatprep.subr.mxu0 0.0
        %2742 = vmatpush1.msra.mxu0 0.0
        %2743 = vmatprep.subr.mxu0 0.0
        %2744 = vmatpush1.msra.mxu0 0.0
        %2745 = vmatprep.subr.mxu0 0.0
        %2746 = vmatpush1.msra.mxu0 0.0
        %2747 = vmatprep.subr.mxu0 0.0
        %2748 = vmatpush1.msra.mxu0 0.0
        %2749 = vmatprep.subr.mxu0 0.0
        %2750 = vmatpush1.msra.mxu0 0.0
        %2751 = vmatprep.mubr.f32.mxu0 0.0
        %2752 = vmatmul.mubr.f32.gmra.mrb[0].mxu0 %v2685
        %v2753 = vpop.f32.mrb[0].mxu0
        %v2754 = vadd.f32 0.0, %v2753
        %v2755 = vpop.f32.mrb[0].mxu0
        %2756 = vdwg.mxu0
        %s2757 = scalar_lea.vmem %s17, 192
        %v2758 = vld [vmem:[%s2757] sm:$0xff]
        %v2759 = vld [vmem:[%s2757 + $0x8] sm:$0xff]
        %v2760 = vld [vmem:[%s2757 + $0x10] sm:$0xff]
        %v2761 = vld [vmem:[%s2757 + $0x18] sm:$0xff]
        %v2762 = vld [vmem:[%s2757 + $0x20] sm:$0xff]
        %v2763 = vld [vmem:[%s2757 + $0x28] sm:$0xff]
        %v2764 = vld [vmem:[%s2757 + $0x30] sm:$0xff]
        %v2765 = vld [vmem:[%s2757 + $0x38] sm:$0xff]
        %v2766 = vld [vmem:[%s2757 + $0x40] sm:$0xff]
        %v2767 = vld [vmem:[%s2757 + $0x48] sm:$0xff]
        %v2768 = vld [vmem:[%s2757 + $0x50] sm:$0xff]
        %v2769 = vld [vmem:[%s2757 + $0x58] sm:$0xff]
        %v2770 = vld [vmem:[%s17] sm:$0xff]
        %v2771 = vld [vmem:[%s17 + $0x8] sm:$0xff]
        %v2772 = vld [vmem:[%s17 + $0x10] sm:$0xff]
        %v2773 = vld [vmem:[%s17 + $0x18] sm:$0xff]
        %v2774 = vld [vmem:[%s17 + $0x20] sm:$0xff]
        %v2775 = vld [vmem:[%s17 + $0x28] sm:$0xff]
        %v2776 = vld [vmem:[%s17 + $0x30] sm:$0xff]
        %v2777 = vld [vmem:[%s17 + $0x38] sm:$0xff]
        %v2778 = vld [vmem:[%s17 + $0x40] sm:$0xff]
        %v2779 = vld [vmem:[%s17 + $0x48] sm:$0xff]
        %v2780 = vld [vmem:[%s17 + $0x50] sm:$0xff]
        %v2781 = vld [vmem:[%s17 + $0x58] sm:$0xff]
        %v2783 = vsel %vm1569, %v2671, 0
        %2785 = vmatprep.subr.mxu0 0.0
        %2786 = vmatpush1.msra.mxu0 %v2770
        %2787 = vmatprep.subr.mxu0 0.0
        %2788 = vmatpush1.msra.mxu0 %v2771
        %2789 = vmatprep.subr.mxu0 0.0
        %2790 = vmatpush1.msra.mxu0 %v2772
        %2791 = vmatprep.subr.mxu0 0.0
        %2792 = vmatpush1.msra.mxu0 %v2773
        %2793 = vmatprep.subr.mxu0 0.0
        %2794 = vmatpush1.msra.mxu0 %v2774
        %2795 = vmatprep.subr.mxu0 0.0
        %2796 = vmatpush1.msra.mxu0 %v2775
        %2797 = vmatprep.subr.mxu0 0.0
        %2798 = vmatpush1.msra.mxu0 %v2776
        %2799 = vmatprep.subr.mxu0 0.0
        %2800 = vmatpush1.msra.mxu0 %v2777
        %2801 = vmatprep.subr.mxu0 0.0
        %2802 = vmatpush1.msra.mxu0 %v2778
        %2803 = vmatprep.subr.mxu0 0.0
        %2804 = vmatpush1.msra.mxu0 %v2779
        %2805 = vmatprep.subr.mxu0 0.0
        %2806 = vmatpush1.msra.mxu0 %v2780
        %2807 = vmatprep.subr.mxu0 0.0
        %2808 = vmatpush1.msra.mxu0 %v2781
        %2809 = vmatprep.subr.mxu0 0.0
        %2810 = vmatpush1.msra.mxu0 0.0
        %2811 = vmatprep.subr.mxu0 0.0
        %2812 = vmatpush1.msra.mxu0 0.0
        %2813 = vmatprep.subr.mxu0 0.0
        %2814 = vmatpush1.msra.mxu0 0.0
        %2815 = vmatprep.subr.mxu0 0.0
        %2816 = vmatpush1.msra.mxu0 0.0
        %2817 = vmatprep.subr.mxu0 0.0
        %2818 = vmatpush1.msra.mxu0 0.0
        %2819 = vmatprep.subr.mxu0 0.0
        %2820 = vmatpush1.msra.mxu0 0.0
        %2821 = vmatprep.subr.mxu0 0.0
        %2822 = vmatpush1.msra.mxu0 0.0
        %2823 = vmatprep.subr.mxu0 0.0
        %2824 = vmatpush1.msra.mxu0 0.0
        %2825 = vmatprep.subr.mxu0 0.0
        %2826 = vmatpush1.msra.mxu0 0.0
        %2827 = vmatprep.subr.mxu0 0.0
        %2828 = vmatpush1.msra.mxu0 0.0
        %2829 = vmatprep.subr.mxu0 0.0
        %2830 = vmatpush1.msra.mxu0 0.0
        %2831 = vmatprep.subr.mxu0 0.0
        %2832 = vmatpush1.msra.mxu0 0.0
        %2833 = vmatprep.subr.mxu0 0.0
        %2834 = vmatpush1.msra.mxu0 0.0
        %2835 = vmatprep.subr.mxu0 0.0
        %2836 = vmatpush1.msra.mxu0 0.0
        %2837 = vmatprep.subr.mxu0 0.0
        %2838 = vmatpush1.msra.mxu0 0.0
        %2839 = vmatprep.subr.mxu0 0.0
        %2840 = vmatpush1.msra.mxu0 0.0
        %2841 = vmatprep.subr.mxu0 0.0
        %2842 = vmatpush1.msra.mxu0 0.0
        %2843 = vmatprep.subr.mxu0 0.0
        %2844 = vmatpush1.msra.mxu0 0.0
        %2845 = vmatprep.subr.mxu0 0.0
        %2846 = vmatpush1.msra.mxu0 0.0
        %2847 = vmatprep.subr.mxu0 0.0
        %2848 = vmatpush1.msra.mxu0 0.0
        %2849 = vmatprep.mubr.f32.mxu0 0.0
        %2850 = vmatmul.mubr.f32.gmra.mrb[0].mxu0 %v2783
        %v2851 = vpop.f32.mrb[0].mxu0
        %v2852 = vadd.f32 0.0, %v2851
        %v2853 = vpop.f32.mrb[0].mxu0
        %2854 = vdwg.mxu0
        %2855 = vmatprep.subr.mxu0 0.0
        %2856 = vmatpush1.msra.mxu0 %v2758
        %2857 = vmatprep.subr.mxu0 0.0
        %2858 = vmatpush1.msra.mxu0 %v2759
        %2859 = vmatprep.subr.mxu0 0.0
        %2860 = vmatpush1.msra.mxu0 %v2760
        %2861 = vmatprep.subr.mxu0 0.0
        %2862 = vmatpush1.msra.mxu0 %v2761
        %2863 = vmatprep.subr.mxu0 0.0
        %2864 = vmatpush1.msra.mxu0 %v2762
        %2865 = vmatprep.subr.mxu0 0.0
        %2866 = vmatpush1.msra.mxu0 %v2763
        %2867 = vmatprep.subr.mxu0 0.0
        %2868 = vmatpush1.msra.mxu0 %v2764
        %2869 = vmatprep.subr.mxu0 0.0
        %2870 = vmatpush1.msra.mxu0 %v2765
        %2871 = vmatprep.subr.mxu0 0.0
        %2872 = vmatpush1.msra.mxu0 %v2766
        %2873 = vmatprep.subr.mxu0 0.0
        %2874 = vmatpush1.msra.mxu0 %v2767
        %2875 = vmatprep.subr.mxu0 0.0
        %2876 = vmatpush1.msra.mxu0 %v2768
        %2877 = vmatprep.subr.mxu0 0.0
        %2878 = vmatpush1.msra.mxu0 %v2769
        %2879 = vmatprep.subr.mxu0 0.0
        %2880 = vmatpush1.msra.mxu0 0.0
        %2881 = vmatprep.subr.mxu0 0.0
        %2882 = vmatpush1.msra.mxu0 0.0
        %2883 = vmatprep.subr.mxu0 0.0
        %2884 = vmatpush1.msra.mxu0 0.0
        %2885 = vmatprep.subr.mxu0 0.0
        %2886 = vmatpush1.msra.mxu0 0.0
        %2887 = vmatprep.subr.mxu0 0.0
        %2888 = vmatpush1.msra.mxu0 0.0
        %2889 = vmatprep.subr.mxu0 0.0
        %2890 = vmatpush1.msra.mxu0 0.0
        %2891 = vmatprep.subr.mxu0 0.0
        %2892 = vmatpush1.msra.mxu0 0.0
        %2893 = vmatprep.subr.mxu0 0.0
        %2894 = vmatpush1.msra.mxu0 0.0
        %2895 = vmatprep.subr.mxu0 0.0
        %2896 = vmatpush1.msra.mxu0 0.0
        %2897 = vmatprep.subr.mxu0 0.0
        %2898 = vmatpush1.msra.mxu0 0.0
        %2899 = vmatprep.subr.mxu0 0.0
        %2900 = vmatpush1.msra.mxu0 0.0
        %2901 = vmatprep.subr.mxu0 0.0
        %2902 = vmatpush1.msra.mxu0 0.0
        %2903 = vmatprep.subr.mxu0 0.0
        %2904 = vmatpush1.msra.mxu0 0.0
        %2905 = vmatprep.subr.mxu0 0.0
        %2906 = vmatpush1.msra.mxu0 0.0
        %2907 = vmatprep.subr.mxu0 0.0
        %2908 = vmatpush1.msra.mxu0 0.0
        %2909 = vmatprep.subr.mxu0 0.0
        %2910 = vmatpush1.msra.mxu0 0.0
        %2911 = vmatprep.subr.mxu0 0.0
        %2912 = vmatpush1.msra.mxu0 0.0
        %2913 = vmatprep.subr.mxu0 0.0
        %2914 = vmatpush1.msra.mxu0 0.0
        %2915 = vmatprep.subr.mxu0 0.0
        %2916 = vmatpush1.msra.mxu0 0.0
        %2917 = vmatprep.subr.mxu0 0.0
        %2918 = vmatpush1.msra.mxu0 0.0
        %2919 = vmatprep.mubr.f32.mxu0 0.0
        %2920 = vmatmul.mubr.f32.gmra.mrb[0].mxu0 %v2685
        %v2921 = vpop.f32.mrb[0].mxu0
        %v2922 = vadd.f32 %v2852, %v2921
        %v2923 = vpop.f32.mrb[0].mxu0
        %2924 = vdwg.mxu0
        %v2925 = vld [vmem:[%s18] sm:$0x1]
        %v2927 = vlaneseq
        %v2928 = vshrl.u32 %v2927, 7
        %v2929 = vsub.s32 0, %v2928
        %v2930 = vrot.slane %v2925, %v2929
        %v2932 = vmul.f32 %v2754, %v2930
        %v2933 = vld [vmem:[%s19] sm:$0x1]
        %v2935 = vlaneseq
        %v2936 = vshrl.u32 %v2935, 7
        %v2937 = vsub.s32 0, %v2936
        %v2938 = vrot.slane %v2933, %v2937
        %v2940 = vadd.f32 %v2932, %v2938
        %v2941 = vmax.f32 %v2940, 0.0
        %v2942 = vmul.f32 %v2922, %v2930
        %v2943 = vadd.f32 %v2942, %v2938
        %v2944 = vmax.f32 %v2943, 0.0
        %v2946 = vrot.slane %v2944, 4
        %vm2948 = vcmask 1043456
        %v2949 = vsel %vm2948, %v2941, %v2946
        %v2951 = vrot.slane %v2941, 1
        %v2953 = vsel %vm1718, %v2951, 0.0
        %v2955 = vrot.slane %v2953, 4
        %v2957 = vsel %vm2948, %v2944, %v2955
        %s2958 = scalar_lea.vmem %s20, 64
        %v2959 = vld [vmem:[%s2958] sm:$0xff]
        %v2960 = vld [vmem:[%s2958 + $0x8] sm:$0xff]
        %v2961 = vld [vmem:[%s2958 + $0x10] sm:$0xff]
        %v2962 = vld [vmem:[%s2958 + $0x18] sm:$0xff]
        %v2963 = vld [vmem:[%s2958 + $0x20] sm:$0xff]
        %v2964 = vld [vmem:[%s2958 + $0x28] sm:$0xff]
        %v2965 = vld [vmem:[%s2958 + $0x30] sm:$0xff]
        %v2966 = vld [vmem:[%s2958 + $0x38] sm:$0xff]
        %v2968 = vsel %vm825, %v2949, 0
        %2970 = vmatprep.subr.mxu0 0.0
        %2971 = vmatpush1.msra.mxu0 %v2959
        %2972 = vmatprep.subr.mxu0 0.0
        %2973 = vmatpush1.msra.mxu0 %v2960
        %2974 = vmatprep.subr.mxu0 0.0
        %2975 = vmatpush1.msra.mxu0 %v2961
        %2976 = vmatprep.subr.mxu0 0.0
        %2977 = vmatpush1.msra.mxu0 %v2962
        %2978 = vmatprep.subr.mxu0 0.0
        %2979 = vmatpush1.msra.mxu0 %v2963
        %2980 = vmatprep.subr.mxu0 0.0
        %2981 = vmatpush1.msra.mxu0 %v2964
        %2982 = vmatprep.subr.mxu0 0.0
        %2983 = vmatpush1.msra.mxu0 %v2965
        %2984 = vmatprep.subr.mxu0 0.0
        %2985 = vmatpush1.msra.mxu0 %v2966
        %2986 = vmatprep.subr.mxu0 0.0
        %2987 = vmatpush1.msra.mxu0 0.0
        %2988 = vmatprep.subr.mxu0 0.0
        %2989 = vmatpush1.msra.mxu0 0.0
        %2990 = vmatprep.subr.mxu0 0.0
        %2991 = vmatpush1.msra.mxu0 0.0
        %2992 = vmatprep.subr.mxu0 0.0
        %2993 = vmatpush1.msra.mxu0 0.0
        %2994 = vmatprep.subr.mxu0 0.0
        %2995 = vmatpush1.msra.mxu0 0.0
        %2996 = vmatprep.subr.mxu0 0.0
        %2997 = vmatpush1.msra.mxu0 0.0
        %2998 = vmatprep.subr.mxu0 0.0
        %2999 = vmatpush1.msra.mxu0 0.0
        %3000 = vmatprep.subr.mxu0 0.0
        %3001 = vmatpush1.msra.mxu0 0.0
        %3002 = vmatprep.subr.mxu0 0.0
        %3003 = vmatpush1.msra.mxu0 0.0
        %3004 = vmatprep.subr.mxu0 0.0
        %3005 = vmatpush1.msra.mxu0 0.0
        %3006 = vmatprep.subr.mxu0 0.0
        %3007 = vmatpush1.msra.mxu0 0.0
        %3008 = vmatprep.subr.mxu0 0.0
        %3009 = vmatpush1.msra.mxu0 0.0
        %3010 = vmatprep.subr.mxu0 0.0
        %3011 = vmatpush1.msra.mxu0 0.0
        %3012 = vmatprep.subr.mxu0 0.0
        %3013 = vmatpush1.msra.mxu0 0.0
        %3014 = vmatprep.subr.mxu0 0.0
        %3015 = vmatpush1.msra.mxu0 0.0
        %3016 = vmatprep.subr.mxu0 0.0
        %3017 = vmatpush1.msra.mxu0 0.0
        %3018 = vmatprep.subr.mxu0 0.0
        %3019 = vmatpush1.msra.mxu0 0.0
        %3020 = vmatprep.subr.mxu0 0.0
        %3021 = vmatpush1.msra.mxu0 0.0
        %3022 = vmatprep.subr.mxu0 0.0
        %3023 = vmatpush1.msra.mxu0 0.0
        %3024 = vmatprep.subr.mxu0 0.0
        %3025 = vmatpush1.msra.mxu0 0.0
        %3026 = vmatprep.subr.mxu0 0.0
        %3027 = vmatpush1.msra.mxu0 0.0
        %3028 = vmatprep.subr.mxu0 0.0
        %3029 = vmatpush1.msra.mxu0 0.0
        %3030 = vmatprep.subr.mxu0 0.0
        %3031 = vmatpush1.msra.mxu0 0.0
        %3032 = vmatprep.subr.mxu0 0.0
        %3033 = vmatpush1.msra.mxu0 0.0
        %3034 = vmatprep.mubr.f32.mxu0 0.0
        %3035 = vmatmul.mubr.f32.gmra.mrb[0].mxu0 %v2968
        %v3036 = vpop.f32.mrb[0].mxu0
        %v3037 = vadd.f32 0.0, %v3036
        %v3038 = vpop.f32.mrb[0].mxu0
        %3039 = vdwg.mxu0
        %s3040 = scalar_lea.vmem %s20, 128
        %v3041 = vld [vmem:[%s3040] sm:$0xff]
        %v3042 = vld [vmem:[%s3040 + $0x8] sm:$0xff]
        %v3043 = vld [vmem:[%s3040 + $0x10] sm:$0xff]
        %v3044 = vld [vmem:[%s3040 + $0x18] sm:$0xff]
        %v3045 = vld [vmem:[%s3040 + $0x20] sm:$0xff]
        %v3046 = vld [vmem:[%s3040 + $0x28] sm:$0xff]
        %v3047 = vld [vmem:[%s3040 + $0x30] sm:$0xff]
        %v3048 = vld [vmem:[%s3040 + $0x38] sm:$0xff]
        %v3049 = vld [vmem:[%s20] sm:$0xff]
        %v3050 = vld [vmem:[%s20 + $0x8] sm:$0xff]
        %v3051 = vld [vmem:[%s20 + $0x10] sm:$0xff]
        %v3052 = vld [vmem:[%s20 + $0x18] sm:$0xff]
        %v3053 = vld [vmem:[%s20 + $0x20] sm:$0xff]
        %v3054 = vld [vmem:[%s20 + $0x28] sm:$0xff]
        %v3055 = vld [vmem:[%s20 + $0x30] sm:$0xff]
        %v3056 = vld [vmem:[%s20 + $0x38] sm:$0xff]
        %v3058 = vsel %vm825, %v2957, 0
        %3060 = vmatprep.subr.mxu0 0.0
        %3061 = vmatpush1.msra.mxu0 %v3049
        %3062 = vmatprep.subr.mxu0 0.0
        %3063 = vmatpush1.msra.mxu0 %v3050
        %3064 = vmatprep.subr.mxu0 0.0
        %3065 = vmatpush1.msra.mxu0 %v3051
        %3066 = vmatprep.subr.mxu0 0.0
        %3067 = vmatpush1.msra.mxu0 %v3052
        %3068 = vmatprep.subr.mxu0 0.0
        %3069 = vmatpush1.msra.mxu0 %v3053
        %3070 = vmatprep.subr.mxu0 0.0
        %3071 = vmatpush1.msra.mxu0 %v3054
        %3072 = vmatprep.subr.mxu0 0.0
        %3073 = vmatpush1.msra.mxu0 %v3055
        %3074 = vmatprep.subr.mxu0 0.0
        %3075 = vmatpush1.msra.mxu0 %v3056
        %3076 = vmatprep.subr.mxu0 0.0
        %3077 = vmatpush1.msra.mxu0 0.0
        %3078 = vmatprep.subr.mxu0 0.0
        %3079 = vmatpush1.msra.mxu0 0.0
        %3080 = vmatprep.subr.mxu0 0.0
        %3081 = vmatpush1.msra.mxu0 0.0
        %3082 = vmatprep.subr.mxu0 0.0
        %3083 = vmatpush1.msra.mxu0 0.0
        %3084 = vmatprep.subr.mxu0 0.0
        %3085 = vmatpush1.msra.mxu0 0.0
        %3086 = vmatprep.subr.mxu0 0.0
        %3087 = vmatpush1.msra.mxu0 0.0
        %3088 = vmatprep.subr.mxu0 0.0
        %3089 = vmatpush1.msra.mxu0 0.0
        %3090 = vmatprep.subr.mxu0 0.0
        %3091 = vmatpush1.msra.mxu0 0.0
        %3092 = vmatprep.subr.mxu0 0.0
        %3093 = vmatpush1.msra.mxu0 0.0
        %3094 = vmatprep.subr.mxu0 0.0
        %3095 = vmatpush1.msra.mxu0 0.0
        %3096 = vmatprep.subr.mxu0 0.0
        %3097 = vmatpush1.msra.mxu0 0.0
        %3098 = vmatprep.subr.mxu0 0.0
        %3099 = vmatpush1.msra.mxu0 0.0
        %3100 = vmatprep.subr.mxu0 0.0
        %3101 = vmatpush1.msra.mxu0 0.0
        %3102 = vmatprep.subr.mxu0 0.0
        %3103 = vmatpush1.msra.mxu0 0.0
        %3104 = vmatprep.subr.mxu0 0.0
        %3105 = vmatpush1.msra.mxu0 0.0
        %3106 = vmatprep.subr.mxu0 0.0
        %3107 = vmatpush1.msra.mxu0 0.0
        %3108 = vmatprep.subr.mxu0 0.0
        %3109 = vmatpush1.msra.mxu0 0.0
        %3110 = vmatprep.subr.mxu0 0.0
        %3111 = vmatpush1.msra.mxu0 0.0
        %3112 = vmatprep.subr.mxu0 0.0
        %3113 = vmatpush1.msra.mxu0 0.0
        %3114 = vmatprep.subr.mxu0 0.0
        %3115 = vmatpush1.msra.mxu0 0.0
        %3116 = vmatprep.subr.mxu0 0.0
        %3117 = vmatpush1.msra.mxu0 0.0
        %3118 = vmatprep.subr.mxu0 0.0
        %3119 = vmatpush1.msra.mxu0 0.0
        %3120 = vmatprep.subr.mxu0 0.0
        %3121 = vmatpush1.msra.mxu0 0.0
        %3122 = vmatprep.subr.mxu0 0.0
        %3123 = vmatpush1.msra.mxu0 0.0
        %3124 = vmatprep.mubr.f32.mxu0 0.0
        %3125 = vmatmul.mubr.f32.gmra.mrb[0].mxu0 %v3058
        %v3126 = vpop.f32.mrb[0].mxu0
        %v3127 = vadd.f32 0.0, %v3126
        %v3128 = vpop.f32.mrb[0].mxu0
        %3129 = vdwg.mxu0
        %3130 = vmatprep.subr.mxu0 0.0
        %3131 = vmatpush1.msra.mxu0 %v3041
        %3132 = vmatprep.subr.mxu0 0.0
        %3133 = vmatpush1.msra.mxu0 %v3042
        %3134 = vmatprep.subr.mxu0 0.0
        %3135 = vmatpush1.msra.mxu0 %v3043
        %3136 = vmatprep.subr.mxu0 0.0
        %3137 = vmatpush1.msra.mxu0 %v3044
        %3138 = vmatprep.subr.mxu0 0.0
        %3139 = vmatpush1.msra.mxu0 %v3045
        %3140 = vmatprep.subr.mxu0 0.0
        %3141 = vmatpush1.msra.mxu0 %v3046
        %3142 = vmatprep.subr.mxu0 0.0
        %3143 = vmatpush1.msra.mxu0 %v3047
        %3144 = vmatprep.subr.mxu0 0.0
        %3145 = vmatpush1.msra.mxu0 %v3048
        %3146 = vmatprep.subr.mxu0 0.0
        %3147 = vmatpush1.msra.mxu0 0.0
        %3148 = vmatprep.subr.mxu0 0.0
        %3149 = vmatpush1.msra.mxu0 0.0
        %3150 = vmatprep.subr.mxu0 0.0
        %3151 = vmatpush1.msra.mxu0 0.0
        %3152 = vmatprep.subr.mxu0 0.0
        %3153 = vmatpush1.msra.mxu0 0.0
        %3154 = vmatprep.subr.mxu0 0.0
        %3155 = vmatpush1.msra.mxu0 0.0
        %3156 = vmatprep.subr.mxu0 0.0
        %3157 = vmatpush1.msra.mxu0 0.0
        %3158 = vmatprep.subr.mxu0 0.0
        %3159 = vmatpush1.msra.mxu0 0.0
        %3160 = vmatprep.subr.mxu0 0.0
        %3161 = vmatpush1.msra.mxu0 0.0
        %3162 = vmatprep.subr.mxu0 0.0
        %3163 = vmatpush1.msra.mxu0 0.0
        %3164 = vmatprep.subr.mxu0 0.0
        %3165 = vmatpush1.msra.mxu0 0.0
        %3166 = vmatprep.subr.mxu0 0.0
        %3167 = vmatpush1.msra.mxu0 0.0
        %3168 = vmatprep.subr.mxu0 0.0
        %3169 = vmatpush1.msra.mxu0 0.0
        %3170 = vmatprep.subr.mxu0 0.0
        %3171 = vmatpush1.msra.mxu0 0.0
        %3172 = vmatprep.subr.mxu0 0.0
        %3173 = vmatpush1.msra.mxu0 0.0
        %3174 = vmatprep.subr.mxu0 0.0
        %3175 = vmatpush1.msra.mxu0 0.0
        %3176 = vmatprep.subr.mxu0 0.0
        %3177 = vmatpush1.msra.mxu0 0.0
        %3178 = vmatprep.subr.mxu0 0.0
        %3179 = vmatpush1.msra.mxu0 0.0
        %3180 = vmatprep.subr.mxu0 0.0
        %3181 = vmatpush1.msra.mxu0 0.0
        %3182 = vmatprep.subr.mxu0 0.0
        %3183 = vmatpush1.msra.mxu0 0.0
        %3184 = vmatprep.subr.mxu0 0.0
        %3185 = vmatpush1.msra.mxu0 0.0
        %3186 = vmatprep.subr.mxu0 0.0
        %3187 = vmatpush1.msra.mxu0 0.0
        %3188 = vmatprep.subr.mxu0 0.0
        %3189 = vmatpush1.msra.mxu0 0.0
        %3190 = vmatprep.subr.mxu0 0.0
        %3191 = vmatpush1.msra.mxu0 0.0
        %3192 = vmatprep.subr.mxu0 0.0
        %3193 = vmatpush1.msra.mxu0 0.0
        %3194 = vmatprep.mubr.f32.mxu0 0.0
        %3195 = vmatmul.mubr.f32.gmra.mrb[0].mxu0 %v2968
        %v3196 = vpop.f32.mrb[0].mxu0
        %v3197 = vadd.f32 %v3127, %v3196
        %v3198 = vpop.f32.mrb[0].mxu0
        %3199 = vdwg.mxu0
        %v3200 = vld [vmem:[%s21] sm:$0x1]
        %v3202 = vlaneseq
        %v3203 = vshrl.u32 %v3202, 7
        %v3204 = vsub.s32 0, %v3203
        %v3205 = vrot.slane %v3200, %v3204
        %v3207 = vmul.f32 %v3037, %v3205
        %v3208 = vld [vmem:[%s22] sm:$0x1]
        %v3210 = vlaneseq
        %v3211 = vshrl.u32 %v3210, 7
        %v3212 = vsub.s32 0, %v3211
        %v3213 = vrot.slane %v3208, %v3212
        %v3215 = vadd.f32 %v3207, %v3213
        %v3216 = vmax.f32 %v3215, 0.0
        %v3217 = vmul.f32 %v3197, %v3205
        %v3218 = vadd.f32 %v3217, %v3213
        %v3219 = vmax.f32 %v3218, 0.0
        %vm3220 = vcmask 261120
        %v3221 = vsel %vm3220, %v3216, 0.0
        %v3222 = vrot.slane %v3221, 4
        %v3223 = vadd.f32 %v3221, %v3222
        %v3224 = vrot.slane %v3223, 2
        %v3225 = vadd.f32 %v3223, %v3224
        %v3226 = vrot.slane %v3225, 1
        %v3227 = vadd.f32 %v3225, %v3226
        %v3228 = vsel %vm3220, %v3219, 0.0
        %v3229 = vrot.slane %v3228, 4
        %v3230 = vadd.f32 %v3228, %v3229
        %v3231 = vrot.slane %v3230, 2
        %v3232 = vadd.f32 %v3230, %v3231
        %v3233 = vrot.slane %v3232, 1
        %v3234 = vadd.f32 %v3232, %v3233
        %v3235 = vadd.f32 %v3227, %v3234
        %v3236 = vmul.f32 %v3235, 0.0625
        %v3237 = vld [vmem:[%s23] sm:$0xff]
        %v3238 = vld [vmem:[%s23 + $0x8] sm:$0xff]
        %v3239 = vld [vmem:[%s23 + $0x10] sm:$0xff]
        %v3240 = vld [vmem:[%s23 + $0x18] sm:$0xff]
        %v3241 = vld [vmem:[%s24] sm:$0x1]
        %v3243 = vsel %vm3220, %v3236, 0
        %3245 = vmatprep.subr.mxu0 0.0
        %3246 = vmatpush1.msra.mxu0 %v3237
        %3247 = vmatprep.subr.mxu0 0.0
        %3248 = vmatpush1.msra.mxu0 %v3238
        %3249 = vmatprep.subr.mxu0 0.0
        %3250 = vmatpush1.msra.mxu0 %v3239
        %3251 = vmatprep.subr.mxu0 0.0
        %3252 = vmatpush1.msra.mxu0 %v3240
        %3253 = vmatprep.subr.mxu0 0.0
        %3254 = vmatpush1.msra.mxu0 0.0
        %3255 = vmatprep.subr.mxu0 0.0
        %3256 = vmatpush1.msra.mxu0 0.0
        %3257 = vmatprep.subr.mxu0 0.0
        %3258 = vmatpush1.msra.mxu0 0.0
        %3259 = vmatprep.subr.mxu0 0.0
        %3260 = vmatpush1.msra.mxu0 0.0
        %3261 = vmatprep.subr.mxu0 0.0
        %3262 = vmatpush1.msra.mxu0 0.0
        %3263 = vmatprep.subr.mxu0 0.0
        %3264 = vmatpush1.msra.mxu0 0.0
        %3265 = vmatprep.subr.mxu0 0.0
        %3266 = vmatpush1.msra.mxu0 0.0
        %3267 = vmatprep.subr.mxu0 0.0
        %3268 = vmatpush1.msra.mxu0 0.0
        %3269 = vmatprep.subr.mxu0 0.0
        %3270 = vmatpush1.msra.mxu0 0.0
        %3271 = vmatprep.subr.mxu0 0.0
        %3272 = vmatpush1.msra.mxu0 0.0
        %3273 = vmatprep.subr.mxu0 0.0
        %3274 = vmatpush1.msra.mxu0 0.0
        %3275 = vmatprep.subr.mxu0 0.0
        %3276 = vmatpush1.msra.mxu0 0.0
        %3277 = vmatprep.subr.mxu0 0.0
        %3278 = vmatpush1.msra.mxu0 0.0
        %3279 = vmatprep.subr.mxu0 0.0
        %3280 = vmatpush1.msra.mxu0 0.0
        %3281 = vmatprep.subr.mxu0 0.0
        %3282 = vmatpush1.msra.mxu0 0.0
        %3283 = vmatprep.subr.mxu0 0.0
        %3284 = vmatpush1.msra.mxu0 0.0
        %3285 = vmatprep.subr.mxu0 0.0
        %3286 = vmatpush1.msra.mxu0 0.0
        %3287 = vmatprep.subr.mxu0 0.0
        %3288 = vmatpush1.msra.mxu0 0.0
        %3289 = vmatprep.subr.mxu0 0.0
        %3290 = vmatpush1.msra.mxu0 0.0
        %3291 = vmatprep.subr.mxu0 0.0
        %3292 = vmatpush1.msra.mxu0 0.0
        %3293 = vmatprep.subr.mxu0 0.0
        %3294 = vmatpush1.msra.mxu0 0.0
        %3295 = vmatprep.subr.mxu0 0.0
        %3296 = vmatpush1.msra.mxu0 0.0
        %3297 = vmatprep.subr.mxu0 0.0
        %3298 = vmatpush1.msra.mxu0 0.0
        %3299 = vmatprep.subr.mxu0 0.0
        %3300 = vmatpush1.msra.mxu0 0.0
        %3301 = vmatprep.subr.mxu0 0.0
        %3302 = vmatpush1.msra.mxu0 0.0
        %3303 = vmatprep.subr.mxu0 0.0
        %3304 = vmatpush1.msra.mxu0 0.0
        %3305 = vmatprep.subr.mxu0 0.0
        %3306 = vmatpush1.msra.mxu0 0.0
        %3307 = vmatprep.subr.mxu0 0.0
        %3308 = vmatpush1.msra.mxu0 0.0
        %3309 = vmatprep.mubr.f32.mxu0 0.0
        %3310 = vmatmul.mubr.f32.gmra.mrb[0].mxu0 %v3243
        %v3311 = vpop.f32.mrb[0].mxu0
        %v3312 = vadd.f32 %v3241, %v3311
        %v3313 = vpop.f32.mrb[0].mxu0
        %3314 = vdwg.mxu0
        %vm3315 = vcmask 163840
        %3316 = vst.msk [vmem:[%s796] sm:$0x1] %vm3315, %v3312
        %s3317 = sand.u32 %s581, 1
        %s3318 = scalar_lea.sflag [#allocation4], %s3317
        %s3319 = sand.u32 %s581, 1
        %s3320 = scalar_lea.vmem [#allocation7], %s3319
        // Predicated region
        $region129: #{tpu_custom_call.1} parent=119 // pred_check
          %p3321 = pneg %p591
        $region130: #{tpu_custom_call.1} parent=119 // pred_check_branch
          %3323 = sbr.rel (%p3321) target = $region132
        $region131: #{tpu_custom_call.1} parent=119 // pred_region
          %s3325 = ssub.s32 16, 16
          %3326 = vsyncadd %s3318, %s3325
          %s3327 = smul.addr %s43, 16
          %s3328 = scalar_lea.hbm %s25, %s3327
          %s3330 = sshll.u32 %s3320, 4
          %s3331 = int_to_ptr.vmem [resolvable:$true] %s3330
          %3333 = dma.vmem_to_hbm [thread:$0]  %s3331, 16, %s3328, %s3318
        $region132: #{tpu_custom_call.1} parent=119 // pred_fallthru
          _
      $region120: #{tpu_custom_call.1} parent=5 // pred_fallthru
        _
      %p3334 = scmp.le.s32.totalorder 2, %s38
      // Predicated region
      $region133: #{tpu_custom_call.1} parent=5 // pred_check
        %p3335 = pneg %p3334
      $region134: #{tpu_custom_call.1} parent=5 // pred_check_branch
        %3337 = sbr.rel (%p3335) target = $region136
      $region135: #{tpu_custom_call.1} parent=5 // pred_region
        %s3338 = ssub.s32 %s38, 2
        // Predicated region
        $region137: #{tpu_custom_call.1} parent=135 // pred_check
          %p3339 = pneg %p597
        $region138: #{tpu_custom_call.1} parent=135 // pred_check_branch
          %3341 = sbr.rel (%p3339) target = $region140
        $region139: #{tpu_custom_call.1} parent=135 // pred_region
          %s3342 = sand.u32 %s582, 1
          %s3343 = scalar_lea.sflag [#allocation4], %s3342
          %s3344 = sand.u32 %s582, 1
          %s3345 = scalar_lea.vmem [#allocation7], %s3344
          %3346 = dma.done %s3343, 16
        $region140: #{tpu_custom_call.1} parent=135 // pred_fallthru
          _
      $region136: #{tpu_custom_call.1} parent=5 // pred_fallthru
        _
    $region6: #{tpu_custom_call.1} parent=1 // loop_footer
      %s42 = sadd.s32 1, %s38
    $region7: #{tpu_custom_call.1} parent=1 // loop_footer_branch
      %37 = sbr.rel target = $region3
    $region8: #{tpu_custom_call.1} parent=1 // loop_exit
      _
    %3347 = vsyncpa [#allocation3], 1
    %s3348 = scalar_lea.sflag [#allocation3], 1
    %3349 = vsyncpa %s3348, 1
    %3350 = vsyncpa [#allocation6], 1
    %3351 = vsyncpa [#allocation4], 1
    %s3352 = scalar_lea.sflag [#allocation4], 1
    %3353 = vsyncpa %s3352, 1

</llo_original>
